<compile_context>
chip_gen: v7x
topology: tpu7x:2x2x1
jax: 0.10.0
libtpu: 0.0.40
codegen_flags: <defaults>
</compile_context>

<pallas_src>
import jax
import jax.numpy as jnp
from jax import lax
from jax.experimental import pallas as pl
from jax.experimental.pallas import tpu as pltpu

F32 = jnp.float32
BF16 = jnp.bfloat16
VMEM = pltpu.MemorySpace.VMEM


def _vmem_specs(n):
    return [pl.BlockSpec(memory_space=VMEM) for _ in range(n)]


# -----------------------------------------------------------------------------
# Bidirectional LSTM kernel (PyTorch gate order i, f, g, o; h0 = c0 = 0).
# Recurrence runs along axis 0 (see layout comment above).
# Input projection is hoisted out of the loop; fwd/bwd recurrences are fused.
# -----------------------------------------------------------------------------
def bilstm_kernel(x_ref, wih_ref, whh_f_ref, whh_b_ref, b_ref,
                  out_ref, gxf_ref, gxb_ref):
    L, N, I = x_ref.shape
    H = whh_f_ref.shape[0]
    H4 = 4 * H

    # (1) Hoist the input projection: one (L*N, I) x (I, 8H) MXU matmul.
    x2 = x_ref[...].reshape(L * N, I).astype(BF16)
    gx = jnp.dot(x2, wih_ref[...], preferred_element_type=F32) + b_ref[...]
    gx = gx.reshape(L, N, 2 * H4)
    gxf_ref[...] = gx[:, :, 0:H4]
    gxb_ref[...] = gx[:, :, H4:2 * H4]

    def gate_math(gates, c):
        i = jax.nn.sigmoid(gates[:, 0 * H:1 * H])
        f = jax.nn.sigmoid(gates[:, 1 * H:2 * H])
        g = jnp.tanh(gates[:, 2 * H:3 * H])
        o = jax.nn.sigmoid(gates[:, 3 * H:4 * H])
        c_new = f * c + i * g
        return o * jnp.tanh(c_new), c_new

    h0 = jnp.zeros((N, H), F32)
    c0 = jnp.zeros((N, H), F32)

    # (2) Fused forward/backward recurrence: two independent h @ Whh per step.
    def step(s, carry):
        h_f, c_f, h_b, c_b = carry
        t_b = L - 1 - s
        g_f = gxf_ref[s] + jnp.dot(h_f.astype(BF16), whh_f_ref[...],
                                   preferred_element_type=F32)
        g_b = gxb_ref[t_b] + jnp.dot(h_b.astype(BF16), whh_b_ref[...],
                                     preferred_element_type=F32)
        h_f, c_f = gate_math(g_f, c_f)
        h_b, c_b = gate_math(g_b, c_b)
        out_ref[s, :, pl.ds(0, H)] = h_f
        out_ref[t_b, :, pl.ds(H, H)] = h_b
        return (h_f, c_f, h_b, c_b)

    lax.fori_loop(0, L, step, (h0, c0, h0, c0))


def bilstm(x, p):
    L, N, _ = x.shape
    H = p['whh_f'].shape[0]
    wih = jnp.concatenate([p['wih_f'], p['wih_b']], axis=1).astype(BF16)  # (I, 8H)
    bias = jnp.concatenate([p['b_f'], p['b_b']], axis=1)                  # (1, 8H)
    return pl.pallas_call(
        bilstm_kernel,
        out_shape=jax.ShapeDtypeStruct((L, N, 2 * H), F32),
        in_specs=_vmem_specs(5),
        out_specs=pl.BlockSpec(memory_space=VMEM),
        scratch_shapes=[pltpu.VMEM((L, N, 4 * H), F32),
                        pltpu.VMEM((L, N, 4 * H), F32)],
    )(x, wih, p['whh_f'].astype(BF16), p['whh_b'].astype(BF16), bias)


# -----------------------------------------------------------------------------
# Fused SoftmaxAttention + enhance ([a,b,a-b,a*b]) + Linear + ReLU projection.
# Gridded over the batch dimension ("parallel" -> megacore-shardable).
# Multiplicative masked softmax matches the reference coetaur0/ESIM code.
# -----------------------------------------------------------------------------
def attn_project_kernel(p_ref, h_ref, pm_col_ref, hm_col_ref, hm_row_ref,
                        w0_ref, w1_ref, w2_ref, w3_ref, b_ref,
                        proj_p_ref, proj_h_ref):
    p = p_ref[0]              # (Tp, 2H) f32
    h = h_ref[0]              # (Th, 2H) f32
    pm_col = pm_col_ref[0]    # (Tp, 1)
    hm_col = hm_col_ref[0]    # (Th, 1)
    hm_row = hm_row_ref[0]    # (1, Th)

    p_bf = p.astype(BF16)
    h_bf = h.astype(BF16)

    # similarity (Tp, Th): contract last dim of both (no explicit transpose).
    sim = jnp.einsum('pd,qd->pq', p_bf, h_bf, preferred_element_type=F32)

    # premise -> hypothesis attention (masked softmax over Th).
    w_ph = jax.nn.softmax(sim * hm_row, axis=-1) * hm_row
    w_ph = w_ph * pl.reciprocal(jnp.sum(w_ph, axis=-1, keepdims=True) + 1e-13,
                                approx=True)
    att_p = jnp.dot(w_ph.astype(BF16), h_bf,
                    preferred_element_type=F32) * pm_col          # (Tp, 2H)

    # hypothesis -> premise attention: softmax along the premise axis of sim
    # (avoids materializing sim^T).
    w_hp = jax.nn.softmax(sim * pm_col, axis=0) * pm_col
    w_hp = w_hp * pl.reciprocal(jnp.sum(w_hp, axis=0, keepdims=True) + 1e-13,
                                approx=True)
    att_h = jnp.einsum('pq,pd->qd', w_hp.astype(BF16), p_bf,
                       preferred_element_type=F32) * hm_col       # (Th, 2H)

    bias = b_ref[...]

    def project(enc_f32, enc_bf, att, out_ref):
        # enhanced = [enc, att, enc-att, enc*att] is never materialized:
        # proj_w is split into four (2H, H) row blocks and the dots accumulated.
        y = (jnp.dot(enc_bf, w0_ref[...], preferred_element_type=F32)
             + jnp.dot(att.astype(BF16), w1_ref[...], preferred_element_type=F32)
             + jnp.dot((enc_f32 - att).astype(BF16), w2_ref[...],
                       preferred_element_type=F32)
             + jnp.dot((enc_f32 * att).astype(BF16), w3_ref[...],
                       preferred_element_type=F32)
             + bias)
        out_ref[0] = jnp.maximum(y, 0.0)

    project(p, p_bf, att_p, proj_p_ref)
    project(h, h_bf, att_h, proj_h_ref)


def attn_project(enc_p, premise_mask, enc_h, hypotheses_mask, proj_w, proj_b):
    B, Tp, D = enc_p.shape                    # D = 2H
    Th = enc_h.shape[1]
    H = proj_w.shape[1]

    w_bf = proj_w.astype(BF16)
    w0, w1, w2, w3 = (w_bf[0:D], w_bf[D:2 * D], w_bf[2 * D:3 * D], w_bf[3 * D:4 * D])
    pm_col = premise_mask[:, :, None]         # (B, Tp, 1)
    hm_col = hypotheses_mask[:, :, None]      # (B, Th, 1)
    hm_row = hypotheses_mask[:, None, :]      # (B, 1, Th)

    def seq3(t, d):
        return pl.BlockSpec((1, t, d), lambda b: (b, 0, 0))

    def wspec(r, c):
        return pl.BlockSpec((r, c), lambda b: (0, 0))

    return pl.pallas_call(
        attn_project_kernel,
        out_shape=(jax.ShapeDtypeStruct((B, Tp, H), F32),
                   jax.ShapeDtypeStruct((B, Th, H), F32)),
        grid=(B,),
        in_specs=[seq3(Tp, D), seq3(Th, D),
                  seq3(Tp, 1), seq3(Th, 1),
                  pl.BlockSpec((1, 1, Th), lambda b: (b, 0, 0)),
                  wspec(D, H), wspec(D, H), wspec(D, H), wspec(D, H),
                  wspec(1, H)],
        out_specs=(seq3(Tp, H), seq3(Th, H)),
        compiler_params=pltpu.CompilerParams(
            dimension_semantics=("parallel",)),
    )(enc_p, enc_h, pm_col, hm_col, hm_row, w0, w1, w2, w3, proj_b)


# -----------------------------------------------------------------------------
# Fused masked avg/max pooling + classifier (Linear+Tanh+Linear) + softmax.
# v = cat([v_a_avg, v_a_max, v_b_avg, v_b_max]) is never materialized:
# cls_w1 is split into four (2H, H) row blocks.
# TODO(synk): nn.Dropout layers are identity at inference time (no RNG applied).
# -----------------------------------------------------------------------------
def pool_classifier_kernel(va_ref, vb_ref, pm_ref, hm_ref,
                           w1a_ref, w1b_ref, w1c_ref, w1d_ref, b1_ref,
                           w2_ref, b2_ref, logits_ref, probs_ref):
    va = va_ref[...]
    vb = vb_ref[...]
    pm = pm_ref[...]
    hm = hm_ref[...]

    va_avg = jnp.sum(va * pm[:, :, None], axis=1) * pl.reciprocal(
        jnp.sum(pm, axis=1, keepdims=True), approx=True)
    vb_avg = jnp.sum(vb * hm[:, :, None], axis=1) * pl.reciprocal(
        jnp.sum(hm, axis=1, keepdims=True), approx=True)
    va_max = jnp.max(va, axis=1)
    vb_max = jnp.max(vb, axis=1)

    hid = (jnp.dot(va_avg.astype(BF16), w1a_ref[...], preferred_element_type=F32)
           + jnp.dot(va_max.astype(BF16), w1b_ref[...], preferred_element_type=F32)
           + jnp.dot(vb_avg.astype(BF16), w1c_ref[...], preferred_element_type=F32)
           + jnp.dot(vb_max.astype(BF16), w1d_ref[...], preferred_element_type=F32)
           + b1_ref[...])
    hid = jnp.tanh(hid)
    logits = jnp.dot(hid.astype(BF16), w2_ref[...],
                     preferred_element_type=F32) + b2_ref[...]
    logits_ref[...] = logits
    probs_ref[...] = jax.nn.softmax(logits, axis=-1)


def pool_classify(v_ai, v_bj, premise_mask, hypotheses_mask, params):
    B, _, D = v_ai.shape                       # D = 2H
    out = params['cls_w2'].shape[1]
    w1 = params['cls_w1'].astype(BF16)
    w1a, w1b, w1c, w1d = (w1[0:D], w1[D:2 * D], w1[2 * D:3 * D], w1[3 * D:4 * D])
    return pl.pallas_call(
        pool_classifier_kernel,
        out_shape=(jax.ShapeDtypeStruct((B, out), F32),
                   jax.ShapeDtypeStruct((B, out), F32)),
        in_specs=_vmem_specs(11),
        out_specs=(pl.BlockSpec(memory_space=VMEM),
                   pl.BlockSpec(memory_space=VMEM)),
    )(v_ai, v_bj, premise_mask, hypotheses_mask,
      w1a, w1b, w1c, w1d, params['cls_b1'],
      params['cls_w2'].astype(BF16), params['cls_b2'])


# -----------------------------------------------------------------------------
# Full forward pass.
# -----------------------------------------------------------------------------
def esim_forward(params, premises, premise_mask, hypotheses, hypotheses_mask):
    # TODO(synk): the frozen pretrained BERT (AutoModel) has no clean Pallas
    # equivalent here; it is replaced with a deterministic embedding-table lookup.
    emb_p = params['emb'][premises]          # (B, T, in_size)
    emb_h = params['emb'][hypotheses]

    enc_p = bilstm(emb_p, params['encoding'])    # (B, T, 2H)
    enc_h = bilstm(emb_h, params['encoding'])

    proj_p, proj_h = attn_project(enc_p, premise_mask, enc_h, hypotheses_mask,
                                  params['proj_w'], params['proj_b'])  # (B, T, H)

    v_ai = bilstm(proj_p, params['composition'])  # (B, T, 2H)
    v_bj = bilstm(proj_h, params['composition'])

    return pool_classify(v_ai, v_bj, premise_mask, hypotheses_mask, params)


# -----------------------------------------------------------------------------
# Deterministic parameter init (shapes follow the module's __init__, scaled down).
# -----------------------------------------------------------------------------
def init_params(key, vocab, in_size, hidden, out_size):
    H = hidden

    def dense(k, shape, scale=0.1):
        return scale * jax.random.normal(k, shape, dtype=F32)

    def lstm_params(k, input_size):
        ks = jax.random.split(k, 6)
        return {
            'wih_f': dense(ks[0], (input_size, 4 * H)),
            'whh_f': dense(ks[1], (H, 4 * H)),
            'b_f':   dense(ks[2], (1, 4 * H)),
            'wih_b': dense(ks[3], (input_size, 4 * H)),
            'whh_b': dense(ks[4], (H, 4 * H)),
            'b_b':   dense(ks[5], (1, 4 * H)),
        }

    keys = jax.random.split(key, 9)
    return {
        'emb': dense(keys[0], (vocab, in_size)),
        'encoding': lstm_params(keys[1], in_size),
        'proj_w': dense(keys[2], (4 * 2 * H, H)),
        'proj_b': dense(keys[3], (1, H)),
        'composition': lstm_params(keys[4], H),
        'cls_w1': dense(keys[5], (2 * 4 * H, H)),
        'cls_b1': dense(keys[6], (1, H)),
        'cls_w2': dense(keys[7], (H, out_size)),
        'cls_b2': dense(keys[8], (1, out_size)),
    }


if __name__ == "__main__":
    B, T = 2, 8
    in_size, hidden, out_size, vocab = 64, 32, 2, 50

    key = jax.random.PRNGKey(0)
    pkey, k1, k2 = jax.random.split(key, 3)
    params = init_params(pkey, vocab, in_size, hidden, out_size)

    premises = jax.random.randint(k1, (B, T), 0, vocab)
    hypotheses = jax.random.randint(k2, (B, T), 0, vocab)
    premise_mask = jnp.ones((B, T), F32).at[1, 6:].set(0.0)
    hypotheses_mask = jnp.ones((B, T), F32).at[0, 5:].set(0.0)

    logits, probs = jax.jit(esim_forward)(
        params, premises, premise_mask, hypotheses, hypotheses_mask)
    jax.block_until_ready((logits, probs))

    assert logits.shape == (B, out_size) and probs.shape == (B, out_size)
    assert bool(jnp.allclose(jnp.sum(probs, axis=-1), 1.0, atol=1e-5))
    print("KERNEL_OK")
</pallas_src>

<mosaic_0001>
module attributes {stable_mosaic.version = 11 : i64} {
  func.func @bilstm_kernel(%arg0: memref<2x8x64xf32, #tpu.memory_space<vmem>>, %arg1: memref<64x256xbf16, #tpu.memory_space<vmem>>, %arg2: memref<32x128xbf16, #tpu.memory_space<vmem>>, %arg3: memref<32x128xbf16, #tpu.memory_space<vmem>>, %arg4: memref<1x256xf32, #tpu.memory_space<vmem>>, %arg5: memref<2x8x64xf32, #tpu.memory_space<vmem>>, %arg6: memref<2x8x128xf32, #tpu.memory_space<vmem>>, %arg7: memref<2x8x128xf32, #tpu.memory_space<vmem>>) attributes {dimension_semantics = [], scalar_prefetch = 0 : i64, scratch_operands = 2 : i64, tpu.core_type = #tpu.core_type<tc>} {
    %c0 = arith.constant 0 : index
    %c0_0 = arith.constant 0 : index
    %c0_1 = arith.constant 0 : index
    %0 = vector.load %arg0[%c0, %c0_0, %c0_1] : memref<2x8x64xf32, #tpu.memory_space<vmem>>, vector<2x8x64xf32>
    %1 = vector.shape_cast %0 : vector<2x8x64xf32> to vector<16x64xf32>
    %2 = arith.truncf %1 : vector<16x64xf32> to vector<16x64xbf16>
    %c0_2 = arith.constant 0 : index
    %c0_3 = arith.constant 0 : index
    %3 = vector.load %arg1[%c0_2, %c0_3] : memref<64x256xbf16, #tpu.memory_space<vmem>>, vector<64x256xbf16>
    %cst = arith.constant dense<0.000000e+00> : vector<16x256xf32>
    %4 = tpu.matmul %2, %3, %cst {dimension_numbers = #tpu.dot_dimension_numbers<[1], [0], [0], [1], [0, 0, 1, 1], [], []>} : vector<16x64xbf16>, vector<64x256xbf16>, vector<16x256xf32> -> vector<16x256xf32>
    %c0_4 = arith.constant 0 : index
    %c0_5 = arith.constant 0 : index
    %5 = vector.load %arg4[%c0_4, %c0_5] : memref<1x256xf32, #tpu.memory_space<vmem>>, vector<1x256xf32>
    %6 = vector.broadcast %5 : vector<1x256xf32> to vector<16x256xf32>
    %7 = arith.addf %4, %6 : vector<16x256xf32>
    %8 = vector.shape_cast %7 : vector<16x256xf32> to vector<2x8x256xf32>
    %9 = vector.extract_strided_slice %8 {offsets = [0, 0, 0], sizes = [2, 8, 128], strides = [1, 1, 1]} : vector<2x8x256xf32> to vector<2x8x128xf32>
    %c0_6 = arith.constant 0 : index
    %c0_7 = arith.constant 0 : index
    %c0_8 = arith.constant 0 : index
    %10 = vector.load %arg6[%c0_6, %c0_7, %c0_8] : memref<2x8x128xf32, #tpu.memory_space<vmem>>, vector<2x8x128xf32>
    tpu.vector_store %arg6[%c0_6, %c0_7, %c0_8], %9 {strides = array<i32>} : memref<2x8x128xf32, #tpu.memory_space<vmem>>, vector<2x8x128xf32>,
    %11 = vector.extract_strided_slice %8 {offsets = [0, 0, 128], sizes = [2, 8, 128], strides = [1, 1, 1]} : vector<2x8x256xf32> to vector<2x8x128xf32>
    %c0_9 = arith.constant 0 : index
    %c0_10 = arith.constant 0 : index
    %c0_11 = arith.constant 0 : index
    %12 = vector.load %arg7[%c0_9, %c0_10, %c0_11] : memref<2x8x128xf32, #tpu.memory_space<vmem>>, vector<2x8x128xf32>
    tpu.vector_store %arg7[%c0_9, %c0_10, %c0_11], %11 {strides = array<i32>} : memref<2x8x128xf32, #tpu.memory_space<vmem>>, vector<2x8x128xf32>,
    %cst_12 = arith.constant 0.000000e+00 : f32
    %13 = vector.broadcast %cst_12 : f32 to vector<8x32xf32>
    %cst_13 = arith.constant 0.000000e+00 : f32
    %14 = vector.broadcast %cst_13 : f32 to vector<8x32xf32>
    %c0_i32 = arith.constant 0 : i32
    %c2_i32 = arith.constant 2 : i32
    %15 = arith.addi %c0_i32, %c2_i32 : i32
    %c1_i32 = arith.constant 1 : i32
    %16:4 = scf.for %arg8 = %c0_i32 to %15 step %c1_i32 iter_args(%arg9 = %13, %arg10 = %14, %arg11 = %13, %arg12 = %14) -> (vector<8x32xf32>, vector<8x32xf32>, vector<8x32xf32>, vector<8x32xf32>)  : i32 {
      %c1_i32_15 = arith.constant 1 : i32
      %17 = arith.subi %c1_i32_15, %arg8 : i32
      %18 = arith.index_cast %arg8 : i32 to index
      %c0_16 = arith.constant 0 : index
      %c0_17 = arith.constant 0 : index
      %19 = vector.load %arg6[%18, %c0_16, %c0_17] : memref<2x8x128xf32, #tpu.memory_space<vmem>>, vector<1x8x128xf32>
      %20 = vector.shape_cast %19 : vector<1x8x128xf32> to vector<8x128xf32>
      %21 = arith.truncf %arg9 : vector<8x32xf32> to vector<8x32xbf16>
      %c0_18 = arith.constant 0 : index
      %c0_19 = arith.constant 0 : index
      %22 = vector.load %arg2[%c0_18, %c0_19] : memref<32x128xbf16, #tpu.memory_space<vmem>>, vector<32x128xbf16>
      %cst_20 = arith.constant dense<0.000000e+00> : vector<8x128xf32>
      %23 = tpu.matmul %21, %22, %cst_20 {dimension_numbers = #tpu.dot_dimension_numbers<[1], [0], [0], [1], [0, 0, 1, 1], [], []>} : vector<8x32xbf16>, vector<32x128xbf16>, vector<8x128xf32> -> vector<8x128xf32>
      %24 = arith.addf %20, %23 : vector<8x128xf32>
      %25 = arith.index_cast %17 : i32 to index
      %c0_21 = arith.constant 0 : index
      %c0_22 = arith.constant 0 : index
      %26 = vector.load %arg7[%25, %c0_21, %c0_22] : memref<2x8x128xf32, #tpu.memory_space<vmem>>, vector<1x8x128xf32>
      %27 = vector.shape_cast %26 : vector<1x8x128xf32> to vector<8x128xf32>
      %28 = arith.truncf %arg11 : vector<8x32xf32> to vector<8x32xbf16>
      %c0_23 = arith.constant 0 : index
      %c0_24 = arith.constant 0 : index
      %29 = vector.load %arg3[%c0_23, %c0_24] : memref<32x128xbf16, #tpu.memory_space<vmem>>, vector<32x128xbf16>
      %cst_25 = arith.constant dense<0.000000e+00> : vector<8x128xf32>
      %30 = tpu.matmul %28, %29, %cst_25 {dimension_numbers = #tpu.dot_dimension_numbers<[1], [0], [0], [1], [0, 0, 1, 1], [], []>} : vector<8x32xbf16>, vector<32x128xbf16>, vector<8x128xf32> -> vector<8x128xf32>
      %31 = arith.addf %27, %30 : vector<8x128xf32>
      %32 = vector.extract_strided_slice %24 {offsets = [0, 0], sizes = [8, 32], strides = [1, 1]} : vector<8x128xf32> to vector<8x32xf32>
      %33 = arith.negf %32 : vector<8x32xf32>
      %34 = math.exp %33 : vector<8x32xf32>
      %cst_26 = arith.constant 1.000000e+00 : f32
      %35 = vector.broadcast %cst_26 : f32 to vector<8x32xf32>
      %36 = arith.addf %35, %34 : vector<8x32xf32>
      %37 = arith.divf %35, %36 : vector<8x32xf32>
      %38 = vector.extract_strided_slice %24 {offsets = [0, 32], sizes = [8, 32], strides = [1, 1]} : vector<8x128xf32> to vector<8x32xf32>
      %39 = arith.negf %38 : vector<8x32xf32>
      %40 = math.exp %39 : vector<8x32xf32>
      %cst_27 = arith.constant 1.000000e+00 : f32
      %41 = vector.broadcast %cst_27 : f32 to vector<8x32xf32>
      %42 = arith.addf %41, %40 : vector<8x32xf32>
      %43 = arith.divf %41, %42 : vector<8x32xf32>
      %44 = vector.extract_strided_slice %24 {offsets = [0, 64], sizes = [8, 32], strides = [1, 1]} : vector<8x128xf32> to vector<8x32xf32>
      %45 = math.tanh %44 : vector<8x32xf32>
      %46 = vector.extract_strided_slice %24 {offsets = [0, 96], sizes = [8, 32], strides = [1, 1]} : vector<8x128xf32> to vector<8x32xf32>
      %47 = arith.negf %46 : vector<8x32xf32>
      %48 = math.exp %47 : vector<8x32xf32>
      %cst_28 = arith.constant 1.000000e+00 : f32
      %49 = vector.broadcast %cst_28 : f32 to vector<8x32xf32>
      %50 = arith.addf %49, %48 : vector<8x32xf32>
      %51 = arith.divf %49, %50 : vector<8x32xf32>
      %52 = arith.mulf %43, %arg10 : vector<8x32xf32>
      %53 = arith.mulf %37, %45 : vector<8x32xf32>
      %54 = arith.addf %52, %53 : vector<8x32xf32>
      %55 = math.tanh %54 : vector<8x32xf32>
      %56 = arith.mulf %51, %55 : vector<8x32xf32>
      %57 = vector.extract_strided_slice %31 {offsets = [0, 0], sizes = [8, 32], strides = [1, 1]} : vector<8x128xf32> to vector<8x32xf32>
      %58 = arith.negf %57 : vector<8x32xf32>
      %59 = math.exp %58 : vector<8x32xf32>
      %cst_29 = arith.constant 1.000000e+00 : f32
      %60 = vector.broadcast %cst_29 : f32 to vector<8x32xf32>
      %61 = arith.addf %60, %59 : vector<8x32xf32>
      %62 = arith.divf %60, %61 : vector<8x32xf32>
      %63 = vector.extract_strided_slice %31 {offsets = [0, 32], sizes = [8, 32], strides = [1, 1]} : vector<8x128xf32> to vector<8x32xf32>
      %64 = arith.negf %63 : vector<8x32xf32>
      %65 = math.exp %64 : vector<8x32xf32>
      %cst_30 = arith.constant 1.000000e+00 : f32
      %66 = vector.broadcast %cst_30 : f32 to vector<8x32xf32>
      %67 = arith.addf %66, %65 : vector<8x32xf32>
      %68 = arith.divf %66, %67 : vector<8x32xf32>
      %69 = vector.extract_strided_slice %31 {offsets = [0, 64], sizes = [8, 32], strides = [1, 1]} : vector<8x128xf32> to vector<8x32xf32>
      %70 = math.tanh %69 : vector<8x32xf32>
      %71 = vector.extract_strided_slice %31 {offsets = [0, 96], sizes = [8, 32], strides = [1, 1]} : vector<8x128xf32> to vector<8x32xf32>
      %72 = arith.negf %71 : vector<8x32xf32>
      %73 = math.exp %72 : vector<8x32xf32>
      %cst_31 = arith.constant 1.000000e+00 : f32
      %74 = vector.broadcast %cst_31 : f32 to vector<8x32xf32>
      %75 = arith.addf %74, %73 : vector<8x32xf32>
      %76 = arith.divf %74, %75 : vector<8x32xf32>
      %77 = arith.mulf %68, %arg12 : vector<8x32xf32>
      %78 = arith.mulf %62, %70 : vector<8x32xf32>
      %79 = arith.addf %77, %78 : vector<8x32xf32>
      %80 = math.tanh %79 : vector<8x32xf32>
      %81 = arith.mulf %76, %80 : vector<8x32xf32>
      %82 = arith.index_cast %arg8 : i32 to index
      %c0_32 = arith.constant 0 : index
      %c0_33 = arith.constant 0 : index
      %83 = vector.load %arg5[%82, %c0_32, %c0_33] : memref<2x8x64xf32, #tpu.memory_space<vmem>>, vector<1x8x32xf32>
      %84 = vector.shape_cast %83 : vector<1x8x32xf32> to vector<8x32xf32>
      %85 = vector.shape_cast %56 : vector<8x32xf32> to vector<1x8x32xf32>
      tpu.vector_store %arg5[%82, %c0_32, %c0_33], %85 {strides = array<i32>} : memref<2x8x64xf32, #tpu.memory_space<vmem>>, vector<1x8x32xf32>,
      %86 = arith.index_cast %17 : i32 to index
      %c0_34 = arith.constant 0 : index
      %c32 = arith.constant 32 : index
      %87 = vector.load %arg5[%86, %c0_34, %c32] : memref<2x8x64xf32, #tpu.memory_space<vmem>>, vector<1x8x32xf32>
      %88 = vector.shape_cast %87 : vector<1x8x32xf32> to vector<8x32xf32>
      %89 = vector.shape_cast %81 : vector<8x32xf32> to vector<1x8x32xf32>
      tpu.vector_store %arg5[%86, %c0_34, %c32], %89 {strides = array<i32>} : memref<2x8x64xf32, #tpu.memory_space<vmem>>, vector<1x8x32xf32>,
      scf.yield %56, %54, %81, %79 : vector<8x32xf32>, vector<8x32xf32>, vector<8x32xf32>, vector<8x32xf32>
    }
    %c2_i32_14 = arith.constant 2 : i32
    return
  }
}

module attributes {stable_mosaic.version = 11 : i64} {
  func.func @attn_project_kernel(%arg0: i32, %arg1: memref<1x8x64xf32, #tpu.memory_space<vmem>>, %arg2: memref<1x8x64xf32, #tpu.memory_space<vmem>>, %arg3: memref<1x8x1xf32, #tpu.memory_space<vmem>>, %arg4: memref<1x8x1xf32, #tpu.memory_space<vmem>>, %arg5: memref<1x1x8xf32, #tpu.memory_space<vmem>>, %arg6: memref<64x32xbf16, #tpu.memory_space<vmem>>, %arg7: memref<64x32xbf16, #tpu.memory_space<vmem>>, %arg8: memref<64x32xbf16, #tpu.memory_space<vmem>>, %arg9: memref<64x32xbf16, #tpu.memory_space<vmem>>, %arg10: memref<1x32xf32, #tpu.memory_space<vmem>>, %arg11: memref<1x8x32xf32, #tpu.memory_space<vmem>>, %arg12: memref<1x8x32xf32, #tpu.memory_space<vmem>>) attributes {dimension_semantics = [#tpu.dimension_semantics<parallel>], iteration_bounds = array<i64: 2>, scalar_prefetch = 0 : i64, scratch_operands = 0 : i64, tpu.core_type = #tpu.core_type<tc>, window_params = [{transform_indices = @transform_0, window_bounds = array<i64: 1, 8, 64>}, {transform_indices = @transform_1, window_bounds = array<i64: 1, 8, 64>}, {transform_indices = @transform_2, window_bounds = array<i64: 1, 8, 1>}, {transform_indices = @transform_3, window_bounds = array<i64: 1, 8, 1>}, {transform_indices = @transform_4, window_bounds = array<i64: 1, 1, 8>}, {pipeline_mode = #tpu.pipeline_mode<synchronous>, transform_indices = @transform_5, window_bounds = array<i64: 64, 32>}, {pipeline_mode = #tpu.pipeline_mode<synchronous>, transform_indices = @transform_6, window_bounds = array<i64: 64, 32>}, {pipeline_mode = #tpu.pipeline_mode<synchronous>, transform_indices = @transform_7, window_bounds = array<i64: 64, 32>}, {pipeline_mode = #tpu.pipeline_mode<synchronous>, transform_indices = @transform_8, window_bounds = array<i64: 64, 32>}, {pipeline_mode = #tpu.pipeline_mode<synchronous>, transform_indices = @transform_9, window_bounds = array<i64: 1, 32>}, {transform_indices = @transform_10, window_bounds = array<i64: 1, 8, 32>}, {transform_indices = @transform_11, window_bounds = array<i64: 1, 8, 32>}]} {
    %c0 = arith.constant 0 : index
    %c0_0 = arith.constant 0 : index
    %c0_1 = arith.constant 0 : index
    %0 = vector.load %arg1[%c0, %c0_0, %c0_1] : memref<1x8x64xf32, #tpu.memory_space<vmem>>, vector<1x8x64xf32>
    %1 = vector.shape_cast %0 : vector<1x8x64xf32> to vector<8x64xf32>
    %c0_2 = arith.constant 0 : index
    %c0_3 = arith.constant 0 : index
    %c0_4 = arith.constant 0 : index
    %2 = vector.load %arg2[%c0_2, %c0_3, %c0_4] : memref<1x8x64xf32, #tpu.memory_space<vmem>>, vector<1x8x64xf32>
    %3 = vector.shape_cast %2 : vector<1x8x64xf32> to vector<8x64xf32>
    %c0_5 = arith.constant 0 : index
    %c0_6 = arith.constant 0 : index
    %c0_7 = arith.constant 0 : index
    %4 = vector.load %arg3[%c0_5, %c0_6, %c0_7] : memref<1x8x1xf32, #tpu.memory_space<vmem>>, vector<1x8x1xf32>
    %5 = vector.shape_cast %4 : vector<1x8x1xf32> to vector<8x1xf32>
    %c0_8 = arith.constant 0 : index
    %c0_9 = arith.constant 0 : index
    %c0_10 = arith.constant 0 : index
    %6 = vector.load %arg4[%c0_8, %c0_9, %c0_10] : memref<1x8x1xf32, #tpu.memory_space<vmem>>, vector<1x8x1xf32>
    %7 = vector.shape_cast %6 : vector<1x8x1xf32> to vector<8x1xf32>
    %c0_11 = arith.constant 0 : index
    %c0_12 = arith.constant 0 : index
    %c0_13 = arith.constant 0 : index
    %8 = vector.load %arg5[%c0_11, %c0_12, %c0_13] : memref<1x1x8xf32, #tpu.memory_space<vmem>>, vector<1x1x8xf32>
    %9 = vector.shape_cast %8 : vector<1x1x8xf32> to vector<1x8xf32>
    %10 = arith.truncf %1 : vector<8x64xf32> to vector<8x64xbf16>
    %11 = arith.truncf %3 : vector<8x64xf32> to vector<8x64xbf16>
    "tpu.trace_start"() <{level = 10 : i32, message = "pd,qd->pq"}> : () -> ()
    %cst = arith.constant dense<0.000000e+00> : vector<8x8xf32>
    %12 = tpu.matmul %10, %11, %cst {dimension_numbers = #tpu.dot_dimension_numbers<[1], [1], [0], [0], [0, 0, 1, 0], [], []>} : vector<8x64xbf16>, vector<8x64xbf16>, vector<8x8xf32> -> vector<8x8xf32>
    "tpu.trace_stop"() : () -> ()
    %13 = vector.broadcast %9 : vector<1x8xf32> to vector<8x8xf32>
    %14 = arith.mulf %12, %13 : vector<8x8xf32>
    %cst_14 = arith.constant dense<0xFF800000> : vector<8xf32>
    %15 = vector.multi_reduction <maximumf>, %14, %cst_14 [1] : vector<8x8xf32> to vector<8xf32>
    %cst_15 = arith.constant 0xFF800000 : f32
    %16 = vector.broadcast %cst_15 : f32 to vector<8xf32>
    %17 = arith.maximumf %16, %15 : vector<8xf32>
    %18 = vector.shape_cast %17 : vector<8xf32> to vector<8x1xf32>
    %19 = vector.broadcast %18 : vector<8x1xf32> to vector<8x8xf32>
    %20 = arith.subf %14, %19 : vector<8x8xf32>
    %21 = math.exp %20 : vector<8x8xf32>
    %cst_16 = arith.constant dense<0.000000e+00> : vector<8xf32>
    %22 = vector.multi_reduction <add>, %21, %cst_16 [1] : vector<8x8xf32> to vector<8xf32>
    %23 = vector.shape_cast %22 : vector<8xf32> to vector<8x1xf32>
    %24 = vector.broadcast %23 : vector<8x1xf32> to vector<8x8xf32>
    %25 = arith.divf %21, %24 : vector<8x8xf32>
    %26 = vector.broadcast %9 : vector<1x8xf32> to vector<8x8xf32>
    %27 = arith.mulf %25, %26 : vector<8x8xf32>
    %cst_17 = arith.constant dense<0.000000e+00> : vector<8xf32>
    %28 = vector.multi_reduction <add>, %27, %cst_17 [1] : vector<8x8xf32> to vector<8xf32>
    %29 = vector.shape_cast %28 : vector<8xf32> to vector<8x1xf32>
    %cst_18 = arith.constant 9.99999982E-14 : f32
    %30 = vector.broadcast %cst_18 : f32 to vector<8x1xf32>
    %31 = arith.addf %29, %30 : vector<8x1xf32>
    %32 = tpu.reciprocal %31 {approx = true} : vector<8x1xf32> -> vector<8x1xf32>
    %33 = vector.broadcast %32 : vector<8x1xf32> to vector<8x8xf32>
    %34 = arith.mulf %27, %33 : vector<8x8xf32>
    %35 = arith.truncf %34 : vector<8x8xf32> to vector<8x8xbf16>
    %cst_19 = arith.constant dense<0.000000e+00> : vector<8x64xf32>
    %36 = tpu.matmul %35, %11, %cst_19 {dimension_numbers = #tpu.dot_dimension_numbers<[1], [0], [0], [1], [0, 0, 1, 1], [], []>} : vector<8x8xbf16>, vector<8x64xbf16>, vector<8x64xf32> -> vector<8x64xf32>
    %37 = vector.broadcast %5 : vector<8x1xf32> to vector<8x64xf32>
    %38 = arith.mulf %36, %37 : vector<8x64xf32>
    %39 = vector.broadcast %5 : vector<8x1xf32> to vector<8x8xf32>
    %40 = arith.mulf %12, %39 : vector<8x8xf32>
    %cst_20 = arith.constant dense<0xFF800000> : vector<8xf32>
    %41 = vector.multi_reduction <maximumf>, %40, %cst_20 [0] : vector<8x8xf32> to vector<8xf32>
    %cst_21 = arith.constant 0xFF800000 : f32
    %42 = vector.broadcast %cst_21 : f32 to vector<8xf32>
    %43 = arith.maximumf %42, %41 : vector<8xf32>
    %44 = vector.shape_cast %43 : vector<8xf32> to vector<1x8xf32>
    %45 = vector.broadcast %44 : vector<1x8xf32> to vector<8x8xf32>
    %46 = arith.subf %40, %45 : vector<8x8xf32>
    %47 = math.exp %46 : vector<8x8xf32>
    %cst_22 = arith.constant dense<0.000000e+00> : vector<8xf32>
    %48 = vector.multi_reduction <add>, %47, %cst_22 [0] : vector<8x8xf32> to vector<8xf32>
    %49 = vector.shape_cast %48 : vector<8xf32> to vector<1x8xf32>
    %50 = vector.broadcast %49 : vector<1x8xf32> to vector<8x8xf32>
    %51 = arith.divf %47, %50 : vector<8x8xf32>
    %52 = vector.broadcast %5 : vector<8x1xf32> to vector<8x8xf32>
    %53 = arith.mulf %51, %52 : vector<8x8xf32>
    %cst_23 = arith.constant dense<0.000000e+00> : vector<8xf32>
    %54 = vector.multi_reduction <add>, %53, %cst_23 [0] : vector<8x8xf32> to vector<8xf32>
    %55 = vector.shape_cast %54 : vector<8xf32> to vector<1x8xf32>
    %cst_24 = arith.constant 9.99999982E-14 : f32
    %56 = vector.broadcast %cst_24 : f32 to vector<1x8xf32>
    %57 = arith.addf %55, %56 : vector<1x8xf32>
    %58 = tpu.reciprocal %57 {approx = true} : vector<1x8xf32> -> vector<1x8xf32>
    %59 = vector.broadcast %58 : vector<1x8xf32> to vector<8x8xf32>
    %60 = arith.mulf %53, %59 : vector<8x8xf32>
    %61 = arith.truncf %60 : vector<8x8xf32> to vector<8x8xbf16>
    "tpu.trace_start"() <{level = 10 : i32, message = "pq,pd->qd"}> : () -> ()
    %cst_25 = arith.constant dense<0.000000e+00> : vector<8x64xf32>
    %62 = tpu.matmul %61, %10, %cst_25 {dimension_numbers = #tpu.dot_dimension_numbers<[0], [0], [1], [1], [0, 1, 1, 1], [], []>} : vector<8x8xbf16>, vector<8x64xbf16>, vector<8x64xf32> -> vector<8x64xf32>
    "tpu.trace_stop"() : () -> ()
    %63 = vector.broadcast %7 : vector<8x1xf32> to vector<8x64xf32>
    %64 = arith.mulf %62, %63 : vector<8x64xf32>
    %c0_26 = arith.constant 0 : index
    %c0_27 = arith.constant 0 : index
    %65 = vector.load %arg10[%c0_26, %c0_27] : memref<1x32xf32, #tpu.memory_space<vmem>>, vector<1x32xf32>
    %c0_28 = arith.constant 0 : index
    %c0_29 = arith.constant 0 : index
    %66 = vector.load %arg6[%c0_28, %c0_29] : memref<64x32xbf16, #tpu.memory_space<vmem>>, vector<64x32xbf16>
    %cst_30 = arith.constant dense<0.000000e+00> : vector<8x32xf32>
    %67 = tpu.matmul %10, %66, %cst_30 {dimension_numbers = #tpu.dot_dimension_numbers<[1], [0], [0], [1], [0, 0, 1, 1], [], []>} : vector<8x64xbf16>, vector<64x32xbf16>, vector<8x32xf32> -> vector<8x32xf32>
    %68 = arith.truncf %38 : vector<8x64xf32> to vector<8x64xbf16>
    %c0_31 = arith.constant 0 : index
    %c0_32 = arith.constant 0 : index
    %69 = vector.load %arg7[%c0_31, %c0_32] : memref<64x32xbf16, #tpu.memory_space<vmem>>, vector<64x32xbf16>
    %cst_33 = arith.constant dense<0.000000e+00> : vector<8x32xf32>
    %70 = tpu.matmul %68, %69, %cst_33 {dimension_numbers = #tpu.dot_dimension_numbers<[1], [0], [0], [1], [0, 0, 1, 1], [], []>} : vector<8x64xbf16>, vector<64x32xbf16>, vector<8x32xf32> -> vector<8x32xf32>
    %71 = arith.addf %67, %70 : vector<8x32xf32>
    %72 = arith.subf %1, %38 : vector<8x64xf32>
    %73 = arith.truncf %72 : vector<8x64xf32> to vector<8x64xbf16>
    %c0_34 = arith.constant 0 : index
    %c0_35 = arith.constant 0 : index
    %74 = vector.load %arg8[%c0_34, %c0_35] : memref<64x32xbf16, #tpu.memory_space<vmem>>, vector<64x32xbf16>
    %cst_36 = arith.constant dense<0.000000e+00> : vector<8x32xf32>
    %75 = tpu.matmul %73, %74, %cst_36 {dimension_numbers = #tpu.dot_dimension_numbers<[1], [0], [0], [1], [0, 0, 1, 1], [], []>} : vector<8x64xbf16>, vector<64x32xbf16>, vector<8x32xf32> -> vector<8x32xf32>
    %76 = arith.addf %71, %75 : vector<8x32xf32>
    %77 = arith.mulf %1, %38 : vector<8x64xf32>
    %78 = arith.truncf %77 : vector<8x64xf32> to vector<8x64xbf16>
    %c0_37 = arith.constant 0 : index
    %c0_38 = arith.constant 0 : index
    %79 = vector.load %arg9[%c0_37, %c0_38] : memref<64x32xbf16, #tpu.memory_space<vmem>>, vector<64x32xbf16>
    %cst_39 = arith.constant dense<0.000000e+00> : vector<8x32xf32>
    %80 = tpu.matmul %78, %79, %cst_39 {dimension_numbers = #tpu.dot_dimension_numbers<[1], [0], [0], [1], [0, 0, 1, 1], [], []>} : vector<8x64xbf16>, vector<64x32xbf16>, vector<8x32xf32> -> vector<8x32xf32>
    %81 = arith.addf %76, %80 : vector<8x32xf32>
    %82 = vector.broadcast %65 : vector<1x32xf32> to vector<8x32xf32>
    %83 = arith.addf %81, %82 : vector<8x32xf32>
    %cst_40 = arith.constant 0.000000e+00 : f32
    %84 = vector.broadcast %cst_40 : f32 to vector<8x32xf32>
    %85 = arith.maximumf %83, %84 : vector<8x32xf32>
    %c0_41 = arith.constant 0 : index
    %c0_42 = arith.constant 0 : index
    %c0_43 = arith.constant 0 : index
    %86 = vector.load %arg11[%c0_41, %c0_42, %c0_43] : memref<1x8x32xf32, #tpu.memory_space<vmem>>, vector<1x8x32xf32>
    %87 = vector.shape_cast %86 : vector<1x8x32xf32> to vector<8x32xf32>
    %88 = vector.shape_cast %85 : vector<8x32xf32> to vector<1x8x32xf32>
    tpu.vector_store %arg11[%c0_41, %c0_42, %c0_43], %88 {strides = array<i32>} : memref<1x8x32xf32, #tpu.memory_space<vmem>>, vector<1x8x32xf32>,
    %c0_44 = arith.constant 0 : index
    %c0_45 = arith.constant 0 : index
    %89 = vector.load %arg6[%c0_44, %c0_45] : memref<64x32xbf16, #tpu.memory_space<vmem>>, vector<64x32xbf16>
    %cst_46 = arith.constant dense<0.000000e+00> : vector<8x32xf32>
    %90 = tpu.matmul %11, %89, %cst_46 {dimension_numbers = #tpu.dot_dimension_numbers<[1], [0], [0], [1], [0, 0, 1, 1], [], []>} : vector<8x64xbf16>, vector<64x32xbf16>, vector<8x32xf32> -> vector<8x32xf32>
    %91 = arith.truncf %64 : vector<8x64xf32> to vector<8x64xbf16>
    %c0_47 = arith.constant 0 : index
    %c0_48 = arith.constant 0 : index
    %92 = vector.load %arg7[%c0_47, %c0_48] : memref<64x32xbf16, #tpu.memory_space<vmem>>, vector<64x32xbf16>
    %cst_49 = arith.constant dense<0.000000e+00> : vector<8x32xf32>
    %93 = tpu.matmul %91, %92, %cst_49 {dimension_numbers = #tpu.dot_dimension_numbers<[1], [0], [0], [1], [0, 0, 1, 1], [], []>} : vector<8x64xbf16>, vector<64x32xbf16>, vector<8x32xf32> -> vector<8x32xf32>
    %94 = arith.addf %90, %93 : vector<8x32xf32>
    %95 = arith.subf %3, %64 : vector<8x64xf32>
    %96 = arith.truncf %95 : vector<8x64xf32> to vector<8x64xbf16>
    %c0_50 = arith.constant 0 : index
    %c0_51 = arith.constant 0 : index
    %97 = vector.load %arg8[%c0_50, %c0_51] : memref<64x32xbf16, #tpu.memory_space<vmem>>, vector<64x32xbf16>
    %cst_52 = arith.constant dense<0.000000e+00> : vector<8x32xf32>
    %98 = tpu.matmul %96, %97, %cst_52 {dimension_numbers = #tpu.dot_dimension_numbers<[1], [0], [0], [1], [0, 0, 1, 1], [], []>} : vector<8x64xbf16>, vector<64x32xbf16>, vector<8x32xf32> -> vector<8x32xf32>
    %99 = arith.addf %94, %98 : vector<8x32xf32>
    %100 = arith.mulf %3, %64 : vector<8x64xf32>
    %101 = arith.truncf %100 : vector<8x64xf32> to vector<8x64xbf16>
    %c0_53 = arith.constant 0 : index
    %c0_54 = arith.constant 0 : index
    %102 = vector.load %arg9[%c0_53, %c0_54] : memref<64x32xbf16, #tpu.memory_space<vmem>>, vector<64x32xbf16>
    %cst_55 = arith.constant dense<0.000000e+00> : vector<8x32xf32>
    %103 = tpu.matmul %101, %102, %cst_55 {dimension_numbers = #tpu.dot_dimension_numbers<[1], [0], [0], [1], [0, 0, 1, 1], [], []>} : vector<8x64xbf16>, vector<64x32xbf16>, vector<8x32xf32> -> vector<8x32xf32>
    %104 = arith.addf %99, %103 : vector<8x32xf32>
    %105 = vector.broadcast %65 : vector<1x32xf32> to vector<8x32xf32>
    %106 = arith.addf %104, %105 : vector<8x32xf32>
    %cst_56 = arith.constant 0.000000e+00 : f32
    %107 = vector.broadcast %cst_56 : f32 to vector<8x32xf32>
    %108 = arith.maximumf %106, %107 : vector<8x32xf32>
    %c0_57 = arith.constant 0 : index
    %c0_58 = arith.constant 0 : index
    %c0_59 = arith.constant 0 : index
    %109 = vector.load %arg12[%c0_57, %c0_58, %c0_59] : memref<1x8x32xf32, #tpu.memory_space<vmem>>, vector<1x8x32xf32>
    %110 = vector.shape_cast %109 : vector<1x8x32xf32> to vector<8x32xf32>
    %111 = vector.shape_cast %108 : vector<8x32xf32> to vector<1x8x32xf32>
    tpu.vector_store %arg12[%c0_57, %c0_58, %c0_59], %111 {strides = array<i32>} : memref<1x8x32xf32, #tpu.memory_space<vmem>>, vector<1x8x32xf32>,
    return
  }
  func.func @transform_0(%arg0: i32) -> (i32, i32, i32) {
    %c0_i32 = arith.constant 0 : i32
    %c0_i32_0 = arith.constant 0 : i32
    %c0_i32_1 = arith.constant 0 : i32
    return %arg0, %c0_i32, %c0_i32_0 : i32, i32, i32
  }
  func.func @transform_1(%arg0: i32) -> (i32, i32, i32) {
    %c0_i32 = arith.constant 0 : i32
    %c0_i32_0 = arith.constant 0 : i32
    %c0_i32_1 = arith.constant 0 : i32
    return %arg0, %c0_i32, %c0_i32_0 : i32, i32, i32
  }
  func.func @transform_2(%arg0: i32) -> (i32, i32, i32) {
    %c0_i32 = arith.constant 0 : i32
    %c0_i32_0 = arith.constant 0 : i32
    %c0_i32_1 = arith.constant 0 : i32
    return %arg0, %c0_i32, %c0_i32_0 : i32, i32, i32
  }
  func.func @transform_3(%arg0: i32) -> (i32, i32, i32) {
    %c0_i32 = arith.constant 0 : i32
    %c0_i32_0 = arith.constant 0 : i32
    %c0_i32_1 = arith.constant 0 : i32
    return %arg0, %c0_i32, %c0_i32_0 : i32, i32, i32
  }
  func.func @transform_4(%arg0: i32) -> (i32, i32, i32) {
    %c0_i32 = arith.constant 0 : i32
    %c0_i32_0 = arith.constant 0 : i32
    %c0_i32_1 = arith.constant 0 : i32
    return %arg0, %c0_i32, %c0_i32_0 : i32, i32, i32
  }
  func.func @transform_5(%arg0: i32) -> (i32, i32) {
    %c0_i32 = arith.constant 0 : i32
    %c0_i32_0 = arith.constant 0 : i32
    %c0_i32_1 = arith.constant 0 : i32
    return %c0_i32, %c0_i32_0 : i32, i32
  }
  func.func @transform_6(%arg0: i32) -> (i32, i32) {
    %c0_i32 = arith.constant 0 : i32
    %c0_i32_0 = arith.constant 0 : i32
    %c0_i32_1 = arith.constant 0 : i32
    return %c0_i32, %c0_i32_0 : i32, i32
  }
  func.func @transform_7(%arg0: i32) -> (i32, i32) {
    %c0_i32 = arith.constant 0 : i32
    %c0_i32_0 = arith.constant 0 : i32
    %c0_i32_1 = arith.constant 0 : i32
    return %c0_i32, %c0_i32_0 : i32, i32
  }
  func.func @transform_8(%arg0: i32) -> (i32, i32) {
    %c0_i32 = arith.constant 0 : i32
    %c0_i32_0 = arith.constant 0 : i32
    %c0_i32_1 = arith.constant 0 : i32
    return %c0_i32, %c0_i32_0 : i32, i32
  }
  func.func @transform_9(%arg0: i32) -> (i32, i32) {
    %c0_i32 = arith.constant 0 : i32
    %c0_i32_0 = arith.constant 0 : i32
    %c0_i32_1 = arith.constant 0 : i32
    return %c0_i32, %c0_i32_0 : i32, i32
  }
  func.func @transform_10(%arg0: i32) -> (i32, i32, i32) {
    %c0_i32 = arith.constant 0 : i32
    %c0_i32_0 = arith.constant 0 : i32
    %c0_i32_1 = arith.constant 0 : i32
    return %arg0, %c0_i32, %c0_i32_0 : i32, i32, i32
  }
  func.func @transform_11(%arg0: i32) -> (i32, i32, i32) {
    %c0_i32 = arith.constant 0 : i32
    %c0_i32_0 = arith.constant 0 : i32
    %c0_i32_1 = arith.constant 0 : i32
    return %arg0, %c0_i32, %c0_i32_0 : i32, i32, i32
  }
}

module attributes {stable_mosaic.version = 11 : i64} {
  func.func @bilstm_kernel(%arg0: memref<2x8x32xf32, #tpu.memory_space<vmem>>, %arg1: memref<32x256xbf16, #tpu.memory_space<vmem>>, %arg2: memref<32x128xbf16, #tpu.memory_space<vmem>>, %arg3: memref<32x128xbf16, #tpu.memory_space<vmem>>, %arg4: memref<1x256xf32, #tpu.memory_space<vmem>>, %arg5: memref<2x8x64xf32, #tpu.memory_space<vmem>>, %arg6: memref<2x8x128xf32, #tpu.memory_space<vmem>>, %arg7: memref<2x8x128xf32, #tpu.memory_space<vmem>>) attributes {dimension_semantics = [], scalar_prefetch = 0 : i64, scratch_operands = 2 : i64, tpu.core_type = #tpu.core_type<tc>} {
    %c0 = arith.constant 0 : index
    %c0_0 = arith.constant 0 : index
    %c0_1 = arith.constant 0 : index
    %0 = vector.load %arg0[%c0, %c0_0, %c0_1] : memref<2x8x32xf32, #tpu.memory_space<vmem>>, vector<2x8x32xf32>
    %1 = vector.shape_cast %0 : vector<2x8x32xf32> to vector<16x32xf32>
    %2 = arith.truncf %1 : vector<16x32xf32> to vector<16x32xbf16>
    %c0_2 = arith.constant 0 : index
    %c0_3 = arith.constant 0 : index
    %3 = vector.load %arg1[%c0_2, %c0_3] : memref<32x256xbf16, #tpu.memory_space<vmem>>, vector<32x256xbf16>
    %cst = arith.constant dense<0.000000e+00> : vector<16x256xf32>
    %4 = tpu.matmul %2, %3, %cst {dimension_numbers = #tpu.dot_dimension_numbers<[1], [0], [0], [1], [0, 0, 1, 1], [], []>} : vector<16x32xbf16>, vector<32x256xbf16>, vector<16x256xf32> -> vector<16x256xf32>
    %c0_4 = arith.constant 0 : index
    %c0_5 = arith.constant 0 : index
    %5 = vector.load %arg4[%c0_4, %c0_5] : memref<1x256xf32, #tpu.memory_space<vmem>>, vector<1x256xf32>
    %6 = vector.broadcast %5 : vector<1x256xf32> to vector<16x256xf32>
    %7 = arith.addf %4, %6 : vector<16x256xf32>
    %8 = vector.shape_cast %7 : vector<16x256xf32> to vector<2x8x256xf32>
    %9 = vector.extract_strided_slice %8 {offsets = [0, 0, 0], sizes = [2, 8, 128], strides = [1, 1, 1]} : vector<2x8x256xf32> to vector<2x8x128xf32>
    %c0_6 = arith.constant 0 : index
    %c0_7 = arith.constant 0 : index
    %c0_8 = arith.constant 0 : index
    %10 = vector.load %arg6[%c0_6, %c0_7, %c0_8] : memref<2x8x128xf32, #tpu.memory_space<vmem>>, vector<2x8x128xf32>
    tpu.vector_store %arg6[%c0_6, %c0_7, %c0_8], %9 {strides = array<i32>} : memref<2x8x128xf32, #tpu.memory_space<vmem>>, vector<2x8x128xf32>,
    %11 = vector.extract_strided_slice %8 {offsets = [0, 0, 128], sizes = [2, 8, 128], strides = [1, 1, 1]} : vector<2x8x256xf32> to vector<2x8x128xf32>
    %c0_9 = arith.constant 0 : index
    %c0_10 = arith.constant 0 : index
    %c0_11 = arith.constant 0 : index
    %12 = vector.load %arg7[%c0_9, %c0_10, %c0_11] : memref<2x8x128xf32, #tpu.memory_space<vmem>>, vector<2x8x128xf32>
    tpu.vector_store %arg7[%c0_9, %c0_10, %c0_11], %11 {strides = array<i32>} : memref<2x8x128xf32, #tpu.memory_space<vmem>>, vector<2x8x128xf32>,
    %cst_12 = arith.constant 0.000000e+00 : f32
    %13 = vector.broadcast %cst_12 : f32 to vector<8x32xf32>
    %cst_13 = arith.constant 0.000000e+00 : f32
    %14 = vector.broadcast %cst_13 : f32 to vector<8x32xf32>
    %c0_i32 = arith.constant 0 : i32
    %c2_i32 = arith.constant 2 : i32
    %15 = arith.addi %c0_i32, %c2_i32 : i32
    %c1_i32 = arith.constant 1 : i32
    %16:4 = scf.for %arg8 = %c0_i32 to %15 step %c1_i32 iter_args(%arg9 = %13, %arg10 = %14, %arg11 = %13, %arg12 = %14) -> (vector<8x32xf32>, vector<8x32xf32>, vector<8x32xf32>, vector<8x32xf32>)  : i32 {
      %c1_i32_15 = arith.constant 1 : i32
      %17 = arith.subi %c1_i32_15, %arg8 : i32
      %18 = arith.index_cast %arg8 : i32 to index
      %c0_16 = arith.constant 0 : index
      %c0_17 = arith.constant 0 : index
      %19 = vector.load %arg6[%18, %c0_16, %c0_17] : memref<2x8x128xf32, #tpu.memory_space<vmem>>, vector<1x8x128xf32>
      %20 = vector.shape_cast %19 : vector<1x8x128xf32> to vector<8x128xf32>
      %21 = arith.truncf %arg9 : vector<8x32xf32> to vector<8x32xbf16>
      %c0_18 = arith.constant 0 : index
      %c0_19 = arith.constant 0 : index
      %22 = vector.load %arg2[%c0_18, %c0_19] : memref<32x128xbf16, #tpu.memory_space<vmem>>, vector<32x128xbf16>
      %cst_20 = arith.constant dense<0.000000e+00> : vector<8x128xf32>
      %23 = tpu.matmul %21, %22, %cst_20 {dimension_numbers = #tpu.dot_dimension_numbers<[1], [0], [0], [1], [0, 0, 1, 1], [], []>} : vector<8x32xbf16>, vector<32x128xbf16>, vector<8x128xf32> -> vector<8x128xf32>
      %24 = arith.addf %20, %23 : vector<8x128xf32>
      %25 = arith.index_cast %17 : i32 to index
      %c0_21 = arith.constant 0 : index
      %c0_22 = arith.constant 0 : index
      %26 = vector.load %arg7[%25, %c0_21, %c0_22] : memref<2x8x128xf32, #tpu.memory_space<vmem>>, vector<1x8x128xf32>
      %27 = vector.shape_cast %26 : vector<1x8x128xf32> to vector<8x128xf32>
      %28 = arith.truncf %arg11 : vector<8x32xf32> to vector<8x32xbf16>
      %c0_23 = arith.constant 0 : index
      %c0_24 = arith.constant 0 : index
      %29 = vector.load %arg3[%c0_23, %c0_24] : memref<32x128xbf16, #tpu.memory_space<vmem>>, vector<32x128xbf16>
      %cst_25 = arith.constant dense<0.000000e+00> : vector<8x128xf32>
      %30 = tpu.matmul %28, %29, %cst_25 {dimension_numbers = #tpu.dot_dimension_numbers<[1], [0], [0], [1], [0, 0, 1, 1], [], []>} : vector<8x32xbf16>, vector<32x128xbf16>, vector<8x128xf32> -> vector<8x128xf32>
      %31 = arith.addf %27, %30 : vector<8x128xf32>
      %32 = vector.extract_strided_slice %24 {offsets = [0, 0], sizes = [8, 32], strides = [1, 1]} : vector<8x128xf32> to vector<8x32xf32>
      %33 = arith.negf %32 : vector<8x32xf32>
      %34 = math.exp %33 : vector<8x32xf32>
      %cst_26 = arith.constant 1.000000e+00 : f32
      %35 = vector.broadcast %cst_26 : f32 to vector<8x32xf32>
      %36 = arith.addf %35, %34 : vector<8x32xf32>
      %37 = arith.divf %35, %36 : vector<8x32xf32>
      %38 = vector.extract_strided_slice %24 {offsets = [0, 32], sizes = [8, 32], strides = [1, 1]} : vector<8x128xf32> to vector<8x32xf32>
      %39 = arith.negf %38 : vector<8x32xf32>
      %40 = math.exp %39 : vector<8x32xf32>
      %cst_27 = arith.constant 1.000000e+00 : f32
      %41 = vector.broadcast %cst_27 : f32 to vector<8x32xf32>
      %42 = arith.addf %41, %40 : vector<8x32xf32>
      %43 = arith.divf %41, %42 : vector<8x32xf32>
      %44 = vector.extract_strided_slice %24 {offsets = [0, 64], sizes = [8, 32], strides = [1, 1]} : vector<8x128xf32> to vector<8x32xf32>
      %45 = math.tanh %44 : vector<8x32xf32>
      %46 = vector.extract_strided_slice %24 {offsets = [0, 96], sizes = [8, 32], strides = [1, 1]} : vector<8x128xf32> to vector<8x32xf32>
      %47 = arith.negf %46 : vector<8x32xf32>
      %48 = math.exp %47 : vector<8x32xf32>
      %cst_28 = arith.constant 1.000000e+00 : f32
      %49 = vector.broadcast %cst_28 : f32 to vector<8x32xf32>
      %50 = arith.addf %49, %48 : vector<8x32xf32>
      %51 = arith.divf %49, %50 : vector<8x32xf32>
      %52 = arith.mulf %43, %arg10 : vector<8x32xf32>
      %53 = arith.mulf %37, %45 : vector<8x32xf32>
      %54 = arith.addf %52, %53 : vector<8x32xf32>
      %55 = math.tanh %54 : vector<8x32xf32>
      %56 = arith.mulf %51, %55 : vector<8x32xf32>
      %57 = vector.extract_strided_slice %31 {offsets = [0, 0], sizes = [8, 32], strides = [1, 1]} : vector<8x128xf32> to vector<8x32xf32>
      %58 = arith.negf %57 : vector<8x32xf32>
      %59 = math.exp %58 : vector<8x32xf32>
      %cst_29 = arith.constant 1.000000e+00 : f32
      %60 = vector.broadcast %cst_29 : f32 to vector<8x32xf32>
      %61 = arith.addf %60, %59 : vector<8x32xf32>
      %62 = arith.divf %60, %61 : vector<8x32xf32>
      %63 = vector.extract_strided_slice %31 {offsets = [0, 32], sizes = [8, 32], strides = [1, 1]} : vector<8x128xf32> to vector<8x32xf32>
      %64 = arith.negf %63 : vector<8x32xf32>
      %65 = math.exp %64 : vector<8x32xf32>
      %cst_30 = arith.constant 1.000000e+00 : f32
      %66 = vector.broadcast %cst_30 : f32 to vector<8x32xf32>
      %67 = arith.addf %66, %65 : vector<8x32xf32>
      %68 = arith.divf %66, %67 : vector<8x32xf32>
      %69 = vector.extract_strided_slice %31 {offsets = [0, 64], sizes = [8, 32], strides = [1, 1]} : vector<8x128xf32> to vector<8x32xf32>
      %70 = math.tanh %69 : vector<8x32xf32>
      %71 = vector.extract_strided_slice %31 {offsets = [0, 96], sizes = [8, 32], strides = [1, 1]} : vector<8x128xf32> to vector<8x32xf32>
      %72 = arith.negf %71 : vector<8x32xf32>
      %73 = math.exp %72 : vector<8x32xf32>
      %cst_31 = arith.constant 1.000000e+00 : f32
      %74 = vector.broadcast %cst_31 : f32 to vector<8x32xf32>
      %75 = arith.addf %74, %73 : vector<8x32xf32>
      %76 = arith.divf %74, %75 : vector<8x32xf32>
      %77 = arith.mulf %68, %arg12 : vector<8x32xf32>
      %78 = arith.mulf %62, %70 : vector<8x32xf32>
      %79 = arith.addf %77, %78 : vector<8x32xf32>
      %80 = math.tanh %79 : vector<8x32xf32>
      %81 = arith.mulf %76, %80 : vector<8x32xf32>
      %82 = arith.index_cast %arg8 : i32 to index
      %c0_32 = arith.constant 0 : index
      %c0_33 = arith.constant 0 : index
      %83 = vector.load %arg5[%82, %c0_32, %c0_33] : memref<2x8x64xf32, #tpu.memory_space<vmem>>, vector<1x8x32xf32>
      %84 = vector.shape_cast %83 : vector<1x8x32xf32> to vector<8x32xf32>
      %85 = vector.shape_cast %56 : vector<8x32xf32> to vector<1x8x32xf32>
      tpu.vector_store %arg5[%82, %c0_32, %c0_33], %85 {strides = array<i32>} : memref<2x8x64xf32, #tpu.memory_space<vmem>>, vector<1x8x32xf32>,
      %86 = arith.index_cast %17 : i32 to index
      %c0_34 = arith.constant 0 : index
      %c32 = arith.constant 32 : index
      %87 = vector.load %arg5[%86, %c0_34, %c32] : memref<2x8x64xf32, #tpu.memory_space<vmem>>, vector<1x8x32xf32>
      %88 = vector.shape_cast %87 : vector<1x8x32xf32> to vector<8x32xf32>
      %89 = vector.shape_cast %81 : vector<8x32xf32> to vector<1x8x32xf32>
      tpu.vector_store %arg5[%86, %c0_34, %c32], %89 {strides = array<i32>} : memref<2x8x64xf32, #tpu.memory_space<vmem>>, vector<1x8x32xf32>,
      scf.yield %56, %54, %81, %79 : vector<8x32xf32>, vector<8x32xf32>, vector<8x32xf32>, vector<8x32xf32>
    }
    %c2_i32_14 = arith.constant 2 : i32
    return
  }
}

module attributes {stable_mosaic.version = 11 : i64} {
  func.func @pool_classifier_kernel(%arg0: memref<2x8x64xf32, #tpu.memory_space<vmem>>, %arg1: memref<2x8x64xf32, #tpu.memory_space<vmem>>, %arg2: memref<2x8xf32, #tpu.memory_space<vmem>>, %arg3: memref<2x8xf32, #tpu.memory_space<vmem>>, %arg4: memref<64x32xbf16, #tpu.memory_space<vmem>>, %arg5: memref<64x32xbf16, #tpu.memory_space<vmem>>, %arg6: memref<64x32xbf16, #tpu.memory_space<vmem>>, %arg7: memref<64x32xbf16, #tpu.memory_space<vmem>>, %arg8: memref<1x32xf32, #tpu.memory_space<vmem>>, %arg9: memref<32x2xbf16, #tpu.memory_space<vmem>>, %arg10: memref<1x2xf32, #tpu.memory_space<vmem>>, %arg11: memref<2x2xf32, #tpu.memory_space<vmem>>, %arg12: memref<2x2xf32, #tpu.memory_space<vmem>>) attributes {dimension_semantics = [], scalar_prefetch = 0 : i64, scratch_operands = 0 : i64, tpu.core_type = #tpu.core_type<tc>} {
    %c0 = arith.constant 0 : index
    %c0_0 = arith.constant 0 : index
    %c0_1 = arith.constant 0 : index
    %0 = vector.load %arg0[%c0, %c0_0, %c0_1] : memref<2x8x64xf32, #tpu.memory_space<vmem>>, vector<2x8x64xf32>
    %c0_2 = arith.constant 0 : index
    %c0_3 = arith.constant 0 : index
    %c0_4 = arith.constant 0 : index
    %1 = vector.load %arg1[%c0_2, %c0_3, %c0_4] : memref<2x8x64xf32, #tpu.memory_space<vmem>>, vector<2x8x64xf32>
    %c0_5 = arith.constant 0 : index
    %c0_6 = arith.constant 0 : index
    %2 = vector.load %arg2[%c0_5, %c0_6] : memref<2x8xf32, #tpu.memory_space<vmem>>, vector<2x8xf32>
    %c0_7 = arith.constant 0 : index
    %c0_8 = arith.constant 0 : index
    %3 = vector.load %arg3[%c0_7, %c0_8] : memref<2x8xf32, #tpu.memory_space<vmem>>, vector<2x8xf32>
    %4 = vector.shape_cast %2 : vector<2x8xf32> to vector<2x8x1xf32>
    %5 = vector.broadcast %4 : vector<2x8x1xf32> to vector<2x8x64xf32>
    %6 = arith.mulf %0, %5 : vector<2x8x64xf32>
    %cst = arith.constant dense<0.000000e+00> : vector<2x64xf32>
    %7 = vector.multi_reduction <add>, %6, %cst [1] : vector<2x8x64xf32> to vector<2x64xf32>
    %cst_9 = arith.constant dense<0.000000e+00> : vector<2xf32>
    %8 = vector.multi_reduction <add>, %2, %cst_9 [1] : vector<2x8xf32> to vector<2xf32>
    %9 = vector.shape_cast %8 : vector<2xf32> to vector<2x1xf32>
    %10 = tpu.reciprocal %9 {approx = true} : vector<2x1xf32> -> vector<2x1xf32>
    %11 = vector.broadcast %10 : vector<2x1xf32> to vector<2x64xf32>
    %12 = arith.mulf %7, %11 : vector<2x64xf32>
    %13 = vector.shape_cast %3 : vector<2x8xf32> to vector<2x8x1xf32>
    %14 = vector.broadcast %13 : vector<2x8x1xf32> to vector<2x8x64xf32>
    %15 = arith.mulf %1, %14 : vector<2x8x64xf32>
    %cst_10 = arith.constant dense<0.000000e+00> : vector<2x64xf32>
    %16 = vector.multi_reduction <add>, %15, %cst_10 [1] : vector<2x8x64xf32> to vector<2x64xf32>
    %cst_11 = arith.constant dense<0.000000e+00> : vector<2xf32>
    %17 = vector.multi_reduction <add>, %3, %cst_11 [1] : vector<2x8xf32> to vector<2xf32>
    %18 = vector.shape_cast %17 : vector<2xf32> to vector<2x1xf32>
    %19 = tpu.reciprocal %18 {approx = true} : vector<2x1xf32> -> vector<2x1xf32>
    %20 = vector.broadcast %19 : vector<2x1xf32> to vector<2x64xf32>
    %21 = arith.mulf %16, %20 : vector<2x64xf32>
    %cst_12 = arith.constant dense<0xFF800000> : vector<2x64xf32>
    %22 = vector.multi_reduction <maximumf>, %0, %cst_12 [1] : vector<2x8x64xf32> to vector<2x64xf32>
    %cst_13 = arith.constant dense<0xFF800000> : vector<2x64xf32>
    %23 = vector.multi_reduction <maximumf>, %1, %cst_13 [1] : vector<2x8x64xf32> to vector<2x64xf32>
    %24 = arith.truncf %12 : vector<2x64xf32> to vector<2x64xbf16>
    %c0_14 = arith.constant 0 : index
    %c0_15 = arith.constant 0 : index
    %25 = vector.load %arg4[%c0_14, %c0_15] : memref<64x32xbf16, #tpu.memory_space<vmem>>, vector<64x32xbf16>
    %cst_16 = arith.constant dense<0.000000e+00> : vector<2x32xf32>
    %26 = tpu.matmul %24, %25, %cst_16 {dimension_numbers = #tpu.dot_dimension_numbers<[1], [0], [0], [1], [0, 0, 1, 1], [], []>} : vector<2x64xbf16>, vector<64x32xbf16>, vector<2x32xf32> -> vector<2x32xf32>
    %27 = arith.truncf %22 : vector<2x64xf32> to vector<2x64xbf16>
    %c0_17 = arith.constant 0 : index
    %c0_18 = arith.constant 0 : index
    %28 = vector.load %arg5[%c0_17, %c0_18] : memref<64x32xbf16, #tpu.memory_space<vmem>>, vector<64x32xbf16>
    %cst_19 = arith.constant dense<0.000000e+00> : vector<2x32xf32>
    %29 = tpu.matmul %27, %28, %cst_19 {dimension_numbers = #tpu.dot_dimension_numbers<[1], [0], [0], [1], [0, 0, 1, 1], [], []>} : vector<2x64xbf16>, vector<64x32xbf16>, vector<2x32xf32> -> vector<2x32xf32>
    %30 = arith.addf %26, %29 : vector<2x32xf32>
    %31 = arith.truncf %21 : vector<2x64xf32> to vector<2x64xbf16>
    %c0_20 = arith.constant 0 : index
    %c0_21 = arith.constant 0 : index
    %32 = vector.load %arg6[%c0_20, %c0_21] : memref<64x32xbf16, #tpu.memory_space<vmem>>, vector<64x32xbf16>
    %cst_22 = arith.constant dense<0.000000e+00> : vector<2x32xf32>
    %33 = tpu.matmul %31, %32, %cst_22 {dimension_numbers = #tpu.dot_dimension_numbers<[1], [0], [0], [1], [0, 0, 1, 1], [], []>} : vector<2x64xbf16>, vector<64x32xbf16>, vector<2x32xf32> -> vector<2x32xf32>
    %34 = arith.addf %30, %33 : vector<2x32xf32>
    %35 = arith.truncf %23 : vector<2x64xf32> to vector<2x64xbf16>
    %c0_23 = arith.constant 0 : index
    %c0_24 = arith.constant 0 : index
    %36 = vector.load %arg7[%c0_23, %c0_24] : memref<64x32xbf16, #tpu.memory_space<vmem>>, vector<64x32xbf16>
    %cst_25 = arith.constant dense<0.000000e+00> : vector<2x32xf32>
    %37 = tpu.matmul %35, %36, %cst_25 {dimension_numbers = #tpu.dot_dimension_numbers<[1], [0], [0], [1], [0, 0, 1, 1], [], []>} : vector<2x64xbf16>, vector<64x32xbf16>, vector<2x32xf32> -> vector<2x32xf32>
    %38 = arith.addf %34, %37 : vector<2x32xf32>
    %c0_26 = arith.constant 0 : index
    %c0_27 = arith.constant 0 : index
    %39 = vector.load %arg8[%c0_26, %c0_27] : memref<1x32xf32, #tpu.memory_space<vmem>>, vector<1x32xf32>
    %40 = vector.broadcast %39 : vector<1x32xf32> to vector<2x32xf32>
    %41 = arith.addf %38, %40 : vector<2x32xf32>
    %42 = math.tanh %41 : vector<2x32xf32>
    %43 = arith.truncf %42 : vector<2x32xf32> to vector<2x32xbf16>
    %c0_28 = arith.constant 0 : index
    %c0_29 = arith.constant 0 : index
    %44 = vector.load %arg9[%c0_28, %c0_29] : memref<32x2xbf16, #tpu.memory_space<vmem>>, vector<32x2xbf16>
    %cst_30 = arith.constant dense<0.000000e+00> : vector<2x2xf32>
    %45 = tpu.matmul %43, %44, %cst_30 {dimension_numbers = #tpu.dot_dimension_numbers<[1], [0], [0], [1], [0, 0, 1, 1], [], []>} : vector<2x32xbf16>, vector<32x2xbf16>, vector<2x2xf32> -> vector<2x2xf32>
    %c0_31 = arith.constant 0 : index
    %c0_32 = arith.constant 0 : index
    %46 = vector.load %arg10[%c0_31, %c0_32] : memref<1x2xf32, #tpu.memory_space<vmem>>, vector<1x2xf32>
    %47 = vector.broadcast %46 : vector<1x2xf32> to vector<2x2xf32>
    %48 = arith.addf %45, %47 : vector<2x2xf32>
    %c0_33 = arith.constant 0 : index
    %c0_34 = arith.constant 0 : index
    %49 = vector.load %arg11[%c0_33, %c0_34] : memref<2x2xf32, #tpu.memory_space<vmem>>, vector<2x2xf32>
    tpu.vector_store %arg11[%c0_33, %c0_34], %48 {strides = array<i32>} : memref<2x2xf32, #tpu.memory_space<vmem>>, vector<2x2xf32>,
    %cst_35 = arith.constant dense<0xFF800000> : vector<2xf32>
    %50 = vector.multi_reduction <maximumf>, %48, %cst_35 [1] : vector<2x2xf32> to vector<2xf32>
    %cst_36 = arith.constant 0xFF800000 : f32
    %51 = vector.broadcast %cst_36 : f32 to vector<2xf32>
    %52 = arith.maximumf %51, %50 : vector<2xf32>
    %53 = vector.shape_cast %52 : vector<2xf32> to vector<2x1xf32>
    %54 = vector.broadcast %53 : vector<2x1xf32> to vector<2x2xf32>
    %55 = arith.subf %48, %54 : vector<2x2xf32>
    %56 = math.exp %55 : vector<2x2xf32>
    %cst_37 = arith.constant dense<0.000000e+00> : vector<2xf32>
    %57 = vector.multi_reduction <add>, %56, %cst_37 [1] : vector<2x2xf32> to vector<2xf32>
    %58 = vector.shape_cast %57 : vector<2xf32> to vector<2x1xf32>
    %59 = vector.broadcast %58 : vector<2x1xf32> to vector<2x2xf32>
    %60 = arith.divf %56, %59 : vector<2x2xf32>
    %c0_38 = arith.constant 0 : index
    %c0_39 = arith.constant 0 : index
    %61 = vector.load %arg12[%c0_38, %c0_39] : memref<2x2xf32, #tpu.memory_space<vmem>>, vector<2x2xf32>
    tpu.vector_store %arg12[%c0_38, %c0_39], %60 {strides = array<i32>} : memref<2x2xf32, #tpu.memory_space<vmem>>, vector<2x2xf32>,
    return
  }
}

</mosaic_0001>

<llo_original>
// kernel: esim_forward.6
$region0: #{esim_forward.6}
  #allocation0 [shape = 'u32[]', space=smem, size = 0x4, offset = 0x4, fixed_abs, tag = 'smem constant byte address 0x4 - core index']
  #allocation1 [shape = 'u32[144,128]{1,0:T(1,128)}', space=vmem, size = 0x12000, scoped, tag = 'internal scratch']
  #allocation2 [shape = 'f32[2,8,128]{2,1,0:T(8,128)}', space=vmem, size = 0x2000, scoped, tag = 'scratch operand']
  #allocation3 [shape = 'f32[2,8,128]{2,1,0:T(8,128)}', space=vmem, size = 0x2000, scoped, tag = 'scratch operand']
  %s0 = inlined_call_operand.vmem [shape: f32[2,8,64], index: 0, kind: input, shape index: {}]
  %s1 = inlined_call_operand.vmem [shape: bf16[64,256], index: 1, kind: input, shape index: {}]
  %s2 = inlined_call_operand.vmem [shape: bf16[32,128], index: 2, kind: input, shape index: {}]
  %s3 = inlined_call_operand.vmem [shape: bf16[32,128], index: 3, kind: input, shape index: {}]
  %s4 = inlined_call_operand.vmem [shape: f32[1,256], index: 4, kind: input, shape index: {}]
  %s5 = inlined_call_operand.vmem [shape: f32[2,8,64], index: 5, kind: output, shape index: {}]
  %s6 = sld [smem:[#allocation0]]
  $region37: #{esim_forward.6} parent=0
    _
  %s8 = ssub.s32 1, %s6
  %s9 = scalar_select 0, %s8, %s6
  // Predicated region
  $region2: #{esim_forward.6} parent=0 // pred_check
    _
  $region3: #{esim_forward.6} parent=0 // pred_check_branch
    %11 = sbr.rel (0) target = $region5
  $region4: #{esim_forward.6} parent=0 // pred_region
    _
  $region5: #{esim_forward.6} parent=0 // pred_fallthru
    _
  // Predicated region
  $region6: #{esim_forward.6} parent=0 // pred_check
    _
  $region7: #{esim_forward.6} parent=0 // pred_check_branch
    %13 = sbr.rel (0) target = $region9
  $region8: #{esim_forward.6} parent=0 // pred_region
    _
  $region9: #{esim_forward.6} parent=0 // pred_fallthru
    _
  // Predicated region
  $region10: #{esim_forward.6} parent=0 // pred_check
    _
  $region11: #{esim_forward.6} parent=0 // pred_check_branch
    %15 = sbr.rel (0) target = $region13
  $region12: #{esim_forward.6} parent=0 // pred_region
    _
  $region13: #{esim_forward.6} parent=0 // pred_fallthru
    _
  // Predicated region
  $region14: #{esim_forward.6} parent=0 // pred_check
    _
  $region15: #{esim_forward.6} parent=0 // pred_check_branch
    %17 = sbr.rel (0) target = $region17
  $region16: #{esim_forward.6} parent=0 // pred_region
    _
  $region17: #{esim_forward.6} parent=0 // pred_fallthru
    _
  // Predicated region
  $region18: #{esim_forward.6} parent=0 // pred_check
    _
  $region19: #{esim_forward.6} parent=0 // pred_check_branch
    %19 = sbr.rel (0) target = $region21
  $region20: #{esim_forward.6} parent=0 // pred_region
    _
  $region21: #{esim_forward.6} parent=0 // pred_fallthru
    _
  %v21 = vld [vmem:[%s0] sm:$0xff]
  %v22 = vld [vmem:[%s0 + $0x8] sm:$0xff]
  %v23 = vpack.c.bf16 %v22, %v21
  %v24 = vld [vmem:[%s1] sm:$0xff]
  %v25 = vld [vmem:[%s1 + $0x8] sm:$0xff]
  %v26 = vld [vmem:[%s1 + $0x10] sm:$0xff]
  %v27 = vld [vmem:[%s1 + $0x18] sm:$0xff]
  %v28 = vld [vmem:[%s1 + $0x20] sm:$0xff]
  %v29 = vld [vmem:[%s1 + $0x28] sm:$0xff]
  %v30 = vld [vmem:[%s1 + $0x30] sm:$0xff]
  %v31 = vld [vmem:[%s1 + $0x38] sm:$0xff]
  %v32 = vld [vmem:[%s4] sm:$0x3]
  %v34 = vlaneseq
  %v35 = vshrl.u32 %v34, 7
  %v36 = vsub.s32 0, %v35
  %v37 = vrot.slane %v32, %v36
  %v38 = vlaneseq
  %v39 = vshrl.u32 %v38, 7
  %v40 = vsub.s32 1, %v39
  %v41 = vrot.slane %v32, %v40
  %v52 = vunpack.c.l.b16 %v24
  %v53 = vunpack.c.h.b16 %v24
  %v54 = vunpack.c.l.b16 %v25
  %v55 = vunpack.c.h.b16 %v25
  %v56 = vunpack.c.l.b16 %v26
  %v57 = vunpack.c.h.b16 %v26
  %v58 = vunpack.c.l.b16 %v27
  %v59 = vunpack.c.h.b16 %v27
  %v60 = vunpack.c.l.b16 %v28
  %v61 = vunpack.c.h.b16 %v28
  %v62 = vunpack.c.l.b16 %v29
  %v63 = vunpack.c.h.b16 %v29
  %v64 = vunpack.c.l.b16 %v30
  %v65 = vunpack.c.h.b16 %v30
  %v66 = vunpack.c.l.b16 %v31
  %v67 = vunpack.c.h.b16 %v31
  %v68 = vpack.c.b16 %v54, %v52
  %v69 = vpack.c.b16 %v55, %v53
  %v70 = vpack.c.b16 %v58, %v56
  %v71 = vpack.c.b16 %v59, %v57
  %v72 = vpack.c.b16 %v62, %v60
  %v73 = vpack.c.b16 %v63, %v61
  %v74 = vpack.c.b16 %v66, %v64
  %v75 = vpack.c.b16 %v67, %v65
  %vm84 = vcmask 523264
  %v86 = vsel %vm84, %v23, 0
  %88 = vmatprep.subr.bf16.mxu0 %v69
  %89 = vmatpush1.bf16.msra.mxu0 %v68
  %90 = vmatprep.subr.bf16.mxu0 %v71
  %91 = vmatpush1.bf16.msra.mxu0 %v70
  %92 = vmatprep.subr.bf16.mxu0 %v73
  %93 = vmatpush1.bf16.msra.mxu0 %v72
  %94 = vmatprep.subr.bf16.mxu0 %v75
  %95 = vmatpush1.bf16.msra.mxu0 %v74
  %96 = vmatprep.subr.bf16.mxu0 0
  %97 = vmatpush1.bf16.msra.mxu0 0
  %98 = vmatprep.subr.bf16.mxu0 0
  %99 = vmatpush1.bf16.msra.mxu0 0
  %100 = vmatprep.subr.bf16.mxu0 0
  %101 = vmatpush1.bf16.msra.mxu0 0
  %102 = vmatprep.subr.bf16.mxu0 0
  %103 = vmatpush1.bf16.msra.mxu0 0
  %104 = vmatprep.subr.bf16.mxu0 0
  %105 = vmatpush1.bf16.msra.mxu0 0
  %106 = vmatprep.subr.bf16.mxu0 0
  %107 = vmatpush1.bf16.msra.mxu0 0
  %108 = vmatprep.subr.bf16.mxu0 0
  %109 = vmatpush1.bf16.msra.mxu0 0
  %110 = vmatprep.subr.bf16.mxu0 0
  %111 = vmatpush1.bf16.msra.mxu0 0
  %112 = vmatprep.subr.bf16.mxu0 0
  %113 = vmatpush1.bf16.msra.mxu0 0
  %114 = vmatprep.subr.bf16.mxu0 0
  %115 = vmatpush1.bf16.msra.mxu0 0
  %116 = vmatprep.subr.bf16.mxu0 0
  %117 = vmatpush1.bf16.msra.mxu0 0
  %118 = vmatprep.subr.bf16.mxu0 0
  %119 = vmatpush1.bf16.msra.mxu0 0
  %120 = vmatprep.mubr.bf16.mxu0 0
  %121 = vmatmul.mubr.bf16.gmra.mrb[0].mxu0 %v86
  %v122 = vpop.f32.mrb[0].mxu0
  %v123 = vadd.f32 %v37, %v122
  %v124 = vpop.f32.mrb[0].mxu0
  %v125 = vadd.f32 %v41, %v124
  %v126 = vpop.f32.mrb[0].mxu0
  %v127 = vadd.f32 %v37, %v126
  %v128 = vpop.f32.mrb[0].mxu0
  %v129 = vadd.f32 %v41, %v128
  %130 = vdwg.mxu0
  %131 = vst [vmem:[#allocation2] sm:$0xff] %v123
  %132 = vst [vmem:[#allocation2 + $0x8] sm:$0xff] %v127
  %133 = vst [vmem:[#allocation3] sm:$0xff] %v125
  %134 = vst [vmem:[#allocation3 + $0x8] sm:$0xff] %v129
  loop: start=0, step=1, limit=2
  $region22: #{esim_forward.6} parent=0 // loop_pre_header
    _
  $region23: #{esim_forward.6} parent=0 // loop_header
    %s136 = sphi 0, %s140
    %p137 = scmp.ge.s32.totalorder %s136, 2
    %v141 = vphi 0.0, %v304
    %v142 = vphi 0.0, %v298
    %v143 = vphi 0.0, %v328
    %v144 = vphi 0.0, %v322
  $region24: #{esim_forward.6} parent=0 // loop_header_branch
    %139 = sbr.rel (%p137) target = $region28
  $region25: #{esim_forward.6} parent=0 // loop_body
    %s145 = ssub.s32 1, %s136
    %s146 = smul.u32 %s136, 8
    %s147 = scalar_lea.vmem [#allocation2], %s146
    %v148 = vld [vmem:[%s147] sm:$0xff]
    %v149 = vpack.c.bf16 %v141, %v141
    %v150 = vld [vmem:[%s2] sm:$0xf]
    %v151 = vld [vmem:[%s2 + $0x4] sm:$0xf]
    %v152 = vld [vmem:[%s2 + $0x8] sm:$0xf]
    %v153 = vld [vmem:[%s2 + $0xc] sm:$0xf]
    %155 = vrot.lane.b32.xlu0 %v149, 32
    %v156 = vpop.permute.xlu0 %155
    %v161 = vunpack.c.l.b16 %v150
    %v162 = vunpack.c.l.b16 %v151
    %v163 = vunpack.c.l.b16 %v152
    %v164 = vunpack.c.l.b16 %v153
    %v165 = vpack.c.b16 %v162, %v161
    %v166 = vpack.c.b16 %v164, %v163
    %vm169 = vcmask 261120
    %v171 = vsel %vm169, %v156, 0
    %173 = vmatprep.subr.bf16.mxu0 0
    %174 = vmatpush1.bf16.msra.mxu0 %v165
    %175 = vmatprep.subr.bf16.mxu0 0
    %176 = vmatpush1.bf16.msra.mxu0 %v166
    %177 = vmatprep.subr.bf16.mxu0 0
    %178 = vmatpush1.bf16.msra.mxu0 0
    %179 = vmatprep.subr.bf16.mxu0 0
    %180 = vmatpush1.bf16.msra.mxu0 0
    %181 = vmatprep.subr.bf16.mxu0 0
    %182 = vmatpush1.bf16.msra.mxu0 0
    %183 = vmatprep.subr.bf16.mxu0 0
    %184 = vmatpush1.bf16.msra.mxu0 0
    %185 = vmatprep.subr.bf16.mxu0 0
    %186 = vmatpush1.bf16.msra.mxu0 0
    %187 = vmatprep.subr.bf16.mxu0 0
    %188 = vmatpush1.bf16.msra.mxu0 0
    %189 = vmatprep.subr.bf16.mxu0 0
    %190 = vmatpush1.bf16.msra.mxu0 0
    %191 = vmatprep.subr.bf16.mxu0 0
    %192 = vmatpush1.bf16.msra.mxu0 0
    %193 = vmatprep.subr.bf16.mxu0 0
    %194 = vmatpush1.bf16.msra.mxu0 0
    %195 = vmatprep.subr.bf16.mxu0 0
    %196 = vmatpush1.bf16.msra.mxu0 0
    %197 = vmatprep.subr.bf16.mxu0 0
    %198 = vmatpush1.bf16.msra.mxu0 0
    %199 = vmatprep.subr.bf16.mxu0 0
    %200 = vmatpush1.bf16.msra.mxu0 0
    %201 = vmatprep.subr.bf16.mxu0 0
    %202 = vmatpush1.bf16.msra.mxu0 0
    %203 = vmatprep.subr.bf16.mxu0 0
    %204 = vmatpush1.bf16.msra.mxu0 0
    %205 = vmatprep.mubr.bf16.mxu0 0
    %206 = vmatmul.mubr.bf16.gmra.mrb[0].mxu0 %v171
    %v207 = vpop.f32.mrb[0].mxu0
    %v208 = vadd.f32 0.0, %v207
    %v209 = vpop.f32.mrb[0].mxu0
    %v210 = vpop.f32.mrb[0].mxu0
    %v211 = vpop.f32.mrb[0].mxu0
    %212 = vdwg.mxu0
    %v213 = vadd.f32 %v148, %v208
    %s214 = smul.u32 %s145, 8
    %s215 = scalar_lea.vmem [#allocation3], %s214
    %v216 = vld [vmem:[%s215] sm:$0xff]
    %v217 = vpack.c.bf16 %v143, %v143
    %v218 = vld [vmem:[%s3] sm:$0xf]
    %v219 = vld [vmem:[%s3 + $0x4] sm:$0xf]
    %v220 = vld [vmem:[%s3 + $0x8] sm:$0xf]
    %v221 = vld [vmem:[%s3 + $0xc] sm:$0xf]
    %223 = vrot.lane.b32.xlu0 %v217, 32
    %v224 = vpop.permute.xlu0 %223
    %v229 = vunpack.c.l.b16 %v218
    %v230 = vunpack.c.l.b16 %v219
    %v231 = vunpack.c.l.b16 %v220
    %v232 = vunpack.c.l.b16 %v221
    %v233 = vpack.c.b16 %v230, %v229
    %v234 = vpack.c.b16 %v232, %v231
    %v238 = vsel %vm169, %v224, 0
    %240 = vmatprep.subr.bf16.mxu0 0
    %241 = vmatpush1.bf16.msra.mxu0 %v233
    %242 = vmatprep.subr.bf16.mxu0 0
    %243 = vmatpush1.bf16.msra.mxu0 %v234
    %244 = vmatprep.subr.bf16.mxu0 0
    %245 = vmatpush1.bf16.msra.mxu0 0
    %246 = vmatprep.subr.bf16.mxu0 0
    %247 = vmatpush1.bf16.msra.mxu0 0
    %248 = vmatprep.subr.bf16.mxu0 0
    %249 = vmatpush1.bf16.msra.mxu0 0
    %250 = vmatprep.subr.bf16.mxu0 0
    %251 = vmatpush1.bf16.msra.mxu0 0
    %252 = vmatprep.subr.bf16.mxu0 0
    %253 = vmatpush1.bf16.msra.mxu0 0
    %254 = vmatprep.subr.bf16.mxu0 0
    %255 = vmatpush1.bf16.msra.mxu0 0
    %256 = vmatprep.subr.bf16.mxu0 0
    %257 = vmatpush1.bf16.msra.mxu0 0
    %258 = vmatprep.subr.bf16.mxu0 0
    %259 = vmatpush1.bf16.msra.mxu0 0
    %260 = vmatprep.subr.bf16.mxu0 0
    %261 = vmatpush1.bf16.msra.mxu0 0
    %262 = vmatprep.subr.bf16.mxu0 0
    %263 = vmatpush1.bf16.msra.mxu0 0
    %264 = vmatprep.subr.bf16.mxu0 0
    %265 = vmatpush1.bf16.msra.mxu0 0
    %266 = vmatprep.subr.bf16.mxu0 0
    %267 = vmatpush1.bf16.msra.mxu0 0
    %268 = vmatprep.subr.bf16.mxu0 0
    %269 = vmatpush1.bf16.msra.mxu0 0
    %270 = vmatprep.subr.bf16.mxu0 0
    %271 = vmatpush1.bf16.msra.mxu0 0
    %272 = vmatprep.mubr.bf16.mxu0 0
    %273 = vmatmul.mubr.bf16.gmra.mrb[0].mxu0 %v238
    %v274 = vpop.f32.mrb[0].mxu0
    %v275 = vadd.f32 0.0, %v274
    %v276 = vpop.f32.mrb[0].mxu0
    %v277 = vpop.f32.mrb[0].mxu0
    %v278 = vpop.f32.mrb[0].mxu0
    %279 = vdwg.mxu0
    %v280 = vadd.f32 %v216, %v275
    %v281 = vxor.u32 %v213, 2147483648
    %v282 = vmul.f32 %v281, 1.442695
    %v283 = vpow.pop %v282
    %v284 = vadd.f32 %v283, 1.0
    %v285 = vrcp.pop %v284
    %v286 = vmul.f32 1.0, %v285
    %v287 = vtanh.pop %v213
    %v288 = vmul.f32 %v286, %v142
    %290 = vrot.lane.b32.xlu0 %v287, 64
    %v291 = vpop.permute.xlu0 %290
    %v293 = vmul.f32 %v286, %v291
    %295 = vrot.lane.b32.xlu0 %v293, 32
    %v296 = vpop.permute.xlu0 %295
    %v298 = vadd.f32 %v288, %v296
    %v299 = vtanh.pop %v298
    %301 = vrot.lane.b32.xlu0 %v299, 64
    %v302 = vpop.permute.xlu0 %301
    %v304 = vmul.f32 %v286, %v302
    %v305 = vxor.u32 %v280, 2147483648
    %v306 = vmul.f32 %v305, 1.442695
    %v307 = vpow.pop %v306
    %v308 = vadd.f32 %v307, 1.0
    %v309 = vrcp.pop %v308
    %v310 = vmul.f32 1.0, %v309
    %v311 = vtanh.pop %v280
    %v312 = vmul.f32 %v310, %v144
    %314 = vrot.lane.b32.xlu0 %v311, 64
    %v315 = vpop.permute.xlu0 %314
    %v317 = vmul.f32 %v310, %v315
    %319 = vrot.lane.b32.xlu0 %v317, 32
    %v320 = vpop.permute.xlu0 %319
    %v322 = vadd.f32 %v312, %v320
    %v323 = vtanh.pop %v322
    %325 = vrot.lane.b32.xlu0 %v323, 64
    %v326 = vpop.permute.xlu0 %325
    %v328 = vmul.f32 %v310, %v326
    %330 = vrot.lane.b32.xlu0 %v304, 32
    %v331 = vpop.permute.xlu0 %330
    %s333 = scalar_lea.vmem %s5, %s146
    %334 = vst.msk [vmem:[%s333] sm:$0xff] %vm169, %v331
    %336 = vrot.lane.b32.xlu0 %v328, 64
    %v337 = vpop.permute.xlu0 %336
    %s339 = scalar_lea.vmem %s5, %s214
    %vm340 = vcmask 523520
    %341 = vst.msk [vmem:[%s339] sm:$0xff] %vm340, %v337
  $region26: #{esim_forward.6} parent=0 // loop_footer
    %s140 = sadd.s32 1, %s136
  $region27: #{esim_forward.6} parent=0 // loop_footer_branch
    %135 = sbr.rel target = $region23
  $region28: #{esim_forward.6} parent=0 // loop_exit
    _
  // Predicated region
  $region29: #{esim_forward.6} parent=0 // pred_check
    _
  $region30: #{esim_forward.6} parent=0 // pred_check_branch
    %343 = sbr.rel (0) target = $region32
  $region31: #{esim_forward.6} parent=0 // pred_region
    _
  $region32: #{esim_forward.6} parent=0 // pred_fallthru
    _
  // Predicated region
  $region33: #{esim_forward.6} parent=0 // pred_check
    _
  $region34: #{esim_forward.6} parent=0 // pred_check_branch
    %345 = sbr.rel (0) target = $region36
  $region35: #{esim_forward.6} parent=0 // pred_region
    _
  $region36: #{esim_forward.6} parent=0 // pred_fallthru
    _

// kernel: esim_forward.9
$region0: #{esim_forward.9}
  #allocation0 [shape = 'u32[]', space=smem, size = 0x4, offset = 0x4, fixed_abs, tag = 'smem constant byte address 0x4 - core index']
  #allocation1 [shape = 'u32[144,128]{1,0:T(1,128)}', space=vmem, size = 0x12000, scoped, tag = 'internal scratch']
  #allocation2 [shape = 'f32[2,8,128]{2,1,0:T(8,128)}', space=vmem, size = 0x2000, scoped, tag = 'scratch operand']
  #allocation3 [shape = 'f32[2,8,128]{2,1,0:T(8,128)}', space=vmem, size = 0x2000, scoped, tag = 'scratch operand']
  %s0 = inlined_call_operand.vmem [shape: f32[2,8,32], index: 0, kind: input, shape index: {}]
  %s1 = inlined_call_operand.vmem [shape: bf16[32,256], index: 1, kind: input, shape index: {}]
  %s2 = inlined_call_operand.vmem [shape: bf16[32,128], index: 2, kind: input, shape index: {}]
  %s3 = inlined_call_operand.vmem [shape: bf16[32,128], index: 3, kind: input, shape index: {}]
  %s4 = inlined_call_operand.vmem [shape: f32[1,256], index: 4, kind: input, shape index: {}]
  %s5 = inlined_call_operand.vmem [shape: f32[2,8,64], index: 5, kind: output, shape index: {}]
  %s6 = sld [smem:[#allocation0]]
  $region37: #{esim_forward.9} parent=0
    _
  %s8 = ssub.s32 1, %s6
  %s9 = scalar_select 0, %s8, %s6
  // Predicated region
  $region2: #{esim_forward.9} parent=0 // pred_check
    _
  $region3: #{esim_forward.9} parent=0 // pred_check_branch
    %11 = sbr.rel (0) target = $region5
  $region4: #{esim_forward.9} parent=0 // pred_region
    _
  $region5: #{esim_forward.9} parent=0 // pred_fallthru
    _
  // Predicated region
  $region6: #{esim_forward.9} parent=0 // pred_check
    _
  $region7: #{esim_forward.9} parent=0 // pred_check_branch
    %13 = sbr.rel (0) target = $region9
  $region8: #{esim_forward.9} parent=0 // pred_region
    _
  $region9: #{esim_forward.9} parent=0 // pred_fallthru
    _
  // Predicated region
  $region10: #{esim_forward.9} parent=0 // pred_check
    _
  $region11: #{esim_forward.9} parent=0 // pred_check_branch
    %15 = sbr.rel (0) target = $region13
  $region12: #{esim_forward.9} parent=0 // pred_region
    _
  $region13: #{esim_forward.9} parent=0 // pred_fallthru
    _
  // Predicated region
  $region14: #{esim_forward.9} parent=0 // pred_check
    _
  $region15: #{esim_forward.9} parent=0 // pred_check_branch
    %17 = sbr.rel (0) target = $region17
  $region16: #{esim_forward.9} parent=0 // pred_region
    _
  $region17: #{esim_forward.9} parent=0 // pred_fallthru
    _
  // Predicated region
  $region18: #{esim_forward.9} parent=0 // pred_check
    _
  $region19: #{esim_forward.9} parent=0 // pred_check_branch
    %19 = sbr.rel (0) target = $region21
  $region20: #{esim_forward.9} parent=0 // pred_region
    _
  $region21: #{esim_forward.9} parent=0 // pred_fallthru
    _
  %v21 = vld [vmem:[%s0] sm:$0xff]
  %v22 = vld [vmem:[%s0 + $0x8] sm:$0xff]
  %v23 = vpack.c.bf16 %v22, %v21
  %v24 = vld [vmem:[%s1] sm:$0xff]
  %v25 = vld [vmem:[%s1 + $0x8] sm:$0xff]
  %v26 = vld [vmem:[%s1 + $0x10] sm:$0xff]
  %v27 = vld [vmem:[%s1 + $0x18] sm:$0xff]
  %v28 = vld [vmem:[%s4] sm:$0x3]
  %v30 = vlaneseq
  %v31 = vshrl.u32 %v30, 7
  %v32 = vsub.s32 0, %v31
  %v33 = vrot.slane %v28, %v32
  %v34 = vlaneseq
  %v35 = vshrl.u32 %v34, 7
  %v36 = vsub.s32 1, %v35
  %v37 = vrot.slane %v28, %v36
  %v44 = vunpack.c.l.b16 %v24
  %v45 = vunpack.c.h.b16 %v24
  %v46 = vunpack.c.l.b16 %v25
  %v47 = vunpack.c.h.b16 %v25
  %v48 = vunpack.c.l.b16 %v26
  %v49 = vunpack.c.h.b16 %v26
  %v50 = vunpack.c.l.b16 %v27
  %v51 = vunpack.c.h.b16 %v27
  %v52 = vpack.c.b16 %v46, %v44
  %v53 = vpack.c.b16 %v47, %v45
  %v54 = vpack.c.b16 %v50, %v48
  %v55 = vpack.c.b16 %v51, %v49
  %vm60 = vcmask 261120
  %v62 = vsel %vm60, %v23, 0
  %64 = vmatprep.subr.bf16.mxu0 %v53
  %65 = vmatpush1.bf16.msra.mxu0 %v52
  %66 = vmatprep.subr.bf16.mxu0 %v55
  %67 = vmatpush1.bf16.msra.mxu0 %v54
  %68 = vmatprep.subr.bf16.mxu0 0
  %69 = vmatpush1.bf16.msra.mxu0 0
  %70 = vmatprep.subr.bf16.mxu0 0
  %71 = vmatpush1.bf16.msra.mxu0 0
  %72 = vmatprep.subr.bf16.mxu0 0
  %73 = vmatpush1.bf16.msra.mxu0 0
  %74 = vmatprep.subr.bf16.mxu0 0
  %75 = vmatpush1.bf16.msra.mxu0 0
  %76 = vmatprep.subr.bf16.mxu0 0
  %77 = vmatpush1.bf16.msra.mxu0 0
  %78 = vmatprep.subr.bf16.mxu0 0
  %79 = vmatpush1.bf16.msra.mxu0 0
  %80 = vmatprep.subr.bf16.mxu0 0
  %81 = vmatpush1.bf16.msra.mxu0 0
  %82 = vmatprep.subr.bf16.mxu0 0
  %83 = vmatpush1.bf16.msra.mxu0 0
  %84 = vmatprep.subr.bf16.mxu0 0
  %85 = vmatpush1.bf16.msra.mxu0 0
  %86 = vmatprep.subr.bf16.mxu0 0
  %87 = vmatpush1.bf16.msra.mxu0 0
  %88 = vmatprep.subr.bf16.mxu0 0
  %89 = vmatpush1.bf16.msra.mxu0 0
  %90 = vmatprep.subr.bf16.mxu0 0
  %91 = vmatpush1.bf16.msra.mxu0 0
  %92 = vmatprep.subr.bf16.mxu0 0
  %93 = vmatpush1.bf16.msra.mxu0 0
  %94 = vmatprep.subr.bf16.mxu0 0
  %95 = vmatpush1.bf16.msra.mxu0 0
  %96 = vmatprep.mubr.bf16.mxu0 0
  %97 = vmatmul.mubr.bf16.gmra.mrb[0].mxu0 %v62
  %v98 = vpop.f32.mrb[0].mxu0
  %v99 = vadd.f32 %v33, %v98
  %v100 = vpop.f32.mrb[0].mxu0
  %v101 = vadd.f32 %v37, %v100
  %v102 = vpop.f32.mrb[0].mxu0
  %v103 = vadd.f32 %v33, %v102
  %v104 = vpop.f32.mrb[0].mxu0
  %v105 = vadd.f32 %v37, %v104
  %106 = vdwg.mxu0
  %107 = vst [vmem:[#allocation2] sm:$0xff] %v99
  %108 = vst [vmem:[#allocation2 + $0x8] sm:$0xff] %v103
  %109 = vst [vmem:[#allocation3] sm:$0xff] %v101
  %110 = vst [vmem:[#allocation3 + $0x8] sm:$0xff] %v105
  loop: start=0, step=1, limit=2
  $region22: #{esim_forward.9} parent=0 // loop_pre_header
    _
  $region23: #{esim_forward.9} parent=0 // loop_header
    %s112 = sphi 0, %s116
    %p113 = scmp.ge.s32.totalorder %s112, 2
    %v117 = vphi 0.0, %v279
    %v118 = vphi 0.0, %v273
    %v119 = vphi 0.0, %v303
    %v120 = vphi 0.0, %v297
  $region24: #{esim_forward.9} parent=0 // loop_header_branch
    %115 = sbr.rel (%p113) target = $region28
  $region25: #{esim_forward.9} parent=0 // loop_body
    %s121 = ssub.s32 1, %s112
    %s122 = smul.u32 %s112, 8
    %s123 = scalar_lea.vmem [#allocation2], %s122
    %v124 = vld [vmem:[%s123] sm:$0xff]
    %v125 = vpack.c.bf16 %v117, %v117
    %v126 = vld [vmem:[%s2] sm:$0xf]
    %v127 = vld [vmem:[%s2 + $0x4] sm:$0xf]
    %v128 = vld [vmem:[%s2 + $0x8] sm:$0xf]
    %v129 = vld [vmem:[%s2 + $0xc] sm:$0xf]
    %131 = vrot.lane.b32.xlu0 %v125, 32
    %v132 = vpop.permute.xlu0 %131
    %v137 = vunpack.c.l.b16 %v126
    %v138 = vunpack.c.l.b16 %v127
    %v139 = vunpack.c.l.b16 %v128
    %v140 = vunpack.c.l.b16 %v129
    %v141 = vpack.c.b16 %v138, %v137
    %v142 = vpack.c.b16 %v140, %v139
    %v146 = vsel %vm60, %v132, 0
    %148 = vmatprep.subr.bf16.mxu0 0
    %149 = vmatpush1.bf16.msra.mxu0 %v141
    %150 = vmatprep.subr.bf16.mxu0 0
    %151 = vmatpush1.bf16.msra.mxu0 %v142
    %152 = vmatprep.subr.bf16.mxu0 0
    %153 = vmatpush1.bf16.msra.mxu0 0
    %154 = vmatprep.subr.bf16.mxu0 0
    %155 = vmatpush1.bf16.msra.mxu0 0
    %156 = vmatprep.subr.bf16.mxu0 0
    %157 = vmatpush1.bf16.msra.mxu0 0
    %158 = vmatprep.subr.bf16.mxu0 0
    %159 = vmatpush1.bf16.msra.mxu0 0
    %160 = vmatprep.subr.bf16.mxu0 0
    %161 = vmatpush1.bf16.msra.mxu0 0
    %162 = vmatprep.subr.bf16.mxu0 0
    %163 = vmatpush1.bf16.msra.mxu0 0
    %164 = vmatprep.subr.bf16.mxu0 0
    %165 = vmatpush1.bf16.msra.mxu0 0
    %166 = vmatprep.subr.bf16.mxu0 0
    %167 = vmatpush1.bf16.msra.mxu0 0
    %168 = vmatprep.subr.bf16.mxu0 0
    %169 = vmatpush1.bf16.msra.mxu0 0
    %170 = vmatprep.subr.bf16.mxu0 0
    %171 = vmatpush1.bf16.msra.mxu0 0
    %172 = vmatprep.subr.bf16.mxu0 0
    %173 = vmatpush1.bf16.msra.mxu0 0
    %174 = vmatprep.subr.bf16.mxu0 0
    %175 = vmatpush1.bf16.msra.mxu0 0
    %176 = vmatprep.subr.bf16.mxu0 0
    %177 = vmatpush1.bf16.msra.mxu0 0
    %178 = vmatprep.subr.bf16.mxu0 0
    %179 = vmatpush1.bf16.msra.mxu0 0
    %180 = vmatprep.mubr.bf16.mxu0 0
    %181 = vmatmul.mubr.bf16.gmra.mrb[0].mxu0 %v146
    %v182 = vpop.f32.mrb[0].mxu0
    %v183 = vadd.f32 0.0, %v182
    %v184 = vpop.f32.mrb[0].mxu0
    %v185 = vpop.f32.mrb[0].mxu0
    %v186 = vpop.f32.mrb[0].mxu0
    %187 = vdwg.mxu0
    %v188 = vadd.f32 %v124, %v183
    %s189 = smul.u32 %s121, 8
    %s190 = scalar_lea.vmem [#allocation3], %s189
    %v191 = vld [vmem:[%s190] sm:$0xff]
    %v192 = vpack.c.bf16 %v119, %v119
    %v193 = vld [vmem:[%s3] sm:$0xf]
    %v194 = vld [vmem:[%s3 + $0x4] sm:$0xf]
    %v195 = vld [vmem:[%s3 + $0x8] sm:$0xf]
    %v196 = vld [vmem:[%s3 + $0xc] sm:$0xf]
    %198 = vrot.lane.b32.xlu0 %v192, 32
    %v199 = vpop.permute.xlu0 %198
    %v204 = vunpack.c.l.b16 %v193
    %v205 = vunpack.c.l.b16 %v194
    %v206 = vunpack.c.l.b16 %v195
    %v207 = vunpack.c.l.b16 %v196
    %v208 = vpack.c.b16 %v205, %v204
    %v209 = vpack.c.b16 %v207, %v206
    %v213 = vsel %vm60, %v199, 0
    %215 = vmatprep.subr.bf16.mxu0 0
    %216 = vmatpush1.bf16.msra.mxu0 %v208
    %217 = vmatprep.subr.bf16.mxu0 0
    %218 = vmatpush1.bf16.msra.mxu0 %v209
    %219 = vmatprep.subr.bf16.mxu0 0
    %220 = vmatpush1.bf16.msra.mxu0 0
    %221 = vmatprep.subr.bf16.mxu0 0
    %222 = vmatpush1.bf16.msra.mxu0 0
    %223 = vmatprep.subr.bf16.mxu0 0
    %224 = vmatpush1.bf16.msra.mxu0 0
    %225 = vmatprep.subr.bf16.mxu0 0
    %226 = vmatpush1.bf16.msra.mxu0 0
    %227 = vmatprep.subr.bf16.mxu0 0
    %228 = vmatpush1.bf16.msra.mxu0 0
    %229 = vmatprep.subr.bf16.mxu0 0
    %230 = vmatpush1.bf16.msra.mxu0 0
    %231 = vmatprep.subr.bf16.mxu0 0
    %232 = vmatpush1.bf16.msra.mxu0 0
    %233 = vmatprep.subr.bf16.mxu0 0
    %234 = vmatpush1.bf16.msra.mxu0 0
    %235 = vmatprep.subr.bf16.mxu0 0
    %236 = vmatpush1.bf16.msra.mxu0 0
    %237 = vmatprep.subr.bf16.mxu0 0
    %238 = vmatpush1.bf16.msra.mxu0 0
    %239 = vmatprep.subr.bf16.mxu0 0
    %240 = vmatpush1.bf16.msra.mxu0 0
    %241 = vmatprep.subr.bf16.mxu0 0
    %242 = vmatpush1.bf16.msra.mxu0 0
    %243 = vmatprep.subr.bf16.mxu0 0
    %244 = vmatpush1.bf16.msra.mxu0 0
    %245 = vmatprep.subr.bf16.mxu0 0
    %246 = vmatpush1.bf16.msra.mxu0 0
    %247 = vmatprep.mubr.bf16.mxu0 0
    %248 = vmatmul.mubr.bf16.gmra.mrb[0].mxu0 %v213
    %v249 = vpop.f32.mrb[0].mxu0
    %v250 = vadd.f32 0.0, %v249
    %v251 = vpop.f32.mrb[0].mxu0
    %v252 = vpop.f32.mrb[0].mxu0
    %v253 = vpop.f32.mrb[0].mxu0
    %254 = vdwg.mxu0
    %v255 = vadd.f32 %v191, %v250
    %v256 = vxor.u32 %v188, 2147483648
    %v257 = vmul.f32 %v256, 1.442695
    %v258 = vpow.pop %v257
    %v259 = vadd.f32 %v258, 1.0
    %v260 = vrcp.pop %v259
    %v261 = vmul.f32 1.0, %v260
    %v262 = vtanh.pop %v188
    %v263 = vmul.f32 %v261, %v118
    %265 = vrot.lane.b32.xlu0 %v262, 64
    %v266 = vpop.permute.xlu0 %265
    %v268 = vmul.f32 %v261, %v266
    %270 = vrot.lane.b32.xlu0 %v268, 32
    %v271 = vpop.permute.xlu0 %270
    %v273 = vadd.f32 %v263, %v271
    %v274 = vtanh.pop %v273
    %276 = vrot.lane.b32.xlu0 %v274, 64
    %v277 = vpop.permute.xlu0 %276
    %v279 = vmul.f32 %v261, %v277
    %v280 = vxor.u32 %v255, 2147483648
    %v281 = vmul.f32 %v280, 1.442695
    %v282 = vpow.pop %v281
    %v283 = vadd.f32 %v282, 1.0
    %v284 = vrcp.pop %v283
    %v285 = vmul.f32 1.0, %v284
    %v286 = vtanh.pop %v255
    %v287 = vmul.f32 %v285, %v120
    %289 = vrot.lane.b32.xlu0 %v286, 64
    %v290 = vpop.permute.xlu0 %289
    %v292 = vmul.f32 %v285, %v290
    %294 = vrot.lane.b32.xlu0 %v292, 32
    %v295 = vpop.permute.xlu0 %294
    %v297 = vadd.f32 %v287, %v295
    %v298 = vtanh.pop %v297
    %300 = vrot.lane.b32.xlu0 %v298, 64
    %v301 = vpop.permute.xlu0 %300
    %v303 = vmul.f32 %v285, %v301
    %305 = vrot.lane.b32.xlu0 %v279, 32
    %v306 = vpop.permute.xlu0 %305
    %s308 = scalar_lea.vmem %s5, %s122
    %309 = vst.msk [vmem:[%s308] sm:$0xff] %vm60, %v306
    %311 = vrot.lane.b32.xlu0 %v303, 64
    %v312 = vpop.permute.xlu0 %311
    %s314 = scalar_lea.vmem %s5, %s189
    %vm315 = vcmask 523520
    %316 = vst.msk [vmem:[%s314] sm:$0xff] %vm315, %v312
  $region26: #{esim_forward.9} parent=0 // loop_footer
    %s116 = sadd.s32 1, %s112
  $region27: #{esim_forward.9} parent=0 // loop_footer_branch
    %111 = sbr.rel target = $region23
  $region28: #{esim_forward.9} parent=0 // loop_exit
    _
  // Predicated region
  $region29: #{esim_forward.9} parent=0 // pred_check
    _
  $region30: #{esim_forward.9} parent=0 // pred_check_branch
    %318 = sbr.rel (0) target = $region32
  $region31: #{esim_forward.9} parent=0 // pred_region
    _
  $region32: #{esim_forward.9} parent=0 // pred_fallthru
    _
  // Predicated region
  $region33: #{esim_forward.9} parent=0 // pred_check
    _
  $region34: #{esim_forward.9} parent=0 // pred_check_branch
    %320 = sbr.rel (0) target = $region36
  $region35: #{esim_forward.9} parent=0 // pred_region
    _
  $region36: #{esim_forward.9} parent=0 // pred_fallthru
    _

// kernel: esim_forward.11
$region0: #{esim_forward.11}
  #allocation0 [shape = 'u32[]', space=smem, size = 0x4, offset = 0x4, fixed_abs, tag = 'smem constant byte address 0x4 - core index']
  #allocation1 [shape = 'u32[144,128]{1,0:T(1,128)}', space=vmem, size = 0x12000, scoped, tag = 'internal scratch']
  %s0 = inlined_call_operand.vmem [shape: f32[2,8,64], index: 0, kind: input, shape index: {}]
  %s1 = inlined_call_operand.vmem [shape: f32[2,8,64], index: 1, kind: input, shape index: {}]
  %s2 = inlined_call_operand.vmem [shape: f32[2,8], index: 2, kind: input, shape index: {}]
  %s3 = inlined_call_operand.vmem [shape: f32[2,8], index: 3, kind: input, shape index: {}]
  %s4 = inlined_call_operand.vmem [shape: bf16[64,32], index: 4, kind: input, shape index: {}]
  %s5 = inlined_call_operand.vmem [shape: bf16[64,32], index: 5, kind: input, shape index: {}]
  %s6 = inlined_call_operand.vmem [shape: bf16[64,32], index: 6, kind: input, shape index: {}]
  %s7 = inlined_call_operand.vmem [shape: bf16[64,32], index: 7, kind: input, shape index: {}]
  %s8 = inlined_call_operand.vmem [shape: f32[1,32], index: 8, kind: input, shape index: {}]
  %s9 = inlined_call_operand.vmem [shape: bf16[32,2], index: 9, kind: input, shape index: {}]
  %s10 = inlined_call_operand.vmem [shape: f32[1,2], index: 10, kind: input, shape index: {}]
  %s11 = inlined_call_operand.hbm [shape: f32[2,2], index: 11, kind: output, shape index: {0}]
  %s12 = inlined_call_operand.hbm [shape: f32[2,2], index: 12, kind: output, shape index: {1}]
  %13 = xla_tuple %s11, %s12
  %s14 = sld [smem:[#allocation0]]
  $region62: #{esim_forward.11} parent=0
    _
  %s16 = ssub.s32 1, %s14
  %s17 = scalar_select 0, %s16, %s14
  $region1: #{esim_forward.11} parent=0
    #allocation2 [shape = 'u8[1024]{0}', space=vmem, size = 0x400, scoped, tag = 'output window, operand 0, single buffered']
    #allocation3 [shape = 's32[1]{0}', space=sflag, size = 0x4, scoped, tag = 'scoped memory for esim_forward.11']
    #allocation4 [shape = 'u8[1024]{0}', space=vmem, size = 0x400, scoped, tag = 'output window, operand 1, single buffered']
    #allocation5 [shape = 's32[1]{0}', space=sflag, size = 0x4, scoped, tag = 'scoped memory for esim_forward.11']
    %18 = vsyncpa [#allocation3], 0
    %19 = vsyncpa [#allocation5], 0
    // Predicated region
    $region2: #{esim_forward.11} parent=1 // pred_check
      _
    $region3: #{esim_forward.11} parent=1 // pred_check_branch
      %21 = sbr.rel (0) target = $region5
    $region4: #{esim_forward.11} parent=1 // pred_region
      _
    $region5: #{esim_forward.11} parent=1 // pred_fallthru
      _
    // Predicated region
    $region6: #{esim_forward.11} parent=1 // pred_check
      _
    $region7: #{esim_forward.11} parent=1 // pred_check_branch
      %23 = sbr.rel (0) target = $region9
    $region8: #{esim_forward.11} parent=1 // pred_region
      _
    $region9: #{esim_forward.11} parent=1 // pred_fallthru
      _
    // Predicated region
    $region10: #{esim_forward.11} parent=1 // pred_check
      _
    $region11: #{esim_forward.11} parent=1 // pred_check_branch
      %25 = sbr.rel (0) target = $region13
    $region12: #{esim_forward.11} parent=1 // pred_region
      _
    $region13: #{esim_forward.11} parent=1 // pred_fallthru
      _
    // Predicated region
    $region14: #{esim_forward.11} parent=1 // pred_check
      _
    $region15: #{esim_forward.11} parent=1 // pred_check_branch
      %27 = sbr.rel (0) target = $region17
    $region16: #{esim_forward.11} parent=1 // pred_region
      _
    $region17: #{esim_forward.11} parent=1 // pred_fallthru
      _
    // Predicated region
    $region18: #{esim_forward.11} parent=1 // pred_check
      _
    $region19: #{esim_forward.11} parent=1 // pred_check_branch
      %29 = sbr.rel (0) target = $region21
    $region20: #{esim_forward.11} parent=1 // pred_region
      _
    $region21: #{esim_forward.11} parent=1 // pred_fallthru
      _
    // Predicated region
    $region22: #{esim_forward.11} parent=1 // pred_check
      _
    $region23: #{esim_forward.11} parent=1 // pred_check_branch
      %31 = sbr.rel (0) target = $region25
    $region24: #{esim_forward.11} parent=1 // pred_region
      _
    $region25: #{esim_forward.11} parent=1 // pred_fallthru
      _
    // Predicated region
    $region26: #{esim_forward.11} parent=1 // pred_check
      _
    $region27: #{esim_forward.11} parent=1 // pred_check_branch
      %33 = sbr.rel (0) target = $region29
    $region28: #{esim_forward.11} parent=1 // pred_region
      _
    $region29: #{esim_forward.11} parent=1 // pred_fallthru
      _
    // Predicated region
    $region30: #{esim_forward.11} parent=1 // pred_check
      _
    $region31: #{esim_forward.11} parent=1 // pred_check_branch
      %35 = sbr.rel (0) target = $region33
    $region32: #{esim_forward.11} parent=1 // pred_region
      _
    $region33: #{esim_forward.11} parent=1 // pred_fallthru
      _
    // Predicated region
    $region34: #{esim_forward.11} parent=1 // pred_check
      _
    $region35: #{esim_forward.11} parent=1 // pred_check_branch
      %37 = sbr.rel (0) target = $region37
    $region36: #{esim_forward.11} parent=1 // pred_region
      _
    $region37: #{esim_forward.11} parent=1 // pred_fallthru
      _
    // Predicated region
    $region38: #{esim_forward.11} parent=1 // pred_check
      _
    $region39: #{esim_forward.11} parent=1 // pred_check_branch
      %39 = sbr.rel (0) target = $region41
    $region40: #{esim_forward.11} parent=1 // pred_region
      _
    $region41: #{esim_forward.11} parent=1 // pred_fallthru
      _
    // Predicated region
    $region42: #{esim_forward.11} parent=1 // pred_check
      _
    $region43: #{esim_forward.11} parent=1 // pred_check_branch
      %41 = sbr.rel (0) target = $region45
    $region44: #{esim_forward.11} parent=1 // pred_region
      _
    $region45: #{esim_forward.11} parent=1 // pred_fallthru
      _
    %v43 = vld [vmem:[%s0] sm:$0xff]
    %v44 = vld [vmem:[%s0 + $0x8] sm:$0xff]
    %v45 = vld [vmem:[%s1] sm:$0xff]
    %v46 = vld [vmem:[%s1 + $0x8] sm:$0xff]
    %v47 = vld [vmem:[%s2] sm:$0x3]
    %v48 = vld [vmem:[%s3] sm:$0x3]
    %v49 = vlaneseq
    %v50 = vshrl.u32 %v49, 7
    %v51 = vsub.s32 0, %v50
    %v52 = vrot.slane %v47, %v51
    %54 = vbcast.lane.b32.xlu0 %v52, 256
    %v55 = vpop.permute.xlu0 %54
    %v56 = vlaneseq
    %v57 = vshrl.u32 %v56, 7
    %v58 = vsub.s32 1, %v57
    %v59 = vrot.slane %v47, %v58
    %61 = vbcast.lane.b32.xlu0 %v59, 256
    %v62 = vpop.permute.xlu0 %61
    %v63 = vmul.f32 %v43, %v55
    %v64 = vmul.f32 %v44, %v62
    %vm65 = vcmask 523264
    %v66 = vsel %vm65, %v63, 0.0
    %v67 = vrot.slane %v66, 4
    %v68 = vadd.f32 %v66, %v67
    %v69 = vrot.slane %v68, 2
    %v70 = vadd.f32 %v68, %v69
    %v71 = vrot.slane %v70, 1
    %v72 = vadd.f32 %v70, %v71
    %v73 = vsel %vm65, %v64, 0.0
    %v74 = vrot.slane %v73, 4
    %v75 = vadd.f32 %v73, %v74
    %v76 = vrot.slane %v75, 2
    %v77 = vadd.f32 %v75, %v76
    %v78 = vrot.slane %v77, 1
    %v79 = vadd.f32 %v77, %v78
    %vm80 = vcmask 58368
    %v81 = vsel %vm80, %v47, 0.0
    %82 = vadd.xlane.f32.xlu0 %v81
    %v83 = vpop.xlane.xlu0 %82
    %v84 = vrcp.pop %v83
    %v86 = vrot.slane %v84, 1
    %v89 = vmul.f32 %v72, %v84
    %v90 = vmul.f32 %v79, %v86
    %v91 = vlaneseq
    %v92 = vshrl.u32 %v91, 7
    %v93 = vsub.s32 0, %v92
    %v94 = vrot.slane %v48, %v93
    %96 = vbcast.lane.b32.xlu0 %v94, 256
    %v97 = vpop.permute.xlu0 %96
    %v98 = vlaneseq
    %v99 = vshrl.u32 %v98, 7
    %v100 = vsub.s32 1, %v99
    %v101 = vrot.slane %v48, %v100
    %103 = vbcast.lane.b32.xlu0 %v101, 256
    %v104 = vpop.permute.xlu0 %103
    %v105 = vmul.f32 %v45, %v97
    %v106 = vmul.f32 %v46, %v104
    %v107 = vsel %vm65, %v105, 0.0
    %v108 = vrot.slane %v107, 4
    %v109 = vadd.f32 %v107, %v108
    %v110 = vrot.slane %v109, 2
    %v111 = vadd.f32 %v109, %v110
    %v112 = vrot.slane %v111, 1
    %v113 = vadd.f32 %v111, %v112
    %v114 = vsel %vm65, %v106, 0.0
    %v115 = vrot.slane %v114, 4
    %v116 = vadd.f32 %v114, %v115
    %v117 = vrot.slane %v116, 2
    %v118 = vadd.f32 %v116, %v117
    %v119 = vrot.slane %v118, 1
    %v120 = vadd.f32 %v118, %v119
    %v121 = vsel %vm80, %v48, 0.0
    %122 = vadd.xlane.f32.xlu0 %v121
    %v123 = vpop.xlane.xlu0 %122
    %v124 = vrcp.pop %v123
    %v126 = vrot.slane %v124, 1
    %v129 = vmul.f32 %v113, %v124
    %v130 = vmul.f32 %v120, %v126
    %v131 = vsel %vm65, %v43, -inf
    %v132 = vrot.slane %v131, 4
    %v133 = vmax.f32 %v131, %v132
    %v134 = vrot.slane %v133, 2
    %v135 = vmax.f32 %v133, %v134
    %v136 = vrot.slane %v135, 1
    %v137 = vmax.f32 %v135, %v136
    %v138 = vsel %vm65, %v44, -inf
    %v139 = vrot.slane %v138, 4
    %v140 = vmax.f32 %v138, %v139
    %v141 = vrot.slane %v140, 2
    %v142 = vmax.f32 %v140, %v141
    %v143 = vrot.slane %v142, 1
    %v144 = vmax.f32 %v142, %v143
    %v145 = vsel %vm65, %v45, -inf
    %v146 = vrot.slane %v145, 4
    %v147 = vmax.f32 %v145, %v146
    %v148 = vrot.slane %v147, 2
    %v149 = vmax.f32 %v147, %v148
    %v150 = vrot.slane %v149, 1
    %v151 = vmax.f32 %v149, %v150
    %v152 = vsel %vm65, %v46, -inf
    %v153 = vrot.slane %v152, 4
    %v154 = vmax.f32 %v152, %v153
    %v155 = vrot.slane %v154, 2
    %v156 = vmax.f32 %v154, %v155
    %v157 = vrot.slane %v156, 1
    %v158 = vmax.f32 %v156, %v157
    %v159 = vpack.c.bf16 %v89, %v89
    %v160 = vpack.c.bf16 %v90, %v90
    %v161 = vld [vmem:[%s4] sm:$0xf]
    %v162 = vld [vmem:[%s4 + $0x4] sm:$0xf]
    %v163 = vld [vmem:[%s4 + $0x8] sm:$0xf]
    %v164 = vld [vmem:[%s4 + $0xc] sm:$0xf]
    %v165 = vld [vmem:[%s4 + $0x10] sm:$0xf]
    %v166 = vld [vmem:[%s4 + $0x14] sm:$0xf]
    %v167 = vld [vmem:[%s4 + $0x18] sm:$0xf]
    %v168 = vld [vmem:[%s4 + $0x1c] sm:$0xf]
    %v169 = vpack.c.bf16 %v137, %v137
    %v170 = vpack.c.bf16 %v144, %v144
    %v171 = vld [vmem:[%s5] sm:$0xf]
    %v172 = vld [vmem:[%s5 + $0x4] sm:$0xf]
    %v173 = vld [vmem:[%s5 + $0x8] sm:$0xf]
    %v174 = vld [vmem:[%s5 + $0xc] sm:$0xf]
    %v175 = vld [vmem:[%s5 + $0x10] sm:$0xf]
    %v176 = vld [vmem:[%s5 + $0x14] sm:$0xf]
    %v177 = vld [vmem:[%s5 + $0x18] sm:$0xf]
    %v178 = vld [vmem:[%s5 + $0x1c] sm:$0xf]
    %v181 = vunpack.c.l.b16 %v169
    %v182 = vunpack.c.l.b16 %v170
    %vm183 = vcmask 1041409
    %v184 = vsel %vm183, %v182, %v181
    %v185 = vpack.c.b16 %v184, %v184
    %v194 = vunpack.c.l.b16 %v171
    %v195 = vunpack.c.l.b16 %v172
    %v196 = vunpack.c.l.b16 %v173
    %v197 = vunpack.c.l.b16 %v174
    %v198 = vunpack.c.l.b16 %v175
    %v199 = vunpack.c.l.b16 %v176
    %v200 = vunpack.c.l.b16 %v177
    %v201 = vunpack.c.l.b16 %v178
    %v202 = vpack.c.b16 %v195, %v194
    %v203 = vpack.c.b16 %v197, %v196
    %v204 = vpack.c.b16 %v199, %v198
    %v205 = vpack.c.b16 %v201, %v200
    %v211 = vsel %vm65, %v185, 0
    %213 = vmatprep.subr.bf16.mxu0 0
    %214 = vmatpush1.bf16.msra.mxu0 %v202
    %215 = vmatprep.subr.bf16.mxu0 0
    %216 = vmatpush1.bf16.msra.mxu0 %v203
    %217 = vmatprep.subr.bf16.mxu0 0
    %218 = vmatpush1.bf16.msra.mxu0 %v204
    %219 = vmatprep.subr.bf16.mxu0 0
    %220 = vmatpush1.bf16.msra.mxu0 %v205
    %221 = vmatprep.subr.bf16.mxu0 0
    %222 = vmatpush1.bf16.msra.mxu0 0
    %223 = vmatprep.subr.bf16.mxu0 0
    %224 = vmatpush1.bf16.msra.mxu0 0
    %225 = vmatprep.subr.bf16.mxu0 0
    %226 = vmatpush1.bf16.msra.mxu0 0
    %227 = vmatprep.subr.bf16.mxu0 0
    %228 = vmatpush1.bf16.msra.mxu0 0
    %229 = vmatprep.subr.bf16.mxu0 0
    %230 = vmatpush1.bf16.msra.mxu0 0
    %231 = vmatprep.subr.bf16.mxu0 0
    %232 = vmatpush1.bf16.msra.mxu0 0
    %233 = vmatprep.subr.bf16.mxu0 0
    %234 = vmatpush1.bf16.msra.mxu0 0
    %235 = vmatprep.subr.bf16.mxu0 0
    %236 = vmatpush1.bf16.msra.mxu0 0
    %237 = vmatprep.subr.bf16.mxu0 0
    %238 = vmatpush1.bf16.msra.mxu0 0
    %239 = vmatprep.subr.bf16.mxu0 0
    %240 = vmatpush1.bf16.msra.mxu0 0
    %241 = vmatprep.subr.bf16.mxu0 0
    %242 = vmatpush1.bf16.msra.mxu0 0
    %243 = vmatprep.subr.bf16.mxu0 0
    %244 = vmatpush1.bf16.msra.mxu0 0
    %245 = vmatprep.mubr.bf16.mxu0 0
    %246 = vmatmul.mubr.bf16.gmra.mrb[0].mxu0 %v211
    %v247 = vpop.f32.mrb[0].mxu0
    %v248 = vadd.f32 0.0, %v247
    %v249 = vpop.f32.mrb[0].mxu0
    %v250 = vpop.f32.mrb[0].mxu0
    %v251 = vpop.f32.mrb[0].mxu0
    %252 = vdwg.mxu0
    %v255 = vunpack.c.l.b16 %v159
    %v256 = vunpack.c.l.b16 %v160
    %v257 = vrot.slane %v256, 7
    %v258 = vsel %vm183, %v257, %v255
    %v259 = vpack.c.b16 %v258, %v258
    %v268 = vunpack.c.l.b16 %v161
    %v269 = vunpack.c.l.b16 %v162
    %v270 = vunpack.c.l.b16 %v163
    %v271 = vunpack.c.l.b16 %v164
    %v272 = vunpack.c.l.b16 %v165
    %v273 = vunpack.c.l.b16 %v166
    %v274 = vunpack.c.l.b16 %v167
    %v275 = vunpack.c.l.b16 %v168
    %v276 = vpack.c.b16 %v269, %v268
    %v277 = vpack.c.b16 %v271, %v270
    %v278 = vpack.c.b16 %v273, %v272
    %v279 = vpack.c.b16 %v275, %v274
    %v285 = vsel %vm65, %v259, 0
    %287 = vmatprep.subr.bf16.mxu0 0
    %288 = vmatpush1.bf16.msra.mxu0 %v276
    %289 = vmatprep.subr.bf16.mxu0 0
    %290 = vmatpush1.bf16.msra.mxu0 %v277
    %291 = vmatprep.subr.bf16.mxu0 0
    %292 = vmatpush1.bf16.msra.mxu0 %v278
    %293 = vmatprep.subr.bf16.mxu0 0
    %294 = vmatpush1.bf16.msra.mxu0 %v279
    %295 = vmatprep.subr.bf16.mxu0 0
    %296 = vmatpush1.bf16.msra.mxu0 0
    %297 = vmatprep.subr.bf16.mxu0 0
    %298 = vmatpush1.bf16.msra.mxu0 0
    %299 = vmatprep.subr.bf16.mxu0 0
    %300 = vmatpush1.bf16.msra.mxu0 0
    %301 = vmatprep.subr.bf16.mxu0 0
    %302 = vmatpush1.bf16.msra.mxu0 0
    %303 = vmatprep.subr.bf16.mxu0 0
    %304 = vmatpush1.bf16.msra.mxu0 0
    %305 = vmatprep.subr.bf16.mxu0 0
    %306 = vmatpush1.bf16.msra.mxu0 0
    %307 = vmatprep.subr.bf16.mxu0 0
    %308 = vmatpush1.bf16.msra.mxu0 0
    %309 = vmatprep.subr.bf16.mxu0 0
    %310 = vmatpush1.bf16.msra.mxu0 0
    %311 = vmatprep.subr.bf16.mxu0 0
    %312 = vmatpush1.bf16.msra.mxu0 0
    %313 = vmatprep.subr.bf16.mxu0 0
    %314 = vmatpush1.bf16.msra.mxu0 0
    %315 = vmatprep.subr.bf16.mxu0 0
    %316 = vmatpush1.bf16.msra.mxu0 0
    %317 = vmatprep.subr.bf16.mxu0 0
    %318 = vmatpush1.bf16.msra.mxu0 0
    %319 = vmatprep.mubr.bf16.mxu0 0
    %320 = vmatmul.mubr.bf16.gmra.mrb[0].mxu0 %v285
    %v321 = vpop.f32.mrb[0].mxu0
    %v322 = vadd.f32 %v248, %v321
    %v323 = vpop.f32.mrb[0].mxu0
    %v324 = vpop.f32.mrb[0].mxu0
    %v325 = vpop.f32.mrb[0].mxu0
    %326 = vdwg.mxu0
    %v327 = vpack.c.bf16 %v129, %v129
    %v328 = vpack.c.bf16 %v130, %v130
    %v329 = vld [vmem:[%s6] sm:$0xf]
    %v330 = vld [vmem:[%s6 + $0x4] sm:$0xf]
    %v331 = vld [vmem:[%s6 + $0x8] sm:$0xf]
    %v332 = vld [vmem:[%s6 + $0xc] sm:$0xf]
    %v333 = vld [vmem:[%s6 + $0x10] sm:$0xf]
    %v334 = vld [vmem:[%s6 + $0x14] sm:$0xf]
    %v335 = vld [vmem:[%s6 + $0x18] sm:$0xf]
    %v336 = vld [vmem:[%s6 + $0x1c] sm:$0xf]
    %v339 = vunpack.c.l.b16 %v327
    %v340 = vunpack.c.l.b16 %v328
    %v341 = vrot.slane %v340, 7
    %v342 = vsel %vm183, %v341, %v339
    %v343 = vpack.c.b16 %v342, %v342
    %v352 = vunpack.c.l.b16 %v329
    %v353 = vunpack.c.l.b16 %v330
    %v354 = vunpack.c.l.b16 %v331
    %v355 = vunpack.c.l.b16 %v332
    %v356 = vunpack.c.l.b16 %v333
    %v357 = vunpack.c.l.b16 %v334
    %v358 = vunpack.c.l.b16 %v335
    %v359 = vunpack.c.l.b16 %v336
    %v360 = vpack.c.b16 %v353, %v352
    %v361 = vpack.c.b16 %v355, %v354
    %v362 = vpack.c.b16 %v357, %v356
    %v363 = vpack.c.b16 %v359, %v358
    %v369 = vsel %vm65, %v343, 0
    %371 = vmatprep.subr.bf16.mxu0 0
    %372 = vmatpush1.bf16.msra.mxu0 %v360
    %373 = vmatprep.subr.bf16.mxu0 0
    %374 = vmatpush1.bf16.msra.mxu0 %v361
    %375 = vmatprep.subr.bf16.mxu0 0
    %376 = vmatpush1.bf16.msra.mxu0 %v362
    %377 = vmatprep.subr.bf16.mxu0 0
    %378 = vmatpush1.bf16.msra.mxu0 %v363
    %379 = vmatprep.subr.bf16.mxu0 0
    %380 = vmatpush1.bf16.msra.mxu0 0
    %381 = vmatprep.subr.bf16.mxu0 0
    %382 = vmatpush1.bf16.msra.mxu0 0
    %383 = vmatprep.subr.bf16.mxu0 0
    %384 = vmatpush1.bf16.msra.mxu0 0
    %385 = vmatprep.subr.bf16.mxu0 0
    %386 = vmatpush1.bf16.msra.mxu0 0
    %387 = vmatprep.subr.bf16.mxu0 0
    %388 = vmatpush1.bf16.msra.mxu0 0
    %389 = vmatprep.subr.bf16.mxu0 0
    %390 = vmatpush1.bf16.msra.mxu0 0
    %391 = vmatprep.subr.bf16.mxu0 0
    %392 = vmatpush1.bf16.msra.mxu0 0
    %393 = vmatprep.subr.bf16.mxu0 0
    %394 = vmatpush1.bf16.msra.mxu0 0
    %395 = vmatprep.subr.bf16.mxu0 0
    %396 = vmatpush1.bf16.msra.mxu0 0
    %397 = vmatprep.subr.bf16.mxu0 0
    %398 = vmatpush1.bf16.msra.mxu0 0
    %399 = vmatprep.subr.bf16.mxu0 0
    %400 = vmatpush1.bf16.msra.mxu0 0
    %401 = vmatprep.subr.bf16.mxu0 0
    %402 = vmatpush1.bf16.msra.mxu0 0
    %403 = vmatprep.mubr.bf16.mxu0 0
    %404 = vmatmul.mubr.bf16.gmra.mrb[0].mxu0 %v369
    %v405 = vpop.f32.mrb[0].mxu0
    %v406 = vadd.f32 0.0, %v405
    %v407 = vpop.f32.mrb[0].mxu0
    %v408 = vpop.f32.mrb[0].mxu0
    %v409 = vpop.f32.mrb[0].mxu0
    %410 = vdwg.mxu0
    %v411 = vadd.f32 %v322, %v406
    %v412 = vpack.c.bf16 %v151, %v151
    %v413 = vpack.c.bf16 %v158, %v158
    %v414 = vld [vmem:[%s7] sm:$0xf]
    %v415 = vld [vmem:[%s7 + $0x4] sm:$0xf]
    %v416 = vld [vmem:[%s7 + $0x8] sm:$0xf]
    %v417 = vld [vmem:[%s7 + $0xc] sm:$0xf]
    %v418 = vld [vmem:[%s7 + $0x10] sm:$0xf]
    %v419 = vld [vmem:[%s7 + $0x14] sm:$0xf]
    %v420 = vld [vmem:[%s7 + $0x18] sm:$0xf]
    %v421 = vld [vmem:[%s7 + $0x1c] sm:$0xf]
    %v424 = vunpack.c.l.b16 %v412
    %v425 = vunpack.c.l.b16 %v413
    %v426 = vsel %vm183, %v425, %v424
    %v427 = vpack.c.b16 %v426, %v426
    %v436 = vunpack.c.l.b16 %v414
    %v437 = vunpack.c.l.b16 %v415
    %v438 = vunpack.c.l.b16 %v416
    %v439 = vunpack.c.l.b16 %v417
    %v440 = vunpack.c.l.b16 %v418
    %v441 = vunpack.c.l.b16 %v419
    %v442 = vunpack.c.l.b16 %v420
    %v443 = vunpack.c.l.b16 %v421
    %v444 = vpack.c.b16 %v437, %v436
    %v445 = vpack.c.b16 %v439, %v438
    %v446 = vpack.c.b16 %v441, %v440
    %v447 = vpack.c.b16 %v443, %v442
    %v453 = vsel %vm65, %v427, 0
    %455 = vmatprep.subr.bf16.mxu0 0
    %456 = vmatpush1.bf16.msra.mxu0 %v444
    %457 = vmatprep.subr.bf16.mxu0 0
    %458 = vmatpush1.bf16.msra.mxu0 %v445
    %459 = vmatprep.subr.bf16.mxu0 0
    %460 = vmatpush1.bf16.msra.mxu0 %v446
    %461 = vmatprep.subr.bf16.mxu0 0
    %462 = vmatpush1.bf16.msra.mxu0 %v447
    %463 = vmatprep.subr.bf16.mxu0 0
    %464 = vmatpush1.bf16.msra.mxu0 0
    %465 = vmatprep.subr.bf16.mxu0 0
    %466 = vmatpush1.bf16.msra.mxu0 0
    %467 = vmatprep.subr.bf16.mxu0 0
    %468 = vmatpush1.bf16.msra.mxu0 0
    %469 = vmatprep.subr.bf16.mxu0 0
    %470 = vmatpush1.bf16.msra.mxu0 0
    %471 = vmatprep.subr.bf16.mxu0 0
    %472 = vmatpush1.bf16.msra.mxu0 0
    %473 = vmatprep.subr.bf16.mxu0 0
    %474 = vmatpush1.bf16.msra.mxu0 0
    %475 = vmatprep.subr.bf16.mxu0 0
    %476 = vmatpush1.bf16.msra.mxu0 0
    %477 = vmatprep.subr.bf16.mxu0 0
    %478 = vmatpush1.bf16.msra.mxu0 0
    %479 = vmatprep.subr.bf16.mxu0 0
    %480 = vmatpush1.bf16.msra.mxu0 0
    %481 = vmatprep.subr.bf16.mxu0 0
    %482 = vmatpush1.bf16.msra.mxu0 0
    %483 = vmatprep.subr.bf16.mxu0 0
    %484 = vmatpush1.bf16.msra.mxu0 0
    %485 = vmatprep.subr.bf16.mxu0 0
    %486 = vmatpush1.bf16.msra.mxu0 0
    %487 = vmatprep.mubr.bf16.mxu0 0
    %488 = vmatmul.mubr.bf16.gmra.mrb[0].mxu0 %v453
    %v489 = vpop.f32.mrb[0].mxu0
    %v490 = vadd.f32 0.0, %v489
    %v491 = vpop.f32.mrb[0].mxu0
    %v492 = vpop.f32.mrb[0].mxu0
    %v493 = vpop.f32.mrb[0].mxu0
    %494 = vdwg.mxu0
    %v495 = vadd.f32 %v411, %v490
    %v496 = vld [vmem:[%s8] sm:$0x1]
    %v498 = vlaneseq
    %v499 = vshrl.u32 %v498, 7
    %v500 = vsub.s32 0, %v499
    %v501 = vrot.slane %v496, %v500
    %v503 = vadd.f32 %v495, %v501
    %v504 = vtanh.pop %v503
    %v505 = vpack.c.bf16 %v504, %v504
    %v506 = vld [vmem:[%s9] sm:$0xf]
    %v507 = vld [vmem:[%s9 + $0x4] sm:$0xf]
    %v508 = vld [vmem:[%s9 + $0x8] sm:$0xf]
    %v509 = vld [vmem:[%s9 + $0xc] sm:$0xf]
    %v510 = vld [vmem:[%s10] sm:$0x1]
    %v512 = vlaneseq
    %v513 = vshrl.u32 %v512, 7
    %v514 = vsub.s32 0, %v513
    %v515 = vrot.slane %v510, %v514
    %v521 = vunpack.c.l.b16 %v506
    %v522 = vunpack.c.l.b16 %v507
    %v523 = vunpack.c.l.b16 %v508
    %v524 = vunpack.c.l.b16 %v509
    %v525 = vpack.c.b16 %v522, %v521
    %v526 = vpack.c.b16 %v524, %v523
    %vm529 = vcmask 261120
    %v531 = vsel %vm529, %v505, 0
    %533 = vmatprep.subr.bf16.mxu0 0
    %534 = vmatpush1.bf16.msra.mxu0 %v525
    %535 = vmatprep.subr.bf16.mxu0 0
    %536 = vmatpush1.bf16.msra.mxu0 %v526
    %537 = vmatprep.subr.bf16.mxu0 0
    %538 = vmatpush1.bf16.msra.mxu0 0
    %539 = vmatprep.subr.bf16.mxu0 0
    %540 = vmatpush1.bf16.msra.mxu0 0
    %541 = vmatprep.subr.bf16.mxu0 0
    %542 = vmatpush1.bf16.msra.mxu0 0
    %543 = vmatprep.subr.bf16.mxu0 0
    %544 = vmatpush1.bf16.msra.mxu0 0
    %545 = vmatprep.subr.bf16.mxu0 0
    %546 = vmatpush1.bf16.msra.mxu0 0
    %547 = vmatprep.subr.bf16.mxu0 0
    %548 = vmatpush1.bf16.msra.mxu0 0
    %549 = vmatprep.subr.bf16.mxu0 0
    %550 = vmatpush1.bf16.msra.mxu0 0
    %551 = vmatprep.subr.bf16.mxu0 0
    %552 = vmatpush1.bf16.msra.mxu0 0
    %553 = vmatprep.subr.bf16.mxu0 0
    %554 = vmatpush1.bf16.msra.mxu0 0
    %555 = vmatprep.subr.bf16.mxu0 0
    %556 = vmatpush1.bf16.msra.mxu0 0
    %557 = vmatprep.subr.bf16.mxu0 0
    %558 = vmatpush1.bf16.msra.mxu0 0
    %559 = vmatprep.subr.bf16.mxu0 0
    %560 = vmatpush1.bf16.msra.mxu0 0
    %561 = vmatprep.subr.bf16.mxu0 0
    %562 = vmatpush1.bf16.msra.mxu0 0
    %563 = vmatprep.subr.bf16.mxu0 0
    %564 = vmatpush1.bf16.msra.mxu0 0
    %565 = vmatprep.mubr.bf16.mxu0 0
    %566 = vmatmul.mubr.bf16.gmra.mrb[0].mxu0 %v531
    %v567 = vpop.f32.mrb[0].mxu0
    %v568 = vadd.f32 %v515, %v567
    %v569 = vpop.f32.mrb[0].mxu0
    %v570 = vpop.f32.mrb[0].mxu0
    %v571 = vpop.f32.mrb[0].mxu0
    %572 = vdwg.mxu0
    %vm573 = vcmask 9216
    %574 = vst.msk [vmem:[#allocation2] sm:$0x3] %vm573, %v568
    %v575 = vsel %vm573, %v568, -inf
    %576 = vmax.xlane.f32.xlu0 %v575
    %v577 = vpop.xlane.xlu0 %576
    %v578 = vsub.f32 %v568, %v577
    %v579 = vmul.f32 %v578, 1.442695
    %v580 = vpow.pop %v579
    %v581 = vsel %vm573, %v580, 0.0
    %582 = vadd.xlane.f32.xlu0 %v581
    %v583 = vpop.xlane.xlu0 %582
    %v584 = vrcp.pop %v583
    %v585 = vmul.f32 %v580, %v584
    %586 = vst.msk [vmem:[#allocation4] sm:$0x3] %vm573, %v585
    // Predicated region
    $region46: #{esim_forward.11} parent=1 // pred_check
      _
    $region47: #{esim_forward.11} parent=1 // pred_check_branch
      %588 = sbr.rel (0) target = $region49
    $region48: #{esim_forward.11} parent=1 // pred_region
      %s590 = ssub.s32 32, 32
      %591 = vsyncadd [#allocation3], %s590
      %s593 = sshll.u32 [#allocation2], 4
      %s594 = int_to_ptr.vmem [resolvable:$true] %s593
      %596 = dma.vmem_to_hbm [thread:$0]  %s594, 32, %s11, [#allocation3]
    $region49: #{esim_forward.11} parent=1 // pred_fallthru
      _
    // Predicated region
    $region50: #{esim_forward.11} parent=1 // pred_check
      _
    $region51: #{esim_forward.11} parent=1 // pred_check_branch
      %598 = sbr.rel (0) target = $region53
    $region52: #{esim_forward.11} parent=1 // pred_region
      %s600 = ssub.s32 32, 32
      %601 = vsyncadd [#allocation5], %s600
      %s603 = sshll.u32 [#allocation4], 4
      %s604 = int_to_ptr.vmem [resolvable:$true] %s603
      %606 = dma.vmem_to_hbm [thread:$0]  %s604, 32, %s12, [#allocation5]
    $region53: #{esim_forward.11} parent=1 // pred_fallthru
      _
    // Predicated region
    $region54: #{esim_forward.11} parent=1 // pred_check
      _
    $region55: #{esim_forward.11} parent=1 // pred_check_branch
      %608 = sbr.rel (0) target = $region57
    $region56: #{esim_forward.11} parent=1 // pred_region
      %609 = dma.done [#allocation3], 32
    $region57: #{esim_forward.11} parent=1 // pred_fallthru
      _
    // Predicated region
    $region58: #{esim_forward.11} parent=1 // pred_check
      _
    $region59: #{esim_forward.11} parent=1 // pred_check_branch
      %611 = sbr.rel (0) target = $region61
    $region60: #{esim_forward.11} parent=1 // pred_region
      %612 = dma.done [#allocation5], 32
    $region61: #{esim_forward.11} parent=1 // pred_fallthru
      _
    %613 = vsyncpa [#allocation3], 1
    %614 = vsyncpa [#allocation5], 1

// kernel: esim_forward.8
$region0: #{esim_forward.8}
  #allocation0 [shape = 'u32[]', space=smem, size = 0x4, offset = 0x4, fixed_abs, tag = 'smem constant byte address 0x4 - core index']
  #allocation1 [shape = 'u32[144,128]{1,0:T(1,128)}', space=vmem, size = 0x12000, scoped, tag = 'internal scratch']
  %s0 = inlined_call_operand.vmem [shape: f32[2,8,64], index: 0, kind: input, shape index: {}]
  %s1 = inlined_call_operand.vmem [shape: f32[2,8,64], index: 1, kind: input, shape index: {}]
  %s2 = inlined_call_operand.vmem [shape: f32[2,8,1], index: 2, kind: input, shape index: {}]
  %s3 = inlined_call_operand.vmem [shape: f32[2,8,1], index: 3, kind: input, shape index: {}]
  %s4 = inlined_call_operand.vmem [shape: f32[2,1,8], index: 4, kind: input, shape index: {}]
  %s5 = inlined_call_operand.vmem [shape: bf16[64,32], index: 5, kind: input, shape index: {}]
  %s6 = inlined_call_operand.vmem [shape: bf16[64,32], index: 6, kind: input, shape index: {}]
  %s7 = inlined_call_operand.vmem [shape: bf16[64,32], index: 7, kind: input, shape index: {}]
  %s8 = inlined_call_operand.vmem [shape: bf16[64,32], index: 8, kind: input, shape index: {}]
  %s9 = inlined_call_operand.vmem [shape: f32[1,32], index: 9, kind: input, shape index: {}]
  %s10 = inlined_call_operand.vmem [shape: f32[2,8,32], index: 10, kind: output, shape index: {0}]
  %s11 = inlined_call_operand.vmem [shape: f32[2,8,32], index: 11, kind: output, shape index: {1}]
  %12 = xla_tuple %s10, %s11
  %s13 = sld [smem:[#allocation0]]
  $region81: #{esim_forward.8} parent=0
    _
  %s15 = ssub.s32 1, %s13
  %s16 = scalar_select 0, %s15, %s13
  loop: start=0, step=1, limit=4
  $region2: #{esim_forward.8} parent=0 // loop_pre_header
    _
  $region3: #{esim_forward.8} parent=0 // loop_header
    %s18 = sphi 0, %s22
    %p19 = scmp.ge.s32.totalorder %s18, 4
    %s28 = sphi 0, %s30
    %s31 = sphi 0, %s28
    %s32 = sphi 0, %s31
    %s48 = sphi 0, %s32
    %s54 = sphi 0, %s56
    %s57 = sphi 0, %s54
    %s58 = sphi 0, %s57
    %s74 = sphi 0, %s58
    %s80 = sphi 0, %s82
    %s83 = sphi 0, %s80
    %s84 = sphi 0, %s83
    %s100 = sphi 0, %s84
    %s106 = sphi 0, %s108
    %s109 = sphi 0, %s106
    %s110 = sphi 0, %s109
    %s126 = sphi 0, %s110
    %s132 = sphi 0, %s134
    %s135 = sphi 0, %s132
    %s136 = sphi 0, %s135
    %s152 = sphi 0, %s136
    %s156 = sphi 0, %s156
    %s158 = sphi 0, %s156
    %s159 = sphi 0, %s158
    %s173 = sphi 0, %s159
    %s177 = sphi 0, %s177
    %s179 = sphi 0, %s177
    %s180 = sphi 0, %s179
    %s194 = sphi 0, %s180
    %s198 = sphi 0, %s198
    %s200 = sphi 0, %s198
    %s201 = sphi 0, %s200
    %s215 = sphi 0, %s201
    %s219 = sphi 0, %s219
    %s221 = sphi 0, %s219
    %s222 = sphi 0, %s221
    %s236 = sphi 0, %s222
    %s240 = sphi 0, %s240
    %s242 = sphi 0, %s240
    %s243 = sphi 0, %s242
    %s257 = sphi 0, %s243
    %s263 = sphi 0, %s265
    %s266 = sphi 0, %s263
    %s267 = sphi 0, %s266
    %s283 = sphi 0, %s267
    %s289 = sphi 0, %s291
    %s292 = sphi 0, %s289
    %s293 = sphi 0, %s292
    %s309 = sphi 0, %s293
  $region4: #{esim_forward.8} parent=0 // loop_header_branch
    %21 = sbr.rel (%p19) target = $region8
  $region5: #{esim_forward.8} parent=0 // loop_body
    %s23 = ssub.s32 %s18, 1
    %s24 = ssub.s32 %s18, 2
    %s25 = sadd.s32 %s18, 1
    %s26 = ssub.s32 %s18, %s25
    %p27 = scmp.eq.s32.totalorder %s26, 0
    %s29 = sadd.s32 %s28, 1
    %s30 = scalar_select %p27, %s28, %s29
    %p33 = pneg %p27
    %p34 = scmp.eq.s32.totalorder %s18, 1
    %p35 = por %p33, %p34
    %p36 = scmp.ne.s32.totalorder %s28, %s31
    %p37 = scmp.eq.s32.totalorder %s18, 0
    %p38 = por %p36, %p37
    %p39 = scmp.ne.s32.totalorder %s28, %s31
    %p40 = scmp.eq.s32.totalorder %s23, 1
    %p41 = por %p39, %p40
    %p42 = scmp.ne.s32.totalorder %s31, %s32
    %p43 = scmp.eq.s32.totalorder %s23, 0
    %p44 = por %p42, %p43
    %p45 = scmp.ne.s32.totalorder %s31, %s32
    %p46 = scmp.eq.s32.totalorder %s24, 1
    %p47 = por %p45, %p46
    %p49 = scmp.ne.s32.totalorder %s32, %s48
    %p50 = scmp.eq.s32.totalorder %s24, 0
    %p51 = por %p49, %p50
    %s52 = ssub.s32 %s18, %s25
    %p53 = scmp.eq.s32.totalorder %s52, 0
    %s55 = sadd.s32 %s54, 1
    %s56 = scalar_select %p53, %s54, %s55
    %p59 = pneg %p53
    %p60 = scmp.eq.s32.totalorder %s18, 1
    %p61 = por %p59, %p60
    %p62 = scmp.ne.s32.totalorder %s54, %s57
    %p63 = scmp.eq.s32.totalorder %s18, 0
    %p64 = por %p62, %p63
    %p65 = scmp.ne.s32.totalorder %s54, %s57
    %p66 = scmp.eq.s32.totalorder %s23, 1
    %p67 = por %p65, %p66
    %p68 = scmp.ne.s32.totalorder %s57, %s58
    %p69 = scmp.eq.s32.totalorder %s23, 0
    %p70 = por %p68, %p69
    %p71 = scmp.ne.s32.totalorder %s57, %s58
    %p72 = scmp.eq.s32.totalorder %s24, 1
    %p73 = por %p71, %p72
    %p75 = scmp.ne.s32.totalorder %s58, %s74
    %p76 = scmp.eq.s32.totalorder %s24, 0
    %p77 = por %p75, %p76
    %s78 = ssub.s32 %s18, %s25
    %p79 = scmp.eq.s32.totalorder %s78, 0
    %s81 = sadd.s32 %s80, 1
    %s82 = scalar_select %p79, %s80, %s81
    %p85 = pneg %p79
    %p86 = scmp.eq.s32.totalorder %s18, 1
    %p87 = por %p85, %p86
    %p88 = scmp.ne.s32.totalorder %s80, %s83
    %p89 = scmp.eq.s32.totalorder %s18, 0
    %p90 = por %p88, %p89
    %p91 = scmp.ne.s32.totalorder %s80, %s83
    %p92 = scmp.eq.s32.totalorder %s23, 1
    %p93 = por %p91, %p92
    %p94 = scmp.ne.s32.totalorder %s83, %s84
    %p95 = scmp.eq.s32.totalorder %s23, 0
    %p96 = por %p94, %p95
    %p97 = scmp.ne.s32.totalorder %s83, %s84
    %p98 = scmp.eq.s32.totalorder %s24, 1
    %p99 = por %p97, %p98
    %p101 = scmp.ne.s32.totalorder %s84, %s100
    %p102 = scmp.eq.s32.totalorder %s24, 0
    %p103 = por %p101, %p102
    %s104 = ssub.s32 %s18, %s25
    %p105 = scmp.eq.s32.totalorder %s104, 0
    %s107 = sadd.s32 %s106, 1
    %s108 = scalar_select %p105, %s106, %s107
    %p111 = pneg %p105
    %p112 = scmp.eq.s32.totalorder %s18, 1
    %p113 = por %p111, %p112
    %p114 = scmp.ne.s32.totalorder %s106, %s109
    %p115 = scmp.eq.s32.totalorder %s18, 0
    %p116 = por %p114, %p115
    %p117 = scmp.ne.s32.totalorder %s106, %s109
    %p118 = scmp.eq.s32.totalorder %s23, 1
    %p119 = por %p117, %p118
    %p120 = scmp.ne.s32.totalorder %s109, %s110
    %p121 = scmp.eq.s32.totalorder %s23, 0
    %p122 = por %p120, %p121
    %p123 = scmp.ne.s32.totalorder %s109, %s110
    %p124 = scmp.eq.s32.totalorder %s24, 1
    %p125 = por %p123, %p124
    %p127 = scmp.ne.s32.totalorder %s110, %s126
    %p128 = scmp.eq.s32.totalorder %s24, 0
    %p129 = por %p127, %p128
    %s130 = ssub.s32 %s18, %s25
    %p131 = scmp.eq.s32.totalorder %s130, 0
    %s133 = sadd.s32 %s132, 1
    %s134 = scalar_select %p131, %s132, %s133
    %p137 = pneg %p131
    %p138 = scmp.eq.s32.totalorder %s18, 1
    %p139 = por %p137, %p138
    %p140 = scmp.ne.s32.totalorder %s132, %s135
    %p141 = scmp.eq.s32.totalorder %s18, 0
    %p142 = por %p140, %p141
    %p143 = scmp.ne.s32.totalorder %s132, %s135
    %p144 = scmp.eq.s32.totalorder %s23, 1
    %p145 = por %p143, %p144
    %p146 = scmp.ne.s32.totalorder %s135, %s136
    %p147 = scmp.eq.s32.totalorder %s23, 0
    %p148 = por %p146, %p147
    %p149 = scmp.ne.s32.totalorder %s135, %s136
    %p150 = scmp.eq.s32.totalorder %s24, 1
    %p151 = por %p149, %p150
    %p153 = scmp.ne.s32.totalorder %s136, %s152
    %p154 = scmp.eq.s32.totalorder %s24, 0
    %p155 = por %p153, %p154
    %s157 = sadd.s32 %s156, 1
    %p160 = scmp.eq.s32.totalorder %s18, 1
    %p161 = scmp.ne.s32.totalorder %s156, %s158
    %p162 = scmp.eq.s32.totalorder %s18, 0
    %p163 = por %p161, %p162
    %p164 = scmp.ne.s32.totalorder %s156, %s158
    %p165 = scmp.eq.s32.totalorder %s23, 1
    %p166 = por %p164, %p165
    %p167 = scmp.ne.s32.totalorder %s158, %s159
    %p168 = scmp.eq.s32.totalorder %s23, 0
    %p169 = por %p167, %p168
    %p170 = scmp.ne.s32.totalorder %s158, %s159
    %p171 = scmp.eq.s32.totalorder %s24, 1
    %p172 = por %p170, %p171
    %p174 = scmp.ne.s32.totalorder %s159, %s173
    %p175 = scmp.eq.s32.totalorder %s24, 0
    %p176 = por %p174, %p175
    %s178 = sadd.s32 %s177, 1
    %p181 = scmp.eq.s32.totalorder %s18, 1
    %p182 = scmp.ne.s32.totalorder %s177, %s179
    %p183 = scmp.eq.s32.totalorder %s18, 0
    %p184 = por %p182, %p183
    %p185 = scmp.ne.s32.totalorder %s177, %s179
    %p186 = scmp.eq.s32.totalorder %s23, 1
    %p187 = por %p185, %p186
    %p188 = scmp.ne.s32.totalorder %s179, %s180
    %p189 = scmp.eq.s32.totalorder %s23, 0
    %p190 = por %p188, %p189
    %p191 = scmp.ne.s32.totalorder %s179, %s180
    %p192 = scmp.eq.s32.totalorder %s24, 1
    %p193 = por %p191, %p192
    %p195 = scmp.ne.s32.totalorder %s180, %s194
    %p196 = scmp.eq.s32.totalorder %s24, 0
    %p197 = por %p195, %p196
    %s199 = sadd.s32 %s198, 1
    %p202 = scmp.eq.s32.totalorder %s18, 1
    %p203 = scmp.ne.s32.totalorder %s198, %s200
    %p204 = scmp.eq.s32.totalorder %s18, 0
    %p205 = por %p203, %p204
    %p206 = scmp.ne.s32.totalorder %s198, %s200
    %p207 = scmp.eq.s32.totalorder %s23, 1
    %p208 = por %p206, %p207
    %p209 = scmp.ne.s32.totalorder %s200, %s201
    %p210 = scmp.eq.s32.totalorder %s23, 0
    %p211 = por %p209, %p210
    %p212 = scmp.ne.s32.totalorder %s200, %s201
    %p213 = scmp.eq.s32.totalorder %s24, 1
    %p214 = por %p212, %p213
    %p216 = scmp.ne.s32.totalorder %s201, %s215
    %p217 = scmp.eq.s32.totalorder %s24, 0
    %p218 = por %p216, %p217
    %s220 = sadd.s32 %s219, 1
    %p223 = scmp.eq.s32.totalorder %s18, 1
    %p224 = scmp.ne.s32.totalorder %s219, %s221
    %p225 = scmp.eq.s32.totalorder %s18, 0
    %p226 = por %p224, %p225
    %p227 = scmp.ne.s32.totalorder %s219, %s221
    %p228 = scmp.eq.s32.totalorder %s23, 1
    %p229 = por %p227, %p228
    %p230 = scmp.ne.s32.totalorder %s221, %s222
    %p231 = scmp.eq.s32.totalorder %s23, 0
    %p232 = por %p230, %p231
    %p233 = scmp.ne.s32.totalorder %s221, %s222
    %p234 = scmp.eq.s32.totalorder %s24, 1
    %p235 = por %p233, %p234
    %p237 = scmp.ne.s32.totalorder %s222, %s236
    %p238 = scmp.eq.s32.totalorder %s24, 0
    %p239 = por %p237, %p238
    %s241 = sadd.s32 %s240, 1
    %p244 = scmp.eq.s32.totalorder %s18, 1
    %p245 = scmp.ne.s32.totalorder %s240, %s242
    %p246 = scmp.eq.s32.totalorder %s18, 0
    %p247 = por %p245, %p246
    %p248 = scmp.ne.s32.totalorder %s240, %s242
    %p249 = scmp.eq.s32.totalorder %s23, 1
    %p250 = por %p248, %p249
    %p251 = scmp.ne.s32.totalorder %s242, %s243
    %p252 = scmp.eq.s32.totalorder %s23, 0
    %p253 = por %p251, %p252
    %p254 = scmp.ne.s32.totalorder %s242, %s243
    %p255 = scmp.eq.s32.totalorder %s24, 1
    %p256 = por %p254, %p255
    %p258 = scmp.ne.s32.totalorder %s243, %s257
    %p259 = scmp.eq.s32.totalorder %s24, 0
    %p260 = por %p258, %p259
    %s261 = ssub.s32 %s18, %s25
    %p262 = scmp.eq.s32.totalorder %s261, 0
    %s264 = sadd.s32 %s263, 1
    %s265 = scalar_select %p262, %s263, %s264
    %p268 = pneg %p262
    %p269 = scmp.eq.s32.totalorder %s18, 1
    %p270 = por %p268, %p269
    %p271 = scmp.ne.s32.totalorder %s263, %s266
    %p272 = scmp.eq.s32.totalorder %s18, 0
    %p273 = por %p271, %p272
    %p274 = scmp.ne.s32.totalorder %s263, %s266
    %p275 = scmp.eq.s32.totalorder %s23, 1
    %p276 = por %p274, %p275
    %p277 = scmp.ne.s32.totalorder %s266, %s267
    %p278 = scmp.eq.s32.totalorder %s23, 0
    %p279 = por %p277, %p278
    %p280 = scmp.ne.s32.totalorder %s266, %s267
    %p281 = scmp.eq.s32.totalorder %s24, 1
    %p282 = por %p280, %p281
    %p284 = scmp.ne.s32.totalorder %s267, %s283
    %p285 = scmp.eq.s32.totalorder %s24, 0
    %p286 = por %p284, %p285
    %s287 = ssub.s32 %s18, %s25
    %p288 = scmp.eq.s32.totalorder %s287, 0
    %s290 = sadd.s32 %s289, 1
    %s291 = scalar_select %p288, %s289, %s290
    %p294 = pneg %p288
    %p295 = scmp.eq.s32.totalorder %s18, 1
    %p296 = por %p294, %p295
    %p297 = scmp.ne.s32.totalorder %s289, %s292
    %p298 = scmp.eq.s32.totalorder %s18, 0
    %p299 = por %p297, %p298
    %p300 = scmp.ne.s32.totalorder %s289, %s292
    %p301 = scmp.eq.s32.totalorder %s23, 1
    %p302 = por %p300, %p301
    %p303 = scmp.ne.s32.totalorder %s292, %s293
    %p304 = scmp.eq.s32.totalorder %s23, 0
    %p305 = por %p303, %p304
    %p306 = scmp.ne.s32.totalorder %s292, %s293
    %p307 = scmp.eq.s32.totalorder %s24, 1
    %p308 = por %p306, %p307
    %p310 = scmp.ne.s32.totalorder %s293, %s309
    %p311 = scmp.eq.s32.totalorder %s24, 0
    %p312 = por %p310, %p311
    %p313 = scmp.le.s32.totalorder 1, %s18
    %p314 = scmp.lt.s32.totalorder %s18, 3
    %p315 = pnand %p313, %p314
    %p316 = pneg %p315
    // Predicated region
    $region9: #{esim_forward.8} parent=5 // pred_check
      _
    $region10: #{esim_forward.8} parent=5 // pred_check_branch
      %318 = sbr.rel (%p315) target = $region12
    $region11: #{esim_forward.8} parent=5 // pred_region
      %s319 = ssub.s32 %s18, 1
      // Predicated region
      $region13: #{esim_forward.8} parent=11 // pred_check
        %p320 = pneg %p169
      $region14: #{esim_forward.8} parent=11 // pred_check_branch
        %322 = sbr.rel (%p320) target = $region16
      $region15: #{esim_forward.8} parent=11 // pred_region
        _
      $region16: #{esim_forward.8} parent=11 // pred_fallthru
        _
      // Predicated region
      $region17: #{esim_forward.8} parent=11 // pred_check
        %p323 = pneg %p190
      $region18: #{esim_forward.8} parent=11 // pred_check_branch
        %325 = sbr.rel (%p323) target = $region20
      $region19: #{esim_forward.8} parent=11 // pred_region
        _
      $region20: #{esim_forward.8} parent=11 // pred_fallthru
        _
      // Predicated region
      $region21: #{esim_forward.8} parent=11 // pred_check
        %p326 = pneg %p211
      $region22: #{esim_forward.8} parent=11 // pred_check_branch
        %328 = sbr.rel (%p326) target = $region24
      $region23: #{esim_forward.8} parent=11 // pred_region
        _
      $region24: #{esim_forward.8} parent=11 // pred_fallthru
        _
      // Predicated region
      $region25: #{esim_forward.8} parent=11 // pred_check
        %p329 = pneg %p232
      $region26: #{esim_forward.8} parent=11 // pred_check_branch
        %331 = sbr.rel (%p329) target = $region28
      $region27: #{esim_forward.8} parent=11 // pred_region
        _
      $region28: #{esim_forward.8} parent=11 // pred_fallthru
        _
      // Predicated region
      $region29: #{esim_forward.8} parent=11 // pred_check
        %p332 = pneg %p253
      $region30: #{esim_forward.8} parent=11 // pred_check_branch
        %334 = sbr.rel (%p332) target = $region32
      $region31: #{esim_forward.8} parent=11 // pred_region
        _
      $region32: #{esim_forward.8} parent=11 // pred_fallthru
        _
    $region12: #{esim_forward.8} parent=5 // pred_fallthru
      _
    %p335 = scmp.lt.s32.totalorder %s18, 2
    // Predicated region
    $region33: #{esim_forward.8} parent=5 // pred_check
      %p336 = pneg %p335
    $region34: #{esim_forward.8} parent=5 // pred_check_branch
      %338 = sbr.rel (%p336) target = $region36
    $region35: #{esim_forward.8} parent=5 // pred_region
      // Predicated region
      $region37: #{esim_forward.8} parent=35 // pred_check
        %p339 = pneg %p38
      $region38: #{esim_forward.8} parent=35 // pred_check_branch
        %341 = sbr.rel (%p339) target = $region40
      $region39: #{esim_forward.8} parent=35 // pred_region
        %p342 = scmp.lt.s32.totalorder %s18, 1
        %s343 = scalar_select %p342, %s18, 1
        %s344 = smul.addr %s343, 8
        %s345 = scalar_lea.vmem %s0, %s344
      $region40: #{esim_forward.8} parent=35 // pred_fallthru
        _
      // Predicated region
      $region41: #{esim_forward.8} parent=35 // pred_check
        %p346 = pneg %p64
      $region42: #{esim_forward.8} parent=35 // pred_check_branch
        %348 = sbr.rel (%p346) target = $region44
      $region43: #{esim_forward.8} parent=35 // pred_region
        %p349 = scmp.lt.s32.totalorder %s18, 1
        %s350 = scalar_select %p349, %s18, 1
        %s351 = smul.addr %s350, 8
        %s352 = scalar_lea.vmem %s1, %s351
      $region44: #{esim_forward.8} parent=35 // pred_fallthru
        _
      // Predicated region
      $region45: #{esim_forward.8} parent=35 // pred_check
        %p353 = pneg %p90
      $region46: #{esim_forward.8} parent=35 // pred_check_branch
        %355 = sbr.rel (%p353) target = $region48
      $region47: #{esim_forward.8} parent=35 // pred_region
        %p356 = scmp.lt.s32.totalorder %s18, 1
        %s357 = scalar_select %p356, %s18, 1
        %s358 = smul.addr %s357, 8
        %s359 = scalar_lea.vmem %s2, %s358
      $region48: #{esim_forward.8} parent=35 // pred_fallthru
        _
      // Predicated region
      $region49: #{esim_forward.8} parent=35 // pred_check
        %p360 = pneg %p116
      $region50: #{esim_forward.8} parent=35 // pred_check_branch
        %362 = sbr.rel (%p360) target = $region52
      $region51: #{esim_forward.8} parent=35 // pred_region
        %p363 = scmp.lt.s32.totalorder %s18, 1
        %s364 = scalar_select %p363, %s18, 1
        %s365 = smul.addr %s364, 8
        %s366 = scalar_lea.vmem %s3, %s365
      $region52: #{esim_forward.8} parent=35 // pred_fallthru
        _
      // Predicated region
      $region53: #{esim_forward.8} parent=35 // pred_check
        %p367 = pneg %p142
      $region54: #{esim_forward.8} parent=35 // pred_check_branch
        %369 = sbr.rel (%p367) target = $region56
      $region55: #{esim_forward.8} parent=35 // pred_region
        %p370 = scmp.lt.s32.totalorder %s18, 1
        %s371 = scalar_select %p370, %s18, 1
        %s372 = scalar_lea.vmem %s4, %s371
      $region56: #{esim_forward.8} parent=35 // pred_fallthru
        _
    $region36: #{esim_forward.8} parent=5 // pred_fallthru
      _
    %p373 = scmp.le.s32.totalorder 1, %s18
    %p374 = scmp.lt.s32.totalorder %s18, 3
    %p375 = pnand %p373, %p374
    %p376 = pneg %p375
    // Predicated region
    $region57: #{esim_forward.8} parent=5 // pred_check
      _
    $region58: #{esim_forward.8} parent=5 // pred_check_branch
      %378 = sbr.rel (%p375) target = $region60
    $region59: #{esim_forward.8} parent=5 // pred_region
      %s379 = ssub.s32 %s18, 1
      %p380 = scmp.lt.s32.totalorder %s23, 1
      %s381 = scalar_select %p380, %s23, 1
      %s382 = smul.addr %s381, 8
      %s383 = scalar_lea.vmem %s0, %s382
      %p384 = pneg %p44
      %p385 = pneg %p41
      %p386 = scmp.lt.s32.totalorder %s23, 1
      %s387 = scalar_select %p386, %s23, 1
      %s388 = smul.addr %s387, 8
      %s389 = scalar_lea.vmem %s1, %s388
      %p390 = pneg %p70
      %p391 = pneg %p67
      %p392 = scmp.lt.s32.totalorder %s23, 1
      %s393 = scalar_select %p392, %s23, 1
      %s394 = smul.addr %s393, 8
      %s395 = scalar_lea.vmem %s2, %s394
      %p396 = pneg %p96
      %p397 = pneg %p93
      %p398 = scmp.lt.s32.totalorder %s23, 1
      %s399 = scalar_select %p398, %s23, 1
      %s400 = smul.addr %s399, 8
      %s401 = scalar_lea.vmem %s3, %s400
      %p402 = pneg %p122
      %p403 = pneg %p119
      %p404 = scmp.lt.s32.totalorder %s23, 1
      %s405 = scalar_select %p404, %s23, 1
      %s406 = scalar_lea.vmem %s4, %s405
      %p407 = pneg %p148
      %p408 = pneg %p145
      %p409 = pneg %p169
      %p410 = pneg %p166
      %p411 = pneg %p190
      %p412 = pneg %p187
      %p413 = pneg %p211
      %p414 = pneg %p208
      %p415 = pneg %p232
      %p416 = pneg %p229
      %p417 = pneg %p253
      %p418 = pneg %p250
      %p419 = pneg %p279
      %p420 = pneg %p276
      %p421 = scmp.lt.s32.totalorder %s23, 1
      %s422 = scalar_select %p421, %s23, 1
      %s423 = smul.addr %s422, 8
      %s424 = scalar_lea.vmem %s10, %s423
      %p425 = pneg %p305
      %p426 = pneg %p302
      %p427 = scmp.lt.s32.totalorder %s23, 1
      %s428 = scalar_select %p427, %s23, 1
      %s429 = smul.addr %s428, 8
      %s430 = scalar_lea.vmem %s11, %s429
      %p431 = scmp.lt.s32.totalorder %s23, 1
      %s432 = scalar_select %p431, %s23, 1
      %s433 = smul.addr %s432, 8
      %s434 = scalar_lea.vmem %s0, %s433
      %p435 = scmp.lt.s32.totalorder %s23, 1
      %s436 = scalar_select %p435, %s23, 1
      %s437 = smul.addr %s436, 8
      %s438 = scalar_lea.vmem %s1, %s437
      %p439 = scmp.lt.s32.totalorder %s23, 1
      %s440 = scalar_select %p439, %s23, 1
      %s441 = smul.addr %s440, 8
      %s442 = scalar_lea.vmem %s2, %s441
      %p443 = scmp.lt.s32.totalorder %s23, 1
      %s444 = scalar_select %p443, %s23, 1
      %s445 = smul.addr %s444, 8
      %s446 = scalar_lea.vmem %s3, %s445
      %p447 = scmp.lt.s32.totalorder %s23, 1
      %s448 = scalar_select %p447, %s23, 1
      %s449 = scalar_lea.vmem %s4, %s448
      %p450 = scmp.lt.s32.totalorder %s23, 1
      %s451 = scalar_select %p450, %s23, 1
      %s452 = smul.addr %s451, 8
      %s453 = scalar_lea.vmem %s10, %s452
      %p454 = scmp.lt.s32.totalorder %s23, 1
      %s455 = scalar_select %p454, %s23, 1
      %s456 = smul.addr %s455, 8
      %s457 = scalar_lea.vmem %s11, %s456
      %v459 = vld [vmem:[%s434] sm:$0xff]
      %v460 = vld [vmem:[%s438] sm:$0xff]
      %v461 = vld [vmem:[%s442] sm:$0xff]
      %v462 = vld [vmem:[%s446] sm:$0xff]
      %v463 = vld [vmem:[%s449] sm:$0x1]
      %v464 = vpack.c.bf16 %v459, %v459
      %v465 = vpack.c.bf16 %v460, %v460
      %vm466 = vcmask 523264
      %v468 = vsel %vm466, %v464, 0
      %v471 = vsel %vm466, %v465, 0
      %473 = vmatprep.subr.bf16.mxu0 0
      %474 = vmatpush1.bf16.xpose.msra.mxu0 %v471
      %475 = vmatprep.subr.bf16.mxu0 0
      %476 = vmatpush1.bf16.xpose.msra.mxu0 0
      %477 = vmatprep.subr.bf16.mxu0 0
      %478 = vmatpush1.bf16.xpose.msra.mxu0 0
      %479 = vmatprep.subr.bf16.mxu0 0
      %480 = vmatpush1.bf16.xpose.msra.mxu0 0
      %481 = vmatprep.subr.bf16.mxu0 0
      %482 = vmatpush1.bf16.xpose.msra.mxu0 0
      %483 = vmatprep.subr.bf16.mxu0 0
      %484 = vmatpush1.bf16.xpose.msra.mxu0 0
      %485 = vmatprep.subr.bf16.mxu0 0
      %486 = vmatpush1.bf16.xpose.msra.mxu0 0
      %487 = vmatprep.subr.bf16.mxu0 0
      %488 = vmatpush1.bf16.xpose.msra.mxu0 0
      %489 = vmatprep.subr.bf16.mxu0 0
      %490 = vmatpush1.bf16.xpose.msra.mxu0 0
      %491 = vmatprep.subr.bf16.mxu0 0
      %492 = vmatpush1.bf16.xpose.msra.mxu0 0
      %493 = vmatprep.subr.bf16.mxu0 0
      %494 = vmatpush1.bf16.xpose.msra.mxu0 0
      %495 = vmatprep.subr.bf16.mxu0 0
      %496 = vmatpush1.bf16.xpose.msra.mxu0 0
      %497 = vmatprep.subr.bf16.mxu0 0
      %498 = vmatpush1.bf16.xpose.msra.mxu0 0
      %499 = vmatprep.subr.bf16.mxu0 0
      %500 = vmatpush1.bf16.xpose.msra.mxu0 0
      %501 = vmatprep.subr.bf16.mxu0 0
      %502 = vmatpush1.bf16.xpose.msra.mxu0 0
      %503 = vmatprep.subr.bf16.mxu0 0
      %504 = vmatpush1.bf16.xpose.msra.mxu0 0
      %505 = vmatprep.mubr.bf16.mxu0 0
      %506 = vmatmul.mubr.bf16.gmra.mrb[0].mxu0 %v468
      %v507 = vpop.f32.mrb[0].mxu0
      %v508 = vadd.f32 0.0, %v507
      %v509 = vpop.f32.mrb[0].mxu0
      %v510 = vpop.f32.mrb[0].mxu0
      %v511 = vpop.f32.mrb[0].mxu0
      %512 = vdwg.mxu0
      %v514 = vlaneseq
      %v515 = vshrl.u32 %v514, 7
      %v516 = vsub.s32 0, %v515
      %v517 = vrot.slane %v463, %v516
      %v519 = vmul.f32 %v508, %v517
      %vm520 = vcmask 64512
      %v521 = vsel %vm520, %v519, -inf
      %522 = vmax.xlane.f32.xlu0 %v521
      %v523 = vpop.xlane.xlu0 %522
      %v524 = vsub.f32 %v519, %v523
      %v525 = vmul.f32 %v524, 1.442695
      %v526 = vpow.pop %v525
      %v527 = vsel %vm520, %v526, 0.0
      %528 = vadd.xlane.f32.xlu0 %v527
      %v529 = vpop.xlane.xlu0 %528
      %v530 = vrcp.pop %v529
      %v531 = vmul.f32 %v526, %v530
      %v532 = vmul.f32 %v531, %v517
      %v533 = vsel %vm520, %v532, 0.0
      %534 = vadd.xlane.f32.xlu0 %v533
      %v535 = vpop.xlane.xlu0 %534
      %v536 = vadd.f32 %v535, 1e-13
      %v537 = vrcp.pop %v536
      %v538 = vmul.f32 %v532, %v537
      %v539 = vpack.c.bf16 %v538, %v538
      %v541 = vsel %vm520, %v539, 0
      %vm543 = vcmask 1043456
      %v544 = vsel %vm543, %v465, 0
      %546 = vmatprep.subr.bf16.mxu0 0
      %547 = vmatpush1.bf16.msra.mxu0 %v544
      %548 = vmatprep.subr.bf16.mxu0 0
      %549 = vmatpush1.bf16.msra.mxu0 0
      %550 = vmatprep.subr.bf16.mxu0 0
      %551 = vmatpush1.bf16.msra.mxu0 0
      %552 = vmatprep.subr.bf16.mxu0 0
      %553 = vmatpush1.bf16.msra.mxu0 0
      %554 = vmatprep.subr.bf16.mxu0 0
      %555 = vmatpush1.bf16.msra.mxu0 0
      %556 = vmatprep.subr.bf16.mxu0 0
      %557 = vmatpush1.bf16.msra.mxu0 0
      %558 = vmatprep.subr.bf16.mxu0 0
      %559 = vmatpush1.bf16.msra.mxu0 0
      %560 = vmatprep.subr.bf16.mxu0 0
      %561 = vmatpush1.bf16.msra.mxu0 0
      %562 = vmatprep.subr.bf16.mxu0 0
      %563 = vmatpush1.bf16.msra.mxu0 0
      %564 = vmatprep.subr.bf16.mxu0 0
      %565 = vmatpush1.bf16.msra.mxu0 0
      %566 = vmatprep.subr.bf16.mxu0 0
      %567 = vmatpush1.bf16.msra.mxu0 0
      %568 = vmatprep.subr.bf16.mxu0 0
      %569 = vmatpush1.bf16.msra.mxu0 0
      %570 = vmatprep.subr.bf16.mxu0 0
      %571 = vmatpush1.bf16.msra.mxu0 0
      %572 = vmatprep.subr.bf16.mxu0 0
      %573 = vmatpush1.bf16.msra.mxu0 0
      %574 = vmatprep.subr.bf16.mxu0 0
      %575 = vmatpush1.bf16.msra.mxu0 0
      %576 = vmatprep.subr.bf16.mxu0 0
      %577 = vmatpush1.bf16.msra.mxu0 0
      %578 = vmatprep.mubr.bf16.mxu0 0
      %579 = vmatmul.mubr.bf16.gmra.mrb[0].mxu0 %v541
      %v580 = vpop.f32.mrb[0].mxu0
      %v581 = vadd.f32 0.0, %v580
      %v582 = vpop.f32.mrb[0].mxu0
      %v583 = vpop.f32.mrb[0].mxu0
      %v584 = vpop.f32.mrb[0].mxu0
      %585 = vdwg.mxu0
      %587 = vset.pattern.permute.xlu0 0
      %588 = vperm.xlu0 %587, %v461
      %v589 = vpop.permute.xlu0 %588
      %v591 = vmul.f32 %v581, %v589
      %v592 = vmul.f32 %v508, %v589
      %v593 = vsel %vm520, %v592, -inf
      %v594 = vrot.slane %v593, 4
      %v595 = vmax.f32 %v593, %v594
      %v596 = vrot.slane %v595, 2
      %v597 = vmax.f32 %v595, %v596
      %v598 = vrot.slane %v597, 1
      %v599 = vmax.f32 %v597, %v598
      %v600 = vsub.f32 %v592, %v599
      %v601 = vmul.f32 %v600, 1.442695
      %v602 = vpow.pop %v601
      %v603 = vsel %vm520, %v602, 0.0
      %v604 = vrot.slane %v603, 4
      %v605 = vadd.f32 %v603, %v604
      %v606 = vrot.slane %v605, 2
      %v607 = vadd.f32 %v605, %v606
      %v608 = vrot.slane %v607, 1
      %v609 = vadd.f32 %v607, %v608
      %v610 = vrcp.pop %v609
      %v611 = vmul.f32 %v602, %v610
      %v612 = vmul.f32 %v611, %v589
      %v613 = vsel %vm520, %v612, 0.0
      %v614 = vrot.slane %v613, 4
      %v615 = vadd.f32 %v613, %v614
      %v616 = vrot.slane %v615, 2
      %v617 = vadd.f32 %v615, %v616
      %v618 = vrot.slane %v617, 1
      %v619 = vadd.f32 %v617, %v618
      %v620 = vadd.f32 %v619, 1e-13
      %v621 = vrcp.pop %v620
      %v622 = vmul.f32 %v612, %v621
      %v623 = vpack.c.bf16 %v622, %v622
      %624 = vxpose.xlu0.c.b16.start [1/8] %v623, 128
      %625 = vxpose.xlu0.c.b16.cont [2/8] 0, 128
      %626 = vxpose.xlu0.c.b16.cont [3/8] 0, 128
      %627 = vxpose.xlu0.c.b16.cont [4/8] 0, 128
      %628 = vxpose.xlu0.c.b16.cont [5/8] 0, 128
      %629 = vxpose.xlu0.c.b16.cont [6/8] 0, 128
      %630 = vxpose.xlu0.c.b16.cont [7/8] 0, 128
      %631 = vxpose.xlu0.c.b16.end [8/8] 0, 128
      %v632 = vpop.trf.xlu0
      %v633 = vpop.trf.xlu0
      %v634 = vpop.trf.xlu0
      %v635 = vpop.trf.xlu0
      %v636 = vpop.trf.xlu0
      %v637 = vpop.trf.xlu0
      %v638 = vpop.trf.xlu0
      %v639 = vpop.trf.xlu0
      %v641 = vsel %vm520, %v632, 0
      %v643 = vsel %vm543, %v464, 0
      %645 = vmatprep.subr.bf16.mxu0 0
      %646 = vmatpush1.bf16.msra.mxu0 %v643
      %647 = vmatprep.subr.bf16.mxu0 0
      %648 = vmatpush1.bf16.msra.mxu0 0
      %649 = vmatprep.subr.bf16.mxu0 0
      %650 = vmatpush1.bf16.msra.mxu0 0
      %651 = vmatprep.subr.bf16.mxu0 0
      %652 = vmatpush1.bf16.msra.mxu0 0
      %653 = vmatprep.subr.bf16.mxu0 0
      %654 = vmatpush1.bf16.msra.mxu0 0
      %655 = vmatprep.subr.bf16.mxu0 0
      %656 = vmatpush1.bf16.msra.mxu0 0
      %657 = vmatprep.subr.bf16.mxu0 0
      %658 = vmatpush1.bf16.msra.mxu0 0
      %659 = vmatprep.subr.bf16.mxu0 0
      %660 = vmatpush1.bf16.msra.mxu0 0
      %661 = vmatprep.subr.bf16.mxu0 0
      %662 = vmatpush1.bf16.msra.mxu0 0
      %663 = vmatprep.subr.bf16.mxu0 0
      %664 = vmatpush1.bf16.msra.mxu0 0
      %665 = vmatprep.subr.bf16.mxu0 0
      %666 = vmatpush1.bf16.msra.mxu0 0
      %667 = vmatprep.subr.bf16.mxu0 0
      %668 = vmatpush1.bf16.msra.mxu0 0
      %669 = vmatprep.subr.bf16.mxu0 0
      %670 = vmatpush1.bf16.msra.mxu0 0
      %671 = vmatprep.subr.bf16.mxu0 0
      %672 = vmatpush1.bf16.msra.mxu0 0
      %673 = vmatprep.subr.bf16.mxu0 0
      %674 = vmatpush1.bf16.msra.mxu0 0
      %675 = vmatprep.subr.bf16.mxu0 0
      %676 = vmatpush1.bf16.msra.mxu0 0
      %677 = vmatprep.mubr.bf16.mxu0 0
      %678 = vmatmul.mubr.bf16.gmra.mrb[0].mxu0 %v641
      %v679 = vpop.f32.mrb[0].mxu0
      %v680 = vadd.f32 0.0, %v679
      %v681 = vpop.f32.mrb[0].mxu0
      %v682 = vpop.f32.mrb[0].mxu0
      %v683 = vpop.f32.mrb[0].mxu0
      %684 = vdwg.mxu0
      %686 = vset.pattern.permute.xlu0 0
      %687 = vperm.xlu0 %686, %v462
      %v688 = vpop.permute.xlu0 %687
      %v690 = vmul.f32 %v680, %v688
      %v691 = vld [vmem:[%s9] sm:$0x1]
      %v692 = vld [vmem:[%s5] sm:$0xf]
      %v693 = vld [vmem:[%s5 + $0x4] sm:$0xf]
      %v694 = vld [vmem:[%s5 + $0x8] sm:$0xf]
      %v695 = vld [vmem:[%s5 + $0xc] sm:$0xf]
      %v696 = vld [vmem:[%s5 + $0x10] sm:$0xf]
      %v697 = vld [vmem:[%s5 + $0x14] sm:$0xf]
      %v698 = vld [vmem:[%s5 + $0x18] sm:$0xf]
      %v699 = vld [vmem:[%s5 + $0x1c] sm:$0xf]
      %v700 = vpack.c.bf16 %v591, %v591
      %v701 = vld [vmem:[%s6] sm:$0xf]
      %v702 = vld [vmem:[%s6 + $0x4] sm:$0xf]
      %v703 = vld [vmem:[%s6 + $0x8] sm:$0xf]
      %v704 = vld [vmem:[%s6 + $0xc] sm:$0xf]
      %v705 = vld [vmem:[%s6 + $0x10] sm:$0xf]
      %v706 = vld [vmem:[%s6 + $0x14] sm:$0xf]
      %v707 = vld [vmem:[%s6 + $0x18] sm:$0xf]
      %v708 = vld [vmem:[%s6 + $0x1c] sm:$0xf]
      %v717 = vunpack.c.l.b16 %v701
      %v718 = vunpack.c.l.b16 %v702
      %v719 = vunpack.c.l.b16 %v703
      %v720 = vunpack.c.l.b16 %v704
      %v721 = vunpack.c.l.b16 %v705
      %v722 = vunpack.c.l.b16 %v706
      %v723 = vunpack.c.l.b16 %v707
      %v724 = vunpack.c.l.b16 %v708
      %v725 = vpack.c.b16 %v718, %v717
      %v726 = vpack.c.b16 %v720, %v719
      %v727 = vpack.c.b16 %v722, %v721
      %v728 = vpack.c.b16 %v724, %v723
      %v734 = vsel %vm466, %v700, 0
      %736 = vmatprep.subr.bf16.mxu0 0
      %737 = vmatpush1.bf16.msra.mxu0 %v725
      %738 = vmatprep.subr.bf16.mxu0 0
      %739 = vmatpush1.bf16.msra.mxu0 %v726
      %740 = vmatprep.subr.bf16.mxu0 0
      %741 = vmatpush1.bf16.msra.mxu0 %v727
      %742 = vmatprep.subr.bf16.mxu0 0
      %743 = vmatpush1.bf16.msra.mxu0 %v728
      %744 = vmatprep.subr.bf16.mxu0 0
      %745 = vmatpush1.bf16.msra.mxu0 0
      %746 = vmatprep.subr.bf16.mxu0 0
      %747 = vmatpush1.bf16.msra.mxu0 0
      %748 = vmatprep.subr.bf16.mxu0 0
      %749 = vmatpush1.bf16.msra.mxu0 0
      %750 = vmatprep.subr.bf16.mxu0 0
      %751 = vmatpush1.bf16.msra.mxu0 0
      %752 = vmatprep.subr.bf16.mxu0 0
      %753 = vmatpush1.bf16.msra.mxu0 0
      %754 = vmatprep.subr.bf16.mxu0 0
      %755 = vmatpush1.bf16.msra.mxu0 0
      %756 = vmatprep.subr.bf16.mxu0 0
      %757 = vmatpush1.bf16.msra.mxu0 0
      %758 = vmatprep.subr.bf16.mxu0 0
      %759 = vmatpush1.bf16.msra.mxu0 0
      %760 = vmatprep.subr.bf16.mxu0 0
      %761 = vmatpush1.bf16.msra.mxu0 0
      %762 = vmatprep.subr.bf16.mxu0 0
      %763 = vmatpush1.bf16.msra.mxu0 0
      %764 = vmatprep.subr.bf16.mxu0 0
      %765 = vmatpush1.bf16.msra.mxu0 0
      %766 = vmatprep.subr.bf16.mxu0 0
      %767 = vmatpush1.bf16.msra.mxu0 0
      %768 = vmatprep.mubr.bf16.mxu0 0
      %769 = vmatmul.mubr.bf16.gmra.mrb[0].mxu0 %v734
      %v770 = vpop.f32.mrb[0].mxu0
      %v771 = vadd.f32 0.0, %v770
      %v772 = vpop.f32.mrb[0].mxu0
      %v773 = vpop.f32.mrb[0].mxu0
      %v774 = vpop.f32.mrb[0].mxu0
      %775 = vdwg.mxu0
      %v784 = vunpack.c.l.b16 %v692
      %v785 = vunpack.c.l.b16 %v693
      %v786 = vunpack.c.l.b16 %v694
      %v787 = vunpack.c.l.b16 %v695
      %v788 = vunpack.c.l.b16 %v696
      %v789 = vunpack.c.l.b16 %v697
      %v790 = vunpack.c.l.b16 %v698
      %v791 = vunpack.c.l.b16 %v699
      %v792 = vpack.c.b16 %v785, %v784
      %v793 = vpack.c.b16 %v787, %v786
      %v794 = vpack.c.b16 %v789, %v788
      %v795 = vpack.c.b16 %v791, %v790
      %800 = vmatprep.subr.bf16.mxu0 0
      %801 = vmatpush1.bf16.msra.mxu0 %v792
      %802 = vmatprep.subr.bf16.mxu0 0
      %803 = vmatpush1.bf16.msra.mxu0 %v793
      %804 = vmatprep.subr.bf16.mxu0 0
      %805 = vmatpush1.bf16.msra.mxu0 %v794
      %806 = vmatprep.subr.bf16.mxu0 0
      %807 = vmatpush1.bf16.msra.mxu0 %v795
      %808 = vmatprep.subr.bf16.mxu0 0
      %809 = vmatpush1.bf16.msra.mxu0 0
      %810 = vmatprep.subr.bf16.mxu0 0
      %811 = vmatpush1.bf16.msra.mxu0 0
      %812 = vmatprep.subr.bf16.mxu0 0
      %813 = vmatpush1.bf16.msra.mxu0 0
      %814 = vmatprep.subr.bf16.mxu0 0
      %815 = vmatpush1.bf16.msra.mxu0 0
      %816 = vmatprep.subr.bf16.mxu0 0
      %817 = vmatpush1.bf16.msra.mxu0 0
      %818 = vmatprep.subr.bf16.mxu0 0
      %819 = vmatpush1.bf16.msra.mxu0 0
      %820 = vmatprep.subr.bf16.mxu0 0
      %821 = vmatpush1.bf16.msra.mxu0 0
      %822 = vmatprep.subr.bf16.mxu0 0
      %823 = vmatpush1.bf16.msra.mxu0 0
      %824 = vmatprep.subr.bf16.mxu0 0
      %825 = vmatpush1.bf16.msra.mxu0 0
      %826 = vmatprep.subr.bf16.mxu0 0
      %827 = vmatpush1.bf16.msra.mxu0 0
      %828 = vmatprep.subr.bf16.mxu0 0
      %829 = vmatpush1.bf16.msra.mxu0 0
      %830 = vmatprep.subr.bf16.mxu0 0
      %831 = vmatpush1.bf16.msra.mxu0 0
      %832 = vmatprep.mubr.bf16.mxu0 0
      %833 = vmatmul.mubr.bf16.gmra.mrb[0].mxu0 %v468
      %v834 = vpop.f32.mrb[0].mxu0
      %v835 = vadd.f32 %v771, %v834
      %v836 = vpop.f32.mrb[0].mxu0
      %v837 = vpop.f32.mrb[0].mxu0
      %v838 = vpop.f32.mrb[0].mxu0
      %839 = vdwg.mxu0
      %v840 = vsub.f32 %v459, %v591
      %v841 = vpack.c.bf16 %v840, %v840
      %v842 = vld [vmem:[%s7] sm:$0xf]
      %v843 = vld [vmem:[%s7 + $0x4] sm:$0xf]
      %v844 = vld [vmem:[%s7 + $0x8] sm:$0xf]
      %v845 = vld [vmem:[%s7 + $0xc] sm:$0xf]
      %v846 = vld [vmem:[%s7 + $0x10] sm:$0xf]
      %v847 = vld [vmem:[%s7 + $0x14] sm:$0xf]
      %v848 = vld [vmem:[%s7 + $0x18] sm:$0xf]
      %v849 = vld [vmem:[%s7 + $0x1c] sm:$0xf]
      %v858 = vunpack.c.l.b16 %v842
      %v859 = vunpack.c.l.b16 %v843
      %v860 = vunpack.c.l.b16 %v844
      %v861 = vunpack.c.l.b16 %v845
      %v862 = vunpack.c.l.b16 %v846
      %v863 = vunpack.c.l.b16 %v847
      %v864 = vunpack.c.l.b16 %v848
      %v865 = vunpack.c.l.b16 %v849
      %v866 = vpack.c.b16 %v859, %v858
      %v867 = vpack.c.b16 %v861, %v860
      %v868 = vpack.c.b16 %v863, %v862
      %v869 = vpack.c.b16 %v865, %v864
      %v875 = vsel %vm466, %v841, 0
      %877 = vmatprep.subr.bf16.mxu0 0
      %878 = vmatpush1.bf16.msra.mxu0 %v866
      %879 = vmatprep.subr.bf16.mxu0 0
      %880 = vmatpush1.bf16.msra.mxu0 %v867
      %881 = vmatprep.subr.bf16.mxu0 0
      %882 = vmatpush1.bf16.msra.mxu0 %v868
      %883 = vmatprep.subr.bf16.mxu0 0
      %884 = vmatpush1.bf16.msra.mxu0 %v869
      %885 = vmatprep.subr.bf16.mxu0 0
      %886 = vmatpush1.bf16.msra.mxu0 0
      %887 = vmatprep.subr.bf16.mxu0 0
      %888 = vmatpush1.bf16.msra.mxu0 0
      %889 = vmatprep.subr.bf16.mxu0 0
      %890 = vmatpush1.bf16.msra.mxu0 0
      %891 = vmatprep.subr.bf16.mxu0 0
      %892 = vmatpush1.bf16.msra.mxu0 0
      %893 = vmatprep.subr.bf16.mxu0 0
      %894 = vmatpush1.bf16.msra.mxu0 0
      %895 = vmatprep.subr.bf16.mxu0 0
      %896 = vmatpush1.bf16.msra.mxu0 0
      %897 = vmatprep.subr.bf16.mxu0 0
      %898 = vmatpush1.bf16.msra.mxu0 0
      %899 = vmatprep.subr.bf16.mxu0 0
      %900 = vmatpush1.bf16.msra.mxu0 0
      %901 = vmatprep.subr.bf16.mxu0 0
      %902 = vmatpush1.bf16.msra.mxu0 0
      %903 = vmatprep.subr.bf16.mxu0 0
      %904 = vmatpush1.bf16.msra.mxu0 0
      %905 = vmatprep.subr.bf16.mxu0 0
      %906 = vmatpush1.bf16.msra.mxu0 0
      %907 = vmatprep.subr.bf16.mxu0 0
      %908 = vmatpush1.bf16.msra.mxu0 0
      %909 = vmatprep.mubr.bf16.mxu0 0
      %910 = vmatmul.mubr.bf16.gmra.mrb[0].mxu0 %v875
      %v911 = vpop.f32.mrb[0].mxu0
      %v912 = vadd.f32 0.0, %v911
      %v913 = vpop.f32.mrb[0].mxu0
      %v914 = vpop.f32.mrb[0].mxu0
      %v915 = vpop.f32.mrb[0].mxu0
      %916 = vdwg.mxu0
      %v917 = vadd.f32 %v835, %v912
      %v918 = vmul.f32 %v459, %v591
      %v919 = vpack.c.bf16 %v918, %v918
      %v920 = vld [vmem:[%s8] sm:$0xf]
      %v921 = vld [vmem:[%s8 + $0x4] sm:$0xf]
      %v922 = vld [vmem:[%s8 + $0x8] sm:$0xf]
      %v923 = vld [vmem:[%s8 + $0xc] sm:$0xf]
      %v924 = vld [vmem:[%s8 + $0x10] sm:$0xf]
      %v925 = vld [vmem:[%s8 + $0x14] sm:$0xf]
      %v926 = vld [vmem:[%s8 + $0x18] sm:$0xf]
      %v927 = vld [vmem:[%s8 + $0x1c] sm:$0xf]
      %v936 = vunpack.c.l.b16 %v920
      %v937 = vunpack.c.l.b16 %v921
      %v938 = vunpack.c.l.b16 %v922
      %v939 = vunpack.c.l.b16 %v923
      %v940 = vunpack.c.l.b16 %v924
      %v941 = vunpack.c.l.b16 %v925
      %v942 = vunpack.c.l.b16 %v926
      %v943 = vunpack.c.l.b16 %v927
      %v944 = vpack.c.b16 %v937, %v936
      %v945 = vpack.c.b16 %v939, %v938
      %v946 = vpack.c.b16 %v941, %v940
      %v947 = vpack.c.b16 %v943, %v942
      %v953 = vsel %vm466, %v919, 0
      %955 = vmatprep.subr.bf16.mxu0 0
      %956 = vmatpush1.bf16.msra.mxu0 %v944
      %957 = vmatprep.subr.bf16.mxu0 0
      %958 = vmatpush1.bf16.msra.mxu0 %v945
      %959 = vmatprep.subr.bf16.mxu0 0
      %960 = vmatpush1.bf16.msra.mxu0 %v946
      %961 = vmatprep.subr.bf16.mxu0 0
      %962 = vmatpush1.bf16.msra.mxu0 %v947
      %963 = vmatprep.subr.bf16.mxu0 0
      %964 = vmatpush1.bf16.msra.mxu0 0
      %965 = vmatprep.subr.bf16.mxu0 0
      %966 = vmatpush1.bf16.msra.mxu0 0
      %967 = vmatprep.subr.bf16.mxu0 0
      %968 = vmatpush1.bf16.msra.mxu0 0
      %969 = vmatprep.subr.bf16.mxu0 0
      %970 = vmatpush1.bf16.msra.mxu0 0
      %971 = vmatprep.subr.bf16.mxu0 0
      %972 = vmatpush1.bf16.msra.mxu0 0
      %973 = vmatprep.subr.bf16.mxu0 0
      %974 = vmatpush1.bf16.msra.mxu0 0
      %975 = vmatprep.subr.bf16.mxu0 0
      %976 = vmatpush1.bf16.msra.mxu0 0
      %977 = vmatprep.subr.bf16.mxu0 0
      %978 = vmatpush1.bf16.msra.mxu0 0
      %979 = vmatprep.subr.bf16.mxu0 0
      %980 = vmatpush1.bf16.msra.mxu0 0
      %981 = vmatprep.subr.bf16.mxu0 0
      %982 = vmatpush1.bf16.msra.mxu0 0
      %983 = vmatprep.subr.bf16.mxu0 0
      %984 = vmatpush1.bf16.msra.mxu0 0
      %985 = vmatprep.subr.bf16.mxu0 0
      %986 = vmatpush1.bf16.msra.mxu0 0
      %987 = vmatprep.mubr.bf16.mxu0 0
      %988 = vmatmul.mubr.bf16.gmra.mrb[0].mxu0 %v953
      %v989 = vpop.f32.mrb[0].mxu0
      %v990 = vadd.f32 0.0, %v989
      %v991 = vpop.f32.mrb[0].mxu0
      %v992 = vpop.f32.mrb[0].mxu0
      %v993 = vpop.f32.mrb[0].mxu0
      %994 = vdwg.mxu0
      %v995 = vadd.f32 %v917, %v990
      %v997 = vlaneseq
      %v998 = vshrl.u32 %v997, 7
      %v999 = vsub.s32 0, %v998
      %v1000 = vrot.slane %v691, %v999
      %v1002 = vadd.f32 %v995, %v1000
      %v1003 = vmax.f32 %v1002, 0.0
      %vm1004 = vcmask 261120
      %1005 = vst.msk [vmem:[%s453] sm:$0xff] %vm1004, %v1003
      %v1006 = vld [vmem:[%s5] sm:$0xf]
      %v1007 = vld [vmem:[%s5 + $0x4] sm:$0xf]
      %v1008 = vld [vmem:[%s5 + $0x8] sm:$0xf]
      %v1009 = vld [vmem:[%s5 + $0xc] sm:$0xf]
      %v1010 = vld [vmem:[%s5 + $0x10] sm:$0xf]
      %v1011 = vld [vmem:[%s5 + $0x14] sm:$0xf]
      %v1012 = vld [vmem:[%s5 + $0x18] sm:$0xf]
      %v1013 = vld [vmem:[%s5 + $0x1c] sm:$0xf]
      %v1014 = vpack.c.bf16 %v690, %v690
      %v1015 = vld [vmem:[%s6] sm:$0xf]
      %v1016 = vld [vmem:[%s6 + $0x4] sm:$0xf]
      %v1017 = vld [vmem:[%s6 + $0x8] sm:$0xf]
      %v1018 = vld [vmem:[%s6 + $0xc] sm:$0xf]
      %v1019 = vld [vmem:[%s6 + $0x10] sm:$0xf]
      %v1020 = vld [vmem:[%s6 + $0x14] sm:$0xf]
      %v1021 = vld [vmem:[%s6 + $0x18] sm:$0xf]
      %v1022 = vld [vmem:[%s6 + $0x1c] sm:$0xf]
      %v1031 = vunpack.c.l.b16 %v1015
      %v1032 = vunpack.c.l.b16 %v1016
      %v1033 = vunpack.c.l.b16 %v1017
      %v1034 = vunpack.c.l.b16 %v1018
      %v1035 = vunpack.c.l.b16 %v1019
      %v1036 = vunpack.c.l.b16 %v1020
      %v1037 = vunpack.c.l.b16 %v1021
      %v1038 = vunpack.c.l.b16 %v1022
      %v1039 = vpack.c.b16 %v1032, %v1031
      %v1040 = vpack.c.b16 %v1034, %v1033
      %v1041 = vpack.c.b16 %v1036, %v1035
      %v1042 = vpack.c.b16 %v1038, %v1037
      %v1048 = vsel %vm466, %v1014, 0
      %1050 = vmatprep.subr.bf16.mxu0 0
      %1051 = vmatpush1.bf16.msra.mxu0 %v1039
      %1052 = vmatprep.subr.bf16.mxu0 0
      %1053 = vmatpush1.bf16.msra.mxu0 %v1040
      %1054 = vmatprep.subr.bf16.mxu0 0
      %1055 = vmatpush1.bf16.msra.mxu0 %v1041
      %1056 = vmatprep.subr.bf16.mxu0 0
      %1057 = vmatpush1.bf16.msra.mxu0 %v1042
      %1058 = vmatprep.subr.bf16.mxu0 0
      %1059 = vmatpush1.bf16.msra.mxu0 0
      %1060 = vmatprep.subr.bf16.mxu0 0
      %1061 = vmatpush1.bf16.msra.mxu0 0
      %1062 = vmatprep.subr.bf16.mxu0 0
      %1063 = vmatpush1.bf16.msra.mxu0 0
      %1064 = vmatprep.subr.bf16.mxu0 0
      %1065 = vmatpush1.bf16.msra.mxu0 0
      %1066 = vmatprep.subr.bf16.mxu0 0
      %1067 = vmatpush1.bf16.msra.mxu0 0
      %1068 = vmatprep.subr.bf16.mxu0 0
      %1069 = vmatpush1.bf16.msra.mxu0 0
      %1070 = vmatprep.subr.bf16.mxu0 0
      %1071 = vmatpush1.bf16.msra.mxu0 0
      %1072 = vmatprep.subr.bf16.mxu0 0
      %1073 = vmatpush1.bf16.msra.mxu0 0
      %1074 = vmatprep.subr.bf16.mxu0 0
      %1075 = vmatpush1.bf16.msra.mxu0 0
      %1076 = vmatprep.subr.bf16.mxu0 0
      %1077 = vmatpush1.bf16.msra.mxu0 0
      %1078 = vmatprep.subr.bf16.mxu0 0
      %1079 = vmatpush1.bf16.msra.mxu0 0
      %1080 = vmatprep.subr.bf16.mxu0 0
      %1081 = vmatpush1.bf16.msra.mxu0 0
      %1082 = vmatprep.mubr.bf16.mxu0 0
      %1083 = vmatmul.mubr.bf16.gmra.mrb[0].mxu0 %v1048
      %v1084 = vpop.f32.mrb[0].mxu0
      %v1085 = vadd.f32 0.0, %v1084
      %v1086 = vpop.f32.mrb[0].mxu0
      %v1087 = vpop.f32.mrb[0].mxu0
      %v1088 = vpop.f32.mrb[0].mxu0
      %1089 = vdwg.mxu0
      %v1098 = vunpack.c.l.b16 %v1006
      %v1099 = vunpack.c.l.b16 %v1007
      %v1100 = vunpack.c.l.b16 %v1008
      %v1101 = vunpack.c.l.b16 %v1009
      %v1102 = vunpack.c.l.b16 %v1010
      %v1103 = vunpack.c.l.b16 %v1011
      %v1104 = vunpack.c.l.b16 %v1012
      %v1105 = vunpack.c.l.b16 %v1013
      %v1106 = vpack.c.b16 %v1099, %v1098
      %v1107 = vpack.c.b16 %v1101, %v1100
      %v1108 = vpack.c.b16 %v1103, %v1102
      %v1109 = vpack.c.b16 %v1105, %v1104
      %1114 = vmatprep.subr.bf16.mxu0 0
      %1115 = vmatpush1.bf16.msra.mxu0 %v1106
      %1116 = vmatprep.subr.bf16.mxu0 0
      %1117 = vmatpush1.bf16.msra.mxu0 %v1107
      %1118 = vmatprep.subr.bf16.mxu0 0
      %1119 = vmatpush1.bf16.msra.mxu0 %v1108
      %1120 = vmatprep.subr.bf16.mxu0 0
      %1121 = vmatpush1.bf16.msra.mxu0 %v1109
      %1122 = vmatprep.subr.bf16.mxu0 0
      %1123 = vmatpush1.bf16.msra.mxu0 0
      %1124 = vmatprep.subr.bf16.mxu0 0
      %1125 = vmatpush1.bf16.msra.mxu0 0
      %1126 = vmatprep.subr.bf16.mxu0 0
      %1127 = vmatpush1.bf16.msra.mxu0 0
      %1128 = vmatprep.subr.bf16.mxu0 0
      %1129 = vmatpush1.bf16.msra.mxu0 0
      %1130 = vmatprep.subr.bf16.mxu0 0
      %1131 = vmatpush1.bf16.msra.mxu0 0
      %1132 = vmatprep.subr.bf16.mxu0 0
      %1133 = vmatpush1.bf16.msra.mxu0 0
      %1134 = vmatprep.subr.bf16.mxu0 0
      %1135 = vmatpush1.bf16.msra.mxu0 0
      %1136 = vmatprep.subr.bf16.mxu0 0
      %1137 = vmatpush1.bf16.msra.mxu0 0
      %1138 = vmatprep.subr.bf16.mxu0 0
      %1139 = vmatpush1.bf16.msra.mxu0 0
      %1140 = vmatprep.subr.bf16.mxu0 0
      %1141 = vmatpush1.bf16.msra.mxu0 0
      %1142 = vmatprep.subr.bf16.mxu0 0
      %1143 = vmatpush1.bf16.msra.mxu0 0
      %1144 = vmatprep.subr.bf16.mxu0 0
      %1145 = vmatpush1.bf16.msra.mxu0 0
      %1146 = vmatprep.mubr.bf16.mxu0 0
      %1147 = vmatmul.mubr.bf16.gmra.mrb[0].mxu0 %v471
      %v1148 = vpop.f32.mrb[0].mxu0
      %v1149 = vadd.f32 %v1085, %v1148
      %v1150 = vpop.f32.mrb[0].mxu0
      %v1151 = vpop.f32.mrb[0].mxu0
      %v1152 = vpop.f32.mrb[0].mxu0
      %1153 = vdwg.mxu0
      %v1154 = vsub.f32 %v460, %v690
      %v1155 = vpack.c.bf16 %v1154, %v1154
      %v1156 = vld [vmem:[%s7] sm:$0xf]
      %v1157 = vld [vmem:[%s7 + $0x4] sm:$0xf]
      %v1158 = vld [vmem:[%s7 + $0x8] sm:$0xf]
      %v1159 = vld [vmem:[%s7 + $0xc] sm:$0xf]
      %v1160 = vld [vmem:[%s7 + $0x10] sm:$0xf]
      %v1161 = vld [vmem:[%s7 + $0x14] sm:$0xf]
      %v1162 = vld [vmem:[%s7 + $0x18] sm:$0xf]
      %v1163 = vld [vmem:[%s7 + $0x1c] sm:$0xf]
      %v1172 = vunpack.c.l.b16 %v1156
      %v1173 = vunpack.c.l.b16 %v1157
      %v1174 = vunpack.c.l.b16 %v1158
      %v1175 = vunpack.c.l.b16 %v1159
      %v1176 = vunpack.c.l.b16 %v1160
      %v1177 = vunpack.c.l.b16 %v1161
      %v1178 = vunpack.c.l.b16 %v1162
      %v1179 = vunpack.c.l.b16 %v1163
      %v1180 = vpack.c.b16 %v1173, %v1172
      %v1181 = vpack.c.b16 %v1175, %v1174
      %v1182 = vpack.c.b16 %v1177, %v1176
      %v1183 = vpack.c.b16 %v1179, %v1178
      %v1189 = vsel %vm466, %v1155, 0
      %1191 = vmatprep.subr.bf16.mxu0 0
      %1192 = vmatpush1.bf16.msra.mxu0 %v1180
      %1193 = vmatprep.subr.bf16.mxu0 0
      %1194 = vmatpush1.bf16.msra.mxu0 %v1181
      %1195 = vmatprep.subr.bf16.mxu0 0
      %1196 = vmatpush1.bf16.msra.mxu0 %v1182
      %1197 = vmatprep.subr.bf16.mxu0 0
      %1198 = vmatpush1.bf16.msra.mxu0 %v1183
      %1199 = vmatprep.subr.bf16.mxu0 0
      %1200 = vmatpush1.bf16.msra.mxu0 0
      %1201 = vmatprep.subr.bf16.mxu0 0
      %1202 = vmatpush1.bf16.msra.mxu0 0
      %1203 = vmatprep.subr.bf16.mxu0 0
      %1204 = vmatpush1.bf16.msra.mxu0 0
      %1205 = vmatprep.subr.bf16.mxu0 0
      %1206 = vmatpush1.bf16.msra.mxu0 0
      %1207 = vmatprep.subr.bf16.mxu0 0
      %1208 = vmatpush1.bf16.msra.mxu0 0
      %1209 = vmatprep.subr.bf16.mxu0 0
      %1210 = vmatpush1.bf16.msra.mxu0 0
      %1211 = vmatprep.subr.bf16.mxu0 0
      %1212 = vmatpush1.bf16.msra.mxu0 0
      %1213 = vmatprep.subr.bf16.mxu0 0
      %1214 = vmatpush1.bf16.msra.mxu0 0
      %1215 = vmatprep.subr.bf16.mxu0 0
      %1216 = vmatpush1.bf16.msra.mxu0 0
      %1217 = vmatprep.subr.bf16.mxu0 0
      %1218 = vmatpush1.bf16.msra.mxu0 0
      %1219 = vmatprep.subr.bf16.mxu0 0
      %1220 = vmatpush1.bf16.msra.mxu0 0
      %1221 = vmatprep.subr.bf16.mxu0 0
      %1222 = vmatpush1.bf16.msra.mxu0 0
      %1223 = vmatprep.mubr.bf16.mxu0 0
      %1224 = vmatmul.mubr.bf16.gmra.mrb[0].mxu0 %v1189
      %v1225 = vpop.f32.mrb[0].mxu0
      %v1226 = vadd.f32 0.0, %v1225
      %v1227 = vpop.f32.mrb[0].mxu0
      %v1228 = vpop.f32.mrb[0].mxu0
      %v1229 = vpop.f32.mrb[0].mxu0
      %1230 = vdwg.mxu0
      %v1231 = vadd.f32 %v1149, %v1226
      %v1232 = vmul.f32 %v460, %v690
      %v1233 = vpack.c.bf16 %v1232, %v1232
      %v1234 = vld [vmem:[%s8] sm:$0xf]
      %v1235 = vld [vmem:[%s8 + $0x4] sm:$0xf]
      %v1236 = vld [vmem:[%s8 + $0x8] sm:$0xf]
      %v1237 = vld [vmem:[%s8 + $0xc] sm:$0xf]
      %v1238 = vld [vmem:[%s8 + $0x10] sm:$0xf]
      %v1239 = vld [vmem:[%s8 + $0x14] sm:$0xf]
      %v1240 = vld [vmem:[%s8 + $0x18] sm:$0xf]
      %v1241 = vld [vmem:[%s8 + $0x1c] sm:$0xf]
      %v1250 = vunpack.c.l.b16 %v1234
      %v1251 = vunpack.c.l.b16 %v1235
      %v1252 = vunpack.c.l.b16 %v1236
      %v1253 = vunpack.c.l.b16 %v1237
      %v1254 = vunpack.c.l.b16 %v1238
      %v1255 = vunpack.c.l.b16 %v1239
      %v1256 = vunpack.c.l.b16 %v1240
      %v1257 = vunpack.c.l.b16 %v1241
      %v1258 = vpack.c.b16 %v1251, %v1250
      %v1259 = vpack.c.b16 %v1253, %v1252
      %v1260 = vpack.c.b16 %v1255, %v1254
      %v1261 = vpack.c.b16 %v1257, %v1256
      %v1267 = vsel %vm466, %v1233, 0
      %1269 = vmatprep.subr.bf16.mxu0 0
      %1270 = vmatpush1.bf16.msra.mxu0 %v1258
      %1271 = vmatprep.subr.bf16.mxu0 0
      %1272 = vmatpush1.bf16.msra.mxu0 %v1259
      %1273 = vmatprep.subr.bf16.mxu0 0
      %1274 = vmatpush1.bf16.msra.mxu0 %v1260
      %1275 = vmatprep.subr.bf16.mxu0 0
      %1276 = vmatpush1.bf16.msra.mxu0 %v1261
      %1277 = vmatprep.subr.bf16.mxu0 0
      %1278 = vmatpush1.bf16.msra.mxu0 0
      %1279 = vmatprep.subr.bf16.mxu0 0
      %1280 = vmatpush1.bf16.msra.mxu0 0
      %1281 = vmatprep.subr.bf16.mxu0 0
      %1282 = vmatpush1.bf16.msra.mxu0 0
      %1283 = vmatprep.subr.bf16.mxu0 0
      %1284 = vmatpush1.bf16.msra.mxu0 0
      %1285 = vmatprep.subr.bf16.mxu0 0
      %1286 = vmatpush1.bf16.msra.mxu0 0
      %1287 = vmatprep.subr.bf16.mxu0 0
      %1288 = vmatpush1.bf16.msra.mxu0 0
      %1289 = vmatprep.subr.bf16.mxu0 0
      %1290 = vmatpush1.bf16.msra.mxu0 0
      %1291 = vmatprep.subr.bf16.mxu0 0
      %1292 = vmatpush1.bf16.msra.mxu0 0
      %1293 = vmatprep.subr.bf16.mxu0 0
      %1294 = vmatpush1.bf16.msra.mxu0 0
      %1295 = vmatprep.subr.bf16.mxu0 0
      %1296 = vmatpush1.bf16.msra.mxu0 0
      %1297 = vmatprep.subr.bf16.mxu0 0
      %1298 = vmatpush1.bf16.msra.mxu0 0
      %1299 = vmatprep.subr.bf16.mxu0 0
      %1300 = vmatpush1.bf16.msra.mxu0 0
      %1301 = vmatprep.mubr.bf16.mxu0 0
      %1302 = vmatmul.mubr.bf16.gmra.mrb[0].mxu0 %v1267
      %v1303 = vpop.f32.mrb[0].mxu0
      %v1304 = vadd.f32 0.0, %v1303
      %v1305 = vpop.f32.mrb[0].mxu0
      %v1306 = vpop.f32.mrb[0].mxu0
      %v1307 = vpop.f32.mrb[0].mxu0
      %1308 = vdwg.mxu0
      %v1309 = vadd.f32 %v1231, %v1304
      %v1310 = vadd.f32 %v1309, %v1000
      %v1311 = vmax.f32 %v1310, 0.0
      %1312 = vst.msk [vmem:[%s457] sm:$0xff] %vm1004, %v1311
      %p1313 = scmp.lt.s32.totalorder %s23, 1
      %s1314 = scalar_select %p1313, %s23, 1
      %s1315 = smul.addr %s1314, 8
      %s1316 = scalar_lea.vmem %s10, %s1315
      %p1317 = scmp.lt.s32.totalorder %s23, 1
      %s1318 = scalar_select %p1317, %s23, 1
      %s1319 = smul.addr %s1318, 8
      %s1320 = scalar_lea.vmem %s11, %s1319
      // Predicated region
      $region61: #{esim_forward.8} parent=59 // pred_check
        %p1321 = pneg %p276
      $region62: #{esim_forward.8} parent=59 // pred_check_branch
        %1323 = sbr.rel (%p1321) target = $region64
      $region63: #{esim_forward.8} parent=59 // pred_region
        _
      $region64: #{esim_forward.8} parent=59 // pred_fallthru
        _
      // Predicated region
      $region65: #{esim_forward.8} parent=59 // pred_check
        %p1324 = pneg %p302
      $region66: #{esim_forward.8} parent=59 // pred_check_branch
        %1326 = sbr.rel (%p1324) target = $region68
      $region67: #{esim_forward.8} parent=59 // pred_region
        _
      $region68: #{esim_forward.8} parent=59 // pred_fallthru
        _
    $region60: #{esim_forward.8} parent=5 // pred_fallthru
      _
    %p1327 = scmp.le.s32.totalorder 2, %s18
    // Predicated region
    $region69: #{esim_forward.8} parent=5 // pred_check
      %p1328 = pneg %p1327
    $region70: #{esim_forward.8} parent=5 // pred_check_branch
      %1330 = sbr.rel (%p1328) target = $region72
    $region71: #{esim_forward.8} parent=5 // pred_region
      %s1331 = ssub.s32 %s18, 2
      // Predicated region
      $region73: #{esim_forward.8} parent=71 // pred_check
        %p1332 = pneg %p282
      $region74: #{esim_forward.8} parent=71 // pred_check_branch
        %1334 = sbr.rel (%p1332) target = $region76
      $region75: #{esim_forward.8} parent=71 // pred_region
        %p1335 = scmp.lt.s32.totalorder %s24, 1
        %s1336 = scalar_select %p1335, %s24, 1
        %s1337 = smul.addr %s1336, 8
        %s1338 = scalar_lea.vmem %s10, %s1337
      $region76: #{esim_forward.8} parent=71 // pred_fallthru
        _
      // Predicated region
      $region77: #{esim_forward.8} parent=71 // pred_check
        %p1339 = pneg %p308
      $region78: #{esim_forward.8} parent=71 // pred_check_branch
        %1341 = sbr.rel (%p1339) target = $region80
      $region79: #{esim_forward.8} parent=71 // pred_region
        %p1342 = scmp.lt.s32.totalorder %s24, 1
        %s1343 = scalar_select %p1342, %s24, 1
        %s1344 = smul.addr %s1343, 8
        %s1345 = scalar_lea.vmem %s11, %s1344
      $region80: #{esim_forward.8} parent=71 // pred_fallthru
        _
    $region72: #{esim_forward.8} parent=5 // pred_fallthru
      _
  $region6: #{esim_forward.8} parent=0 // loop_footer
    %s22 = sadd.s32 1, %s18
  $region7: #{esim_forward.8} parent=0 // loop_footer_branch
    %17 = sbr.rel target = $region3
  $region8: #{esim_forward.8} parent=0 // loop_exit
    _

</llo_original>
